<compile_context>
chip_gen: v5e
topology: v5e:2x2
jax: 0.10.0
libtpu: 0.0.40
codegen_flags: <defaults>
</compile_context>

<pallas_src>
import jax
import jax.numpy as jnp
from jax.experimental import pallas as pl
from jax.experimental.pallas import tpu as pltpu

LEAKY_SLOPE = 0.1
BN_EPS = 1e-5
HIGHEST = jax.lax.Precision.HIGHEST  # reference only


def _leaky(y):
    return jnp.where(y > 0, y, LEAKY_SLOPE * y)


# --------------------------- Pallas kernels ---------------------------------

def _fusion_kernel(x0_ref, x1_ref, x2_ref, x3_ref,
                   a1_ref, a2_ref, a3_ref,
                   cs_s_ref, cs_b_ref,
                   b_ref, wc_s_ref, wc_b_ref,
                   g_ref, wl_b_ref, e_ref,
                   rh1_ref, rh2_ref, rh3_ref,
                   o_ref):
    # x0:  (1, TH, W*C0)             full-res rows, lane-flattened pixels.
    # xk:  (1, TH/2^k, (W/2^k)*Ck)   coarse rows of level k (k=1..3).
    # a_k: (Wk*Ck, W*C0)             channel_set_k 1x1 conv + W-replication.
    # rh_k:(TH, TH/2^k)              0/1 row (H) replication matrices.
    # b[l]:(W*C0, W*cc)              weight_l compress conv (block-diag).
    # g[l]:(W*cc, 4*W)               weight_levels conv -> 4 logit maps.
    # e:   (W, W*C0)                 per-pixel scalar -> per-channel broadcast.
    x0 = x0_ref[0]                                         # (TH, W*C0)
    levels = [x0]
    coarse = (x1_ref[0], x2_ref[0], x3_ref[0])
    a_refs = (a1_ref, a2_ref, a3_ref)
    rh_refs = (rh1_ref, rh2_ref, rh3_ref)
    for k in range(3):
        y = jnp.dot(coarse[k], a_refs[k][...],
                    preferred_element_type=jnp.float32)    # (THk, W*C0)
        y = _leaky(y * cs_s_ref[k:k + 1, :] + cs_b_ref[k:k + 1, :])
        levels.append(jnp.dot(rh_refs[k][...], y,
                              preferred_element_type=jnp.float32))  # (TH, W*C0)

    logits = wl_b_ref[...]                                 # (1, 4*W) -> broadcast
    for l in range(4):
        f = jnp.dot(levels[l], b_ref[l], preferred_element_type=jnp.float32)
        f = _leaky(f * wc_s_ref[l:l + 1, :] + wc_b_ref[l:l + 1, :])  # (TH, W*cc)
        logits = logits + jnp.dot(f, g_ref[l],
                                  preferred_element_type=jnp.float32)

    wpix = logits.shape[-1] // 4
    g0 = logits[:, 0 * wpix:1 * wpix]
    g1 = logits[:, 1 * wpix:2 * wpix]
    g2 = logits[:, 2 * wpix:3 * wpix]
    g3 = logits[:, 3 * wpix:4 * wpix]
    m = jnp.maximum(jnp.maximum(g0, g1), jnp.maximum(g2, g3))
    e0 = jnp.exp(g0 - m)
    e1 = jnp.exp(g1 - m)
    e2 = jnp.exp(g2 - m)
    e3 = jnp.exp(g3 - m)
    inv = 1.0 / (e0 + e1 + e2 + e3)                        # softmax over 4 levels
    acc = jnp.zeros_like(x0)
    for l, el in enumerate((e0, e1, e2, e3)):
        wmap = el * inv                                    # (TH, W) per-pixel weight
        acc = acc + jnp.dot(wmap, e_ref[...],
                            preferred_element_type=jnp.float32) * levels[l]
    o_ref[0] = acc


def _expand_kernel(x_ref, s_ref, m_ref, sc_ref, bi_ref, o_ref):
    # x: (1, H, W*C0); s[dy]: (H, H) row shift with zero padding folded in;
    # m[dy]: (W*C0, W*C0) banded block matrix holding the 3 W-taps of the 3x3
    # conv (zero padding along W folded in).  out = BN + leaky.
    x = x_ref[0]
    acc = jnp.zeros(x.shape, jnp.float32)
    for dy in range(3):
        xs = jnp.dot(s_ref[dy], x, preferred_element_type=jnp.float32)
        acc = acc + jnp.dot(xs, m_ref[dy], preferred_element_type=jnp.float32)
    o_ref[0] = _leaky(acc * sc_ref[...] + bi_ref[...])


# --------------------------- constant packing --------------------------------

def _prep_constants(params, shapes, compress_c):
    (N, H, W, C0) = shapes[0]
    cc = compress_c
    eye_w = jnp.eye(W, dtype=jnp.float32)
    consts = {}

    # channel_set_k 1x1 convs with nearest W-replication folded into weights.
    a_list, cs_s, cs_b = [], [], []
    for k, name in enumerate(('cs1', 'cs2', 'cs3')):
        s = 2 ** (k + 1)
        wk = W // s
        w1, sc, bi = params[name]                           # (Ck, C0), (C0,), (C0,)
        erep = jnp.repeat(jnp.eye(wk, dtype=jnp.float32), s, axis=1)   # (wk, W)
        a_list.append(jnp.kron(erep, w1))                   # (wk*Ck, W*C0)
        cs_s.append(jnp.tile(sc, W))
        cs_b.append(jnp.tile(bi, W))
    consts['A'] = a_list
    consts['cs_scale'] = jnp.stack(cs_s)                    # (3, W*C0)
    consts['cs_bias'] = jnp.stack(cs_b)

    # weight_0..3 compress convs, block-diagonal over the W pixels of a row.
    consts['B'] = jnp.stack([jnp.kron(eye_w, params['wc_w'][l]) for l in range(4)])
    consts['wc_scale'] = jnp.stack([jnp.tile(params['wc_scale'][l], W) for l in range(4)])
    consts['wc_bias'] = jnp.stack([jnp.tile(params['wc_bias'][l], W) for l in range(4)])

    # weight_levels conv -> 4 per-pixel logit maps, group-major along lanes.
    wl = params['wl_w'].reshape(4, cc, 4)
    g_list = []
    for l in range(4):
        t = eye_w[:, None, None, :] * wl[l][None, :, :, None]          # (W, cc, 4, W)
        g_list.append(t.reshape(W * cc, 4 * W))
    consts['G'] = jnp.stack(g_list)                         # (4, W*cc, 4*W)
    consts['wl_bias'] = jnp.repeat(params['wl_b'], W).reshape(1, 4 * W)

    # per-pixel-scalar -> per-channel broadcast matrix.
    consts['E'] = jnp.kron(eye_w, jnp.ones((1, C0), jnp.float32))      # (W, W*C0)

    # 3x3 expand conv as banded matmuls on the row-flattened layout.
    w3, s3, b3 = params['expand']                           # (3,3,C0,C0) HWIO
    m_list = []
    for dy in range(3):
        m = jnp.zeros((W * C0, W * C0), jnp.float32)
        for dx in range(3):
            m = m + jnp.kron(jnp.eye(W, W, k=1 - dx, dtype=jnp.float32), w3[dy, dx])
        m_list.append(m)
    consts['M'] = jnp.stack(m_list)                         # (3, W*C0, W*C0)
    consts['S'] = jnp.stack([jnp.eye(H, H, k=dy - 1, dtype=jnp.float32)
                             for dy in range(3)])           # (3, H, H)
    consts['exp_scale'] = jnp.tile(s3, W).reshape(1, W * C0)
    consts['exp_bias'] = jnp.tile(b3, W).reshape(1, W * C0)
    return consts


# --------------------------- module wrapper ----------------------------------

def sffm_forward(params, fpn_nchw, compress_c=16):
    xs = [jnp.transpose(x, (0, 2, 3, 1)) for x in fpn_nchw]  # NCHW -> NHWC
    x0, x1, x2, x3 = xs
    N, H, W, C0 = x0.shape
    assert H % 8 == 0 and W % 8 == 0
    WC0 = W * C0

    consts = _prep_constants(params, [x.shape for x in xs], compress_c)

    # Row-tile size: TH//8 must be a multiple of 8 (or the full extent).
    TH = 64 if (H > 64 and H % 64 == 0) else H
    n_tiles = H // TH
    rh = [jnp.repeat(jnp.eye(TH // (2 ** (k + 1)), dtype=jnp.float32),
                     2 ** (k + 1), axis=0) for k in range(3)]   # (TH, TH/2^k)

    # Lane-dense, row-flattened views (metadata-only reshapes of NHWC data).
    x0f = x0.reshape(N, H, WC0)
    x1f = x1.reshape(N, H // 2, (W // 2) * x1.shape[-1])
    x2f = x2.reshape(N, H // 4, (W // 4) * x2.shape[-1])
    x3f = x3.reshape(N, H // 8, (W // 8) * x3.shape[-1])

    def row_spec(rows, cols):
        return pl.BlockSpec((1, rows, cols), lambda n, i: (n, i, 0))

    def const_spec(shape):
        nd = len(shape)
        return pl.BlockSpec(tuple(shape), lambda n, i: (0,) * nd)

    fused = pl.pallas_call(
        _fusion_kernel,
        out_shape=jax.ShapeDtypeStruct((N, H, WC0), jnp.float32),
        grid=(N, n_tiles),
        in_specs=[
            row_spec(TH, WC0),
            row_spec(TH // 2, x1f.shape[-1]),
            row_spec(TH // 4, x2f.shape[-1]),
            row_spec(TH // 8, x3f.shape[-1]),
            const_spec(consts['A'][0].shape),
            const_spec(consts['A'][1].shape),
            const_spec(consts['A'][2].shape),
            const_spec(consts['cs_scale'].shape),
            const_spec(consts['cs_bias'].shape),
            const_spec(consts['B'].shape),
            const_spec(consts['wc_scale'].shape),
            const_spec(consts['wc_bias'].shape),
            const_spec(consts['G'].shape),
            const_spec(consts['wl_bias'].shape),
            const_spec(consts['E'].shape),
            const_spec(rh[0].shape),
            const_spec(rh[1].shape),
            const_spec(rh[2].shape),
        ],
        out_specs=row_spec(TH, WC0),
        compiler_params=pltpu.CompilerParams(
            dimension_semantics=("parallel", "parallel")),
    )(x0f, x1f, x2f, x3f,
      consts['A'][0], consts['A'][1], consts['A'][2],
      consts['cs_scale'], consts['cs_bias'],
      consts['B'], consts['wc_scale'], consts['wc_bias'],
      consts['G'], consts['wl_bias'], consts['E'],
      rh[0], rh[1], rh[2])

    out_f = pl.pallas_call(
        _expand_kernel,
        out_shape=jax.ShapeDtypeStruct((N, H, WC0), jnp.float32),
        grid=(N,),
        in_specs=[
            pl.BlockSpec((1, H, WC0), lambda n: (n, 0, 0)),
            pl.BlockSpec(tuple(consts['S'].shape), lambda n: (0, 0, 0)),
            pl.BlockSpec(tuple(consts['M'].shape), lambda n: (0, 0, 0)),
            pl.BlockSpec((1, WC0), lambda n: (0, 0)),
            pl.BlockSpec((1, WC0), lambda n: (0, 0)),
        ],
        out_specs=pl.BlockSpec((1, H, WC0), lambda n: (n, 0, 0)),
        compiler_params=pltpu.CompilerParams(
            dimension_semantics=("parallel",)),
    )(fused, consts['S'], consts['M'], consts['exp_scale'], consts['exp_bias'])

    out = out_f.reshape(N, H, W, C0)
    return jnp.transpose(out, (0, 3, 1, 2))                 # NHWC -> NCHW


# --------------------------- parameters --------------------------------------

def make_params(key, fea_channel_list=(16, 32, 64, 128), compress_c=16):
    c0, c1, c2, c3 = fea_channel_list
    keys = iter(jax.random.split(key, 64))

    def bn_fold(c):
        gamma = 1.0 + 0.1 * jax.random.normal(next(keys), (c,), jnp.float32)
        beta = 0.1 * jax.random.normal(next(keys), (c,), jnp.float32)
        mean = 0.1 * jax.random.normal(next(keys), (c,), jnp.float32)
        var = 0.5 + jnp.abs(jax.random.normal(next(keys), (c,), jnp.float32))
        scale = gamma / jnp.sqrt(var + BN_EPS)
        bias = beta - mean * scale
        return scale, bias

    def conv_w(cin, cout, k=1):
        shape = (cin, cout) if k == 1 else (k, k, cin, cout)
        return 0.05 * jax.random.normal(next(keys), shape, jnp.float32)

    params = {}
    params['cs1'] = (conv_w(c1, c0),) + bn_fold(c0)          # channel_set_1
    params['cs2'] = (conv_w(c2, c0),) + bn_fold(c0)          # channel_set_2
    params['cs3'] = (conv_w(c3, c0),) + bn_fold(c0)          # channel_set_3
    wc_w, wc_s, wc_b = [], [], []
    for _ in range(4):                                       # weight_0..3
        wc_w.append(conv_w(c0, compress_c))
        s, b = bn_fold(compress_c)
        wc_s.append(s)
        wc_b.append(b)
    params['wc_w'] = jnp.stack(wc_w)                         # (4, c0, cc)
    params['wc_scale'] = jnp.stack(wc_s)                     # (4, cc)
    params['wc_bias'] = jnp.stack(wc_b)                      # (4, cc)
    params['wl_w'] = 0.05 * jax.random.normal(next(keys),
                                              (4 * compress_c, 4), jnp.float32)
    params['wl_b'] = 0.05 * jax.random.normal(next(keys), (4,), jnp.float32)
    params['expand'] = (conv_w(c0, c0, 3),) + bn_fold(c0)    # expand 3x3
    return params


# --------------------------- pure-JAX reference ------------------------------

def upsample_nearest(x_nhwc, s):
    return jnp.repeat(jnp.repeat(x_nhwc, s, axis=1), s, axis=2)


def _ref_conv1x1(x, w, scale, bias):
    y = jnp.einsum('nhwc,cf->nhwf', x, w, precision=HIGHEST) * scale + bias
    return _leaky(y)


def ref_forward(params, fpn_nchw, compress_c=16):
    xs = [jnp.transpose(x, (0, 2, 3, 1)) for x in fpn_nchw]
    x0, x1, x2, x3 = xs
    l0 = x0
    l1 = upsample_nearest(_ref_conv1x1(x1, *params['cs1']), 2)
    l2 = upsample_nearest(_ref_conv1x1(x2, *params['cs2']), 4)
    l3 = upsample_nearest(_ref_conv1x1(x3, *params['cs3']), 8)
    levels = [l0, l1, l2, l3]
    feats = [_ref_conv1x1(levels[i], params['wc_w'][i],
                          params['wc_scale'][i], params['wc_bias'][i])
             for i in range(4)]
    feats = jnp.concatenate(feats, axis=-1)
    logits = jnp.einsum('nhwc,cf->nhwf', feats, params['wl_w'],
                        precision=HIGHEST) + params['wl_b']
    wt = jax.nn.softmax(logits, axis=-1)
    fused = sum(levels[i] * wt[..., i:i + 1] for i in range(4))
    w3, s3, b3 = params['expand']
    y = jax.lax.conv_general_dilated(
        fused, w3, (1, 1), 'SAME',
        dimension_numbers=('NHWC', 'HWIO', 'NHWC'),
        precision=HIGHEST) * s3 + b3
    return jnp.transpose(_leaky(y), (0, 3, 1, 2))


# --------------------------- main ---------------------------------------------

if __name__ == "__main__":
    key = jax.random.PRNGKey(0)
    k_par, k0, k1, k2, k3 = jax.random.split(key, 5)
    fea_channel_list = (16, 32, 64, 128)
    N, H = 2, 16
    x0 = jax.random.normal(k0, (N, fea_channel_list[0], H, H), jnp.float32)
    x1 = jax.random.normal(k1, (N, fea_channel_list[1], H // 2, H // 2), jnp.float32)
    x2 = jax.random.normal(k2, (N, fea_channel_list[2], H // 4, H // 4), jnp.float32)
    x3 = jax.random.normal(k3, (N, fea_channel_list[3], H // 8, H // 8), jnp.float32)
    params = make_params(k_par, fea_channel_list)

    out = jax.block_until_ready(sffm_forward(params, [x0, x1, x2, x3]))
    ref = jax.block_until_ready(ref_forward(params, [x0, x1, x2, x3]))

    assert out.shape == (N, fea_channel_list[0], H, H), out.shape
    err = float(jnp.max(jnp.abs(out - ref)))
    # Kernels use default MXU precision (bf16 passes) vs an f32 HIGHEST
    # reference, hence the relaxed tolerance.
    assert jnp.allclose(out, ref, rtol=2e-2, atol=2e-2), f"max abs err {err}"
    print("KERNEL_OK")
</pallas_src>

<mosaic_0001>
module attributes {stable_mosaic.version = 11 : i64} {
  func.func @_fusion_kernel(%arg0: i32, %arg1: i32, %arg2: memref<1x16x256xf32, #tpu.memory_space<vmem>>, %arg3: memref<1x8x256xf32, #tpu.memory_space<vmem>>, %arg4: memref<1x4x256xf32, #tpu.memory_space<vmem>>, %arg5: memref<1x2x256xf32, #tpu.memory_space<vmem>>, %arg6: memref<256x256xf32, #tpu.memory_space<vmem>>, %arg7: memref<256x256xf32, #tpu.memory_space<vmem>>, %arg8: memref<256x256xf32, #tpu.memory_space<vmem>>, %arg9: memref<3x256xf32, #tpu.memory_space<vmem>>, %arg10: memref<3x256xf32, #tpu.memory_space<vmem>>, %arg11: memref<4x256x256xf32, #tpu.memory_space<vmem>>, %arg12: memref<4x256xf32, #tpu.memory_space<vmem>>, %arg13: memref<4x256xf32, #tpu.memory_space<vmem>>, %arg14: memref<4x256x64xf32, #tpu.memory_space<vmem>>, %arg15: memref<1x64xf32, #tpu.memory_space<vmem>>, %arg16: memref<16x256xf32, #tpu.memory_space<vmem>>, %arg17: memref<16x8xf32, #tpu.memory_space<vmem>>, %arg18: memref<16x4xf32, #tpu.memory_space<vmem>>, %arg19: memref<16x2xf32, #tpu.memory_space<vmem>>, %arg20: memref<1x16x256xf32, #tpu.memory_space<vmem>>) attributes {dimension_semantics = [#tpu.dimension_semantics<parallel>, #tpu.dimension_semantics<parallel>], iteration_bounds = array<i64: 2, 1>, scalar_prefetch = 0 : i64, scratch_operands = 0 : i64, tpu.core_type = #tpu.core_type<tc>, window_params = [{transform_indices = @transform_0, window_bounds = array<i64: 1, 16, 256>}, {transform_indices = @transform_1, window_bounds = array<i64: 1, 8, 256>}, {transform_indices = @transform_2, window_bounds = array<i64: 1, 4, 256>}, {transform_indices = @transform_3, window_bounds = array<i64: 1, 2, 256>}, {pipeline_mode = #tpu.pipeline_mode<synchronous>, transform_indices = @transform_4, window_bounds = array<i64: 256, 256>}, {pipeline_mode = #tpu.pipeline_mode<synchronous>, transform_indices = @transform_5, window_bounds = array<i64: 256, 256>}, {pipeline_mode = #tpu.pipeline_mode<synchronous>, transform_indices = @transform_6, window_bounds = array<i64: 256, 256>}, {pipeline_mode = #tpu.pipeline_mode<synchronous>, transform_indices = @transform_7, window_bounds = array<i64: 3, 256>}, {pipeline_mode = #tpu.pipeline_mode<synchronous>, transform_indices = @transform_8, window_bounds = array<i64: 3, 256>}, {pipeline_mode = #tpu.pipeline_mode<synchronous>, transform_indices = @transform_9, window_bounds = array<i64: 4, 256, 256>}, {pipeline_mode = #tpu.pipeline_mode<synchronous>, transform_indices = @transform_10, window_bounds = array<i64: 4, 256>}, {pipeline_mode = #tpu.pipeline_mode<synchronous>, transform_indices = @transform_11, window_bounds = array<i64: 4, 256>}, {pipeline_mode = #tpu.pipeline_mode<synchronous>, transform_indices = @transform_12, window_bounds = array<i64: 4, 256, 64>}, {pipeline_mode = #tpu.pipeline_mode<synchronous>, transform_indices = @transform_13, window_bounds = array<i64: 1, 64>}, {pipeline_mode = #tpu.pipeline_mode<synchronous>, transform_indices = @transform_14, window_bounds = array<i64: 16, 256>}, {pipeline_mode = #tpu.pipeline_mode<synchronous>, transform_indices = @transform_15, window_bounds = array<i64: 16, 8>}, {pipeline_mode = #tpu.pipeline_mode<synchronous>, transform_indices = @transform_16, window_bounds = array<i64: 16, 4>}, {pipeline_mode = #tpu.pipeline_mode<synchronous>, transform_indices = @transform_17, window_bounds = array<i64: 16, 2>}, {transform_indices = @transform_18, window_bounds = array<i64: 1, 16, 256>}]} {
    %c0 = arith.constant 0 : index
    %c0_0 = arith.constant 0 : index
    %c0_1 = arith.constant 0 : index
    %0 = vector.load %arg2[%c0, %c0_0, %c0_1] : memref<1x16x256xf32, #tpu.memory_space<vmem>>, vector<1x16x256xf32>
    %1 = vector.shape_cast %0 : vector<1x16x256xf32> to vector<16x256xf32>
    %c0_2 = arith.constant 0 : index
    %c0_3 = arith.constant 0 : index
    %c0_4 = arith.constant 0 : index
    %2 = vector.load %arg3[%c0_2, %c0_3, %c0_4] : memref<1x8x256xf32, #tpu.memory_space<vmem>>, vector<1x8x256xf32>
    %3 = vector.shape_cast %2 : vector<1x8x256xf32> to vector<8x256xf32>
    %c0_5 = arith.constant 0 : index
    %c0_6 = arith.constant 0 : index
    %c0_7 = arith.constant 0 : index
    %4 = vector.load %arg4[%c0_5, %c0_6, %c0_7] : memref<1x4x256xf32, #tpu.memory_space<vmem>>, vector<1x4x256xf32>
    %5 = vector.shape_cast %4 : vector<1x4x256xf32> to vector<4x256xf32>
    %c0_8 = arith.constant 0 : index
    %c0_9 = arith.constant 0 : index
    %c0_10 = arith.constant 0 : index
    %6 = vector.load %arg5[%c0_8, %c0_9, %c0_10] : memref<1x2x256xf32, #tpu.memory_space<vmem>>, vector<1x2x256xf32>
    %7 = vector.shape_cast %6 : vector<1x2x256xf32> to vector<2x256xf32>
    %c0_11 = arith.constant 0 : index
    %c0_12 = arith.constant 0 : index
    %8 = vector.load %arg6[%c0_11, %c0_12] : memref<256x256xf32, #tpu.memory_space<vmem>>, vector<256x256xf32>
    %cst = arith.constant dense<0.000000e+00> : vector<8x256xf32>
    %9 = tpu.matmul %3, %8, %cst {dimension_numbers = #tpu.dot_dimension_numbers<[1], [0], [0], [1], [0, 0, 1, 1], [], []>} : vector<8x256xf32>, vector<256x256xf32>, vector<8x256xf32> -> vector<8x256xf32>
    %c0_13 = arith.constant 0 : index
    %c0_14 = arith.constant 0 : index
    %10 = vector.load %arg9[%c0_13, %c0_14] : memref<3x256xf32, #tpu.memory_space<vmem>>, vector<1x256xf32>
    %11 = vector.broadcast %10 : vector<1x256xf32> to vector<8x256xf32>
    %12 = arith.mulf %9, %11 : vector<8x256xf32>
    %c0_15 = arith.constant 0 : index
    %c0_16 = arith.constant 0 : index
    %13 = vector.load %arg10[%c0_15, %c0_16] : memref<3x256xf32, #tpu.memory_space<vmem>>, vector<1x256xf32>
    %14 = vector.broadcast %13 : vector<1x256xf32> to vector<8x256xf32>
    %15 = arith.addf %12, %14 : vector<8x256xf32>
    %cst_17 = arith.constant 0.000000e+00 : f32
    %16 = vector.broadcast %cst_17 : f32 to vector<8x256xf32>
    %17 = arith.cmpf ogt, %15, %16 : vector<8x256xf32>
    %cst_18 = arith.constant 1.000000e-01 : f32
    %18 = vector.broadcast %cst_18 : f32 to vector<8x256xf32>
    %19 = arith.mulf %18, %15 : vector<8x256xf32>
    %20 = arith.select %17, %15, %19 : vector<8x256xi1>, vector<8x256xf32>
    %c0_19 = arith.constant 0 : index
    %c0_20 = arith.constant 0 : index
    %21 = vector.load %arg17[%c0_19, %c0_20] : memref<16x8xf32, #tpu.memory_space<vmem>>, vector<16x8xf32>
    %cst_21 = arith.constant dense<0.000000e+00> : vector<16x256xf32>
    %22 = tpu.matmul %21, %20, %cst_21 {dimension_numbers = #tpu.dot_dimension_numbers<[1], [0], [0], [1], [0, 0, 1, 1], [], []>} : vector<16x8xf32>, vector<8x256xf32>, vector<16x256xf32> -> vector<16x256xf32>
    %c0_22 = arith.constant 0 : index
    %c0_23 = arith.constant 0 : index
    %23 = vector.load %arg7[%c0_22, %c0_23] : memref<256x256xf32, #tpu.memory_space<vmem>>, vector<256x256xf32>
    %cst_24 = arith.constant dense<0.000000e+00> : vector<4x256xf32>
    %24 = tpu.matmul %5, %23, %cst_24 {dimension_numbers = #tpu.dot_dimension_numbers<[1], [0], [0], [1], [0, 0, 1, 1], [], []>} : vector<4x256xf32>, vector<256x256xf32>, vector<4x256xf32> -> vector<4x256xf32>
    %c1 = arith.constant 1 : index
    %c0_25 = arith.constant 0 : index
    %25 = vector.load %arg9[%c1, %c0_25] : memref<3x256xf32, #tpu.memory_space<vmem>>, vector<1x256xf32>
    %26 = vector.broadcast %25 : vector<1x256xf32> to vector<4x256xf32>
    %27 = arith.mulf %24, %26 : vector<4x256xf32>
    %c1_26 = arith.constant 1 : index
    %c0_27 = arith.constant 0 : index
    %28 = vector.load %arg10[%c1_26, %c0_27] : memref<3x256xf32, #tpu.memory_space<vmem>>, vector<1x256xf32>
    %29 = vector.broadcast %28 : vector<1x256xf32> to vector<4x256xf32>
    %30 = arith.addf %27, %29 : vector<4x256xf32>
    %cst_28 = arith.constant 0.000000e+00 : f32
    %31 = vector.broadcast %cst_28 : f32 to vector<4x256xf32>
    %32 = arith.cmpf ogt, %30, %31 : vector<4x256xf32>
    %cst_29 = arith.constant 1.000000e-01 : f32
    %33 = vector.broadcast %cst_29 : f32 to vector<4x256xf32>
    %34 = arith.mulf %33, %30 : vector<4x256xf32>
    %35 = arith.select %32, %30, %34 : vector<4x256xi1>, vector<4x256xf32>
    %c0_30 = arith.constant 0 : index
    %c0_31 = arith.constant 0 : index
    %36 = vector.load %arg18[%c0_30, %c0_31] : memref<16x4xf32, #tpu.memory_space<vmem>>, vector<16x4xf32>
    %cst_32 = arith.constant dense<0.000000e+00> : vector<16x256xf32>
    %37 = tpu.matmul %36, %35, %cst_32 {dimension_numbers = #tpu.dot_dimension_numbers<[1], [0], [0], [1], [0, 0, 1, 1], [], []>} : vector<16x4xf32>, vector<4x256xf32>, vector<16x256xf32> -> vector<16x256xf32>
    %c0_33 = arith.constant 0 : index
    %c0_34 = arith.constant 0 : index
    %38 = vector.load %arg8[%c0_33, %c0_34] : memref<256x256xf32, #tpu.memory_space<vmem>>, vector<256x256xf32>
    %cst_35 = arith.constant dense<0.000000e+00> : vector<2x256xf32>
    %39 = tpu.matmul %7, %38, %cst_35 {dimension_numbers = #tpu.dot_dimension_numbers<[1], [0], [0], [1], [0, 0, 1, 1], [], []>} : vector<2x256xf32>, vector<256x256xf32>, vector<2x256xf32> -> vector<2x256xf32>
    %c2 = arith.constant 2 : index
    %c0_36 = arith.constant 0 : index
    %40 = vector.load %arg9[%c2, %c0_36] : memref<3x256xf32, #tpu.memory_space<vmem>>, vector<1x256xf32>
    %41 = vector.broadcast %40 : vector<1x256xf32> to vector<2x256xf32>
    %42 = arith.mulf %39, %41 : vector<2x256xf32>
    %c2_37 = arith.constant 2 : index
    %c0_38 = arith.constant 0 : index
    %43 = vector.load %arg10[%c2_37, %c0_38] : memref<3x256xf32, #tpu.memory_space<vmem>>, vector<1x256xf32>
    %44 = vector.broadcast %43 : vector<1x256xf32> to vector<2x256xf32>
    %45 = arith.addf %42, %44 : vector<2x256xf32>
    %cst_39 = arith.constant 0.000000e+00 : f32
    %46 = vector.broadcast %cst_39 : f32 to vector<2x256xf32>
    %47 = arith.cmpf ogt, %45, %46 : vector<2x256xf32>
    %cst_40 = arith.constant 1.000000e-01 : f32
    %48 = vector.broadcast %cst_40 : f32 to vector<2x256xf32>
    %49 = arith.mulf %48, %45 : vector<2x256xf32>
    %50 = arith.select %47, %45, %49 : vector<2x256xi1>, vector<2x256xf32>
    %c0_41 = arith.constant 0 : index
    %c0_42 = arith.constant 0 : index
    %51 = vector.load %arg19[%c0_41, %c0_42] : memref<16x2xf32, #tpu.memory_space<vmem>>, vector<16x2xf32>
    %cst_43 = arith.constant dense<0.000000e+00> : vector<16x256xf32>
    %52 = tpu.matmul %51, %50, %cst_43 {dimension_numbers = #tpu.dot_dimension_numbers<[1], [0], [0], [1], [0, 0, 1, 1], [], []>} : vector<16x2xf32>, vector<2x256xf32>, vector<16x256xf32> -> vector<16x256xf32>
    %c0_44 = arith.constant 0 : index
    %c0_45 = arith.constant 0 : index
    %53 = vector.load %arg15[%c0_44, %c0_45] : memref<1x64xf32, #tpu.memory_space<vmem>>, vector<1x64xf32>
    %c0_46 = arith.constant 0 : index
    %c0_47 = arith.constant 0 : index
    %c0_48 = arith.constant 0 : index
    %54 = vector.load %arg11[%c0_46, %c0_47, %c0_48] : memref<4x256x256xf32, #tpu.memory_space<vmem>>, vector<1x256x256xf32>
    %55 = vector.shape_cast %54 : vector<1x256x256xf32> to vector<256x256xf32>
    %cst_49 = arith.constant dense<0.000000e+00> : vector<16x256xf32>
    %56 = tpu.matmul %1, %55, %cst_49 {dimension_numbers = #tpu.dot_dimension_numbers<[1], [0], [0], [1], [0, 0, 1, 1], [], []>} : vector<16x256xf32>, vector<256x256xf32>, vector<16x256xf32> -> vector<16x256xf32>
    %c0_50 = arith.constant 0 : index
    %c0_51 = arith.constant 0 : index
    %57 = vector.load %arg12[%c0_50, %c0_51] : memref<4x256xf32, #tpu.memory_space<vmem>>, vector<1x256xf32>
    %58 = vector.broadcast %57 : vector<1x256xf32> to vector<16x256xf32>
    %59 = arith.mulf %56, %58 : vector<16x256xf32>
    %c0_52 = arith.constant 0 : index
    %c0_53 = arith.constant 0 : index
    %60 = vector.load %arg13[%c0_52, %c0_53] : memref<4x256xf32, #tpu.memory_space<vmem>>, vector<1x256xf32>
    %61 = vector.broadcast %60 : vector<1x256xf32> to vector<16x256xf32>
    %62 = arith.addf %59, %61 : vector<16x256xf32>
    %cst_54 = arith.constant 0.000000e+00 : f32
    %63 = vector.broadcast %cst_54 : f32 to vector<16x256xf32>
    %64 = arith.cmpf ogt, %62, %63 : vector<16x256xf32>
    %cst_55 = arith.constant 1.000000e-01 : f32
    %65 = vector.broadcast %cst_55 : f32 to vector<16x256xf32>
    %66 = arith.mulf %65, %62 : vector<16x256xf32>
    %67 = arith.select %64, %62, %66 : vector<16x256xi1>, vector<16x256xf32>
    %c0_56 = arith.constant 0 : index
    %c0_57 = arith.constant 0 : index
    %c0_58 = arith.constant 0 : index
    %68 = vector.load %arg14[%c0_56, %c0_57, %c0_58] : memref<4x256x64xf32, #tpu.memory_space<vmem>>, vector<1x256x64xf32>
    %69 = vector.shape_cast %68 : vector<1x256x64xf32> to vector<256x64xf32>
    %cst_59 = arith.constant dense<0.000000e+00> : vector<16x64xf32>
    %70 = tpu.matmul %67, %69, %cst_59 {dimension_numbers = #tpu.dot_dimension_numbers<[1], [0], [0], [1], [0, 0, 1, 1], [], []>} : vector<16x256xf32>, vector<256x64xf32>, vector<16x64xf32> -> vector<16x64xf32>
    %71 = vector.broadcast %53 : vector<1x64xf32> to vector<16x64xf32>
    %72 = arith.addf %71, %70 : vector<16x64xf32>
    %c1_60 = arith.constant 1 : index
    %c0_61 = arith.constant 0 : index
    %c0_62 = arith.constant 0 : index
    %73 = vector.load %arg11[%c1_60, %c0_61, %c0_62] : memref<4x256x256xf32, #tpu.memory_space<vmem>>, vector<1x256x256xf32>
    %74 = vector.shape_cast %73 : vector<1x256x256xf32> to vector<256x256xf32>
    %cst_63 = arith.constant dense<0.000000e+00> : vector<16x256xf32>
    %75 = tpu.matmul %22, %74, %cst_63 {dimension_numbers = #tpu.dot_dimension_numbers<[1], [0], [0], [1], [0, 0, 1, 1], [], []>} : vector<16x256xf32>, vector<256x256xf32>, vector<16x256xf32> -> vector<16x256xf32>
    %c1_64 = arith.constant 1 : index
    %c0_65 = arith.constant 0 : index
    %76 = vector.load %arg12[%c1_64, %c0_65] : memref<4x256xf32, #tpu.memory_space<vmem>>, vector<1x256xf32>
    %77 = vector.broadcast %76 : vector<1x256xf32> to vector<16x256xf32>
    %78 = arith.mulf %75, %77 : vector<16x256xf32>
    %c1_66 = arith.constant 1 : index
    %c0_67 = arith.constant 0 : index
    %79 = vector.load %arg13[%c1_66, %c0_67] : memref<4x256xf32, #tpu.memory_space<vmem>>, vector<1x256xf32>
    %80 = vector.broadcast %79 : vector<1x256xf32> to vector<16x256xf32>
    %81 = arith.addf %78, %80 : vector<16x256xf32>
    %cst_68 = arith.constant 0.000000e+00 : f32
    %82 = vector.broadcast %cst_68 : f32 to vector<16x256xf32>
    %83 = arith.cmpf ogt, %81, %82 : vector<16x256xf32>
    %cst_69 = arith.constant 1.000000e-01 : f32
    %84 = vector.broadcast %cst_69 : f32 to vector<16x256xf32>
    %85 = arith.mulf %84, %81 : vector<16x256xf32>
    %86 = arith.select %83, %81, %85 : vector<16x256xi1>, vector<16x256xf32>
    %c1_70 = arith.constant 1 : index
    %c0_71 = arith.constant 0 : index
    %c0_72 = arith.constant 0 : index
    %87 = vector.load %arg14[%c1_70, %c0_71, %c0_72] : memref<4x256x64xf32, #tpu.memory_space<vmem>>, vector<1x256x64xf32>
    %88 = vector.shape_cast %87 : vector<1x256x64xf32> to vector<256x64xf32>
    %cst_73 = arith.constant dense<0.000000e+00> : vector<16x64xf32>
    %89 = tpu.matmul %86, %88, %cst_73 {dimension_numbers = #tpu.dot_dimension_numbers<[1], [0], [0], [1], [0, 0, 1, 1], [], []>} : vector<16x256xf32>, vector<256x64xf32>, vector<16x64xf32> -> vector<16x64xf32>
    %90 = arith.addf %72, %89 : vector<16x64xf32>
    %c2_74 = arith.constant 2 : index
    %c0_75 = arith.constant 0 : index
    %c0_76 = arith.constant 0 : index
    %91 = vector.load %arg11[%c2_74, %c0_75, %c0_76] : memref<4x256x256xf32, #tpu.memory_space<vmem>>, vector<1x256x256xf32>
    %92 = vector.shape_cast %91 : vector<1x256x256xf32> to vector<256x256xf32>
    %cst_77 = arith.constant dense<0.000000e+00> : vector<16x256xf32>
    %93 = tpu.matmul %37, %92, %cst_77 {dimension_numbers = #tpu.dot_dimension_numbers<[1], [0], [0], [1], [0, 0, 1, 1], [], []>} : vector<16x256xf32>, vector<256x256xf32>, vector<16x256xf32> -> vector<16x256xf32>
    %c2_78 = arith.constant 2 : index
    %c0_79 = arith.constant 0 : index
    %94 = vector.load %arg12[%c2_78, %c0_79] : memref<4x256xf32, #tpu.memory_space<vmem>>, vector<1x256xf32>
    %95 = vector.broadcast %94 : vector<1x256xf32> to vector<16x256xf32>
    %96 = arith.mulf %93, %95 : vector<16x256xf32>
    %c2_80 = arith.constant 2 : index
    %c0_81 = arith.constant 0 : index
    %97 = vector.load %arg13[%c2_80, %c0_81] : memref<4x256xf32, #tpu.memory_space<vmem>>, vector<1x256xf32>
    %98 = vector.broadcast %97 : vector<1x256xf32> to vector<16x256xf32>
    %99 = arith.addf %96, %98 : vector<16x256xf32>
    %cst_82 = arith.constant 0.000000e+00 : f32
    %100 = vector.broadcast %cst_82 : f32 to vector<16x256xf32>
    %101 = arith.cmpf ogt, %99, %100 : vector<16x256xf32>
    %cst_83 = arith.constant 1.000000e-01 : f32
    %102 = vector.broadcast %cst_83 : f32 to vector<16x256xf32>
    %103 = arith.mulf %102, %99 : vector<16x256xf32>
    %104 = arith.select %101, %99, %103 : vector<16x256xi1>, vector<16x256xf32>
    %c2_84 = arith.constant 2 : index
    %c0_85 = arith.constant 0 : index
    %c0_86 = arith.constant 0 : index
    %105 = vector.load %arg14[%c2_84, %c0_85, %c0_86] : memref<4x256x64xf32, #tpu.memory_space<vmem>>, vector<1x256x64xf32>
    %106 = vector.shape_cast %105 : vector<1x256x64xf32> to vector<256x64xf32>
    %cst_87 = arith.constant dense<0.000000e+00> : vector<16x64xf32>
    %107 = tpu.matmul %104, %106, %cst_87 {dimension_numbers = #tpu.dot_dimension_numbers<[1], [0], [0], [1], [0, 0, 1, 1], [], []>} : vector<16x256xf32>, vector<256x64xf32>, vector<16x64xf32> -> vector<16x64xf32>
    %108 = arith.addf %90, %107 : vector<16x64xf32>
    %c3 = arith.constant 3 : index
    %c0_88 = arith.constant 0 : index
    %c0_89 = arith.constant 0 : index
    %109 = vector.load %arg11[%c3, %c0_88, %c0_89] : memref<4x256x256xf32, #tpu.memory_space<vmem>>, vector<1x256x256xf32>
    %110 = vector.shape_cast %109 : vector<1x256x256xf32> to vector<256x256xf32>
    %cst_90 = arith.constant dense<0.000000e+00> : vector<16x256xf32>
    %111 = tpu.matmul %52, %110, %cst_90 {dimension_numbers = #tpu.dot_dimension_numbers<[1], [0], [0], [1], [0, 0, 1, 1], [], []>} : vector<16x256xf32>, vector<256x256xf32>, vector<16x256xf32> -> vector<16x256xf32>
    %c3_91 = arith.constant 3 : index
    %c0_92 = arith.constant 0 : index
    %112 = vector.load %arg12[%c3_91, %c0_92] : memref<4x256xf32, #tpu.memory_space<vmem>>, vector<1x256xf32>
    %113 = vector.broadcast %112 : vector<1x256xf32> to vector<16x256xf32>
    %114 = arith.mulf %111, %113 : vector<16x256xf32>
    %c3_93 = arith.constant 3 : index
    %c0_94 = arith.constant 0 : index
    %115 = vector.load %arg13[%c3_93, %c0_94] : memref<4x256xf32, #tpu.memory_space<vmem>>, vector<1x256xf32>
    %116 = vector.broadcast %115 : vector<1x256xf32> to vector<16x256xf32>
    %117 = arith.addf %114, %116 : vector<16x256xf32>
    %cst_95 = arith.constant 0.000000e+00 : f32
    %118 = vector.broadcast %cst_95 : f32 to vector<16x256xf32>
    %119 = arith.cmpf ogt, %117, %118 : vector<16x256xf32>
    %cst_96 = arith.constant 1.000000e-01 : f32
    %120 = vector.broadcast %cst_96 : f32 to vector<16x256xf32>
    %121 = arith.mulf %120, %117 : vector<16x256xf32>
    %122 = arith.select %119, %117, %121 : vector<16x256xi1>, vector<16x256xf32>
    %c3_97 = arith.constant 3 : index
    %c0_98 = arith.constant 0 : index
    %c0_99 = arith.constant 0 : index
    %123 = vector.load %arg14[%c3_97, %c0_98, %c0_99] : memref<4x256x64xf32, #tpu.memory_space<vmem>>, vector<1x256x64xf32>
    %124 = vector.shape_cast %123 : vector<1x256x64xf32> to vector<256x64xf32>
    %cst_100 = arith.constant dense<0.000000e+00> : vector<16x64xf32>
    %125 = tpu.matmul %122, %124, %cst_100 {dimension_numbers = #tpu.dot_dimension_numbers<[1], [0], [0], [1], [0, 0, 1, 1], [], []>} : vector<16x256xf32>, vector<256x64xf32>, vector<16x64xf32> -> vector<16x64xf32>
    %126 = arith.addf %108, %125 : vector<16x64xf32>
    %127 = vector.extract_strided_slice %126 {offsets = [0, 0], sizes = [16, 16], strides = [1, 1]} : vector<16x64xf32> to vector<16x16xf32>
    %128 = vector.extract_strided_slice %126 {offsets = [0, 16], sizes = [16, 16], strides = [1, 1]} : vector<16x64xf32> to vector<16x16xf32>
    %129 = vector.extract_strided_slice %126 {offsets = [0, 32], sizes = [16, 16], strides = [1, 1]} : vector<16x64xf32> to vector<16x16xf32>
    %130 = vector.extract_strided_slice %126 {offsets = [0, 48], sizes = [16, 16], strides = [1, 1]} : vector<16x64xf32> to vector<16x16xf32>
    %131 = arith.maximumf %127, %128 : vector<16x16xf32>
    %132 = arith.maximumf %129, %130 : vector<16x16xf32>
    %133 = arith.maximumf %131, %132 : vector<16x16xf32>
    %134 = arith.subf %127, %133 : vector<16x16xf32>
    %135 = math.exp %134 : vector<16x16xf32>
    %136 = arith.subf %128, %133 : vector<16x16xf32>
    %137 = math.exp %136 : vector<16x16xf32>
    %138 = arith.subf %129, %133 : vector<16x16xf32>
    %139 = math.exp %138 : vector<16x16xf32>
    %140 = arith.subf %130, %133 : vector<16x16xf32>
    %141 = math.exp %140 : vector<16x16xf32>
    %142 = arith.addf %135, %137 : vector<16x16xf32>
    %143 = arith.addf %142, %139 : vector<16x16xf32>
    %144 = arith.addf %143, %141 : vector<16x16xf32>
    %cst_101 = arith.constant 1.000000e+00 : f32
    %145 = vector.broadcast %cst_101 : f32 to vector<16x16xf32>
    %146 = arith.divf %145, %144 : vector<16x16xf32>
    %cst_102 = arith.constant 0.000000e+00 : f32
    %147 = vector.broadcast %cst_102 : f32 to vector<16x256xf32>
    %148 = arith.mulf %135, %146 : vector<16x16xf32>
    %c0_103 = arith.constant 0 : index
    %c0_104 = arith.constant 0 : index
    %149 = vector.load %arg16[%c0_103, %c0_104] : memref<16x256xf32, #tpu.memory_space<vmem>>, vector<16x256xf32>
    %cst_105 = arith.constant dense<0.000000e+00> : vector<16x256xf32>
    %150 = tpu.matmul %148, %149, %cst_105 {dimension_numbers = #tpu.dot_dimension_numbers<[1], [0], [0], [1], [0, 0, 1, 1], [], []>} : vector<16x16xf32>, vector<16x256xf32>, vector<16x256xf32> -> vector<16x256xf32>
    %151 = arith.mulf %150, %1 : vector<16x256xf32>
    %152 = arith.addf %147, %151 : vector<16x256xf32>
    %153 = arith.mulf %137, %146 : vector<16x16xf32>
    %c0_106 = arith.constant 0 : index
    %c0_107 = arith.constant 0 : index
    %154 = vector.load %arg16[%c0_106, %c0_107] : memref<16x256xf32, #tpu.memory_space<vmem>>, vector<16x256xf32>
    %cst_108 = arith.constant dense<0.000000e+00> : vector<16x256xf32>
    %155 = tpu.matmul %153, %154, %cst_108 {dimension_numbers = #tpu.dot_dimension_numbers<[1], [0], [0], [1], [0, 0, 1, 1], [], []>} : vector<16x16xf32>, vector<16x256xf32>, vector<16x256xf32> -> vector<16x256xf32>
    %156 = arith.mulf %155, %22 : vector<16x256xf32>
    %157 = arith.addf %152, %156 : vector<16x256xf32>
    %158 = arith.mulf %139, %146 : vector<16x16xf32>
    %c0_109 = arith.constant 0 : index
    %c0_110 = arith.constant 0 : index
    %159 = vector.load %arg16[%c0_109, %c0_110] : memref<16x256xf32, #tpu.memory_space<vmem>>, vector<16x256xf32>
    %cst_111 = arith.constant dense<0.000000e+00> : vector<16x256xf32>
    %160 = tpu.matmul %158, %159, %cst_111 {dimension_numbers = #tpu.dot_dimension_numbers<[1], [0], [0], [1], [0, 0, 1, 1], [], []>} : vector<16x16xf32>, vector<16x256xf32>, vector<16x256xf32> -> vector<16x256xf32>
    %161 = arith.mulf %160, %37 : vector<16x256xf32>
    %162 = arith.addf %157, %161 : vector<16x256xf32>
    %163 = arith.mulf %141, %146 : vector<16x16xf32>
    %c0_112 = arith.constant 0 : index
    %c0_113 = arith.constant 0 : index
    %164 = vector.load %arg16[%c0_112, %c0_113] : memref<16x256xf32, #tpu.memory_space<vmem>>, vector<16x256xf32>
    %cst_114 = arith.constant dense<0.000000e+00> : vector<16x256xf32>
    %165 = tpu.matmul %163, %164, %cst_114 {dimension_numbers = #tpu.dot_dimension_numbers<[1], [0], [0], [1], [0, 0, 1, 1], [], []>} : vector<16x16xf32>, vector<16x256xf32>, vector<16x256xf32> -> vector<16x256xf32>
    %166 = arith.mulf %165, %52 : vector<16x256xf32>
    %167 = arith.addf %162, %166 : vector<16x256xf32>
    %c0_115 = arith.constant 0 : index
    %c0_116 = arith.constant 0 : index
    %c0_117 = arith.constant 0 : index
    %168 = vector.load %arg20[%c0_115, %c0_116, %c0_117] : memref<1x16x256xf32, #tpu.memory_space<vmem>>, vector<1x16x256xf32>
    %169 = vector.shape_cast %168 : vector<1x16x256xf32> to vector<16x256xf32>
    %170 = vector.shape_cast %167 : vector<16x256xf32> to vector<1x16x256xf32>
    tpu.vector_store %arg20[%c0_115, %c0_116, %c0_117], %170 {strides = array<i32>} : memref<1x16x256xf32, #tpu.memory_space<vmem>>, vector<1x16x256xf32>,
    return
  }
  func.func @transform_0(%arg0: i32, %arg1: i32) -> (i32, i32, i32) {
    %c0_i32 = arith.constant 0 : i32
    %c0_i32_0 = arith.constant 0 : i32
    return %arg0, %arg1, %c0_i32 : i32, i32, i32
  }
  func.func @transform_1(%arg0: i32, %arg1: i32) -> (i32, i32, i32) {
    %c0_i32 = arith.constant 0 : i32
    %c0_i32_0 = arith.constant 0 : i32
    return %arg0, %arg1, %c0_i32 : i32, i32, i32
  }
  func.func @transform_2(%arg0: i32, %arg1: i32) -> (i32, i32, i32) {
    %c0_i32 = arith.constant 0 : i32
    %c0_i32_0 = arith.constant 0 : i32
    return %arg0, %arg1, %c0_i32 : i32, i32, i32
  }
  func.func @transform_3(%arg0: i32, %arg1: i32) -> (i32, i32, i32) {
    %c0_i32 = arith.constant 0 : i32
    %c0_i32_0 = arith.constant 0 : i32
    return %arg0, %arg1, %c0_i32 : i32, i32, i32
  }
  func.func @transform_4(%arg0: i32, %arg1: i32) -> (i32, i32) {
    %c0_i32 = arith.constant 0 : i32
    %c0_i32_0 = arith.constant 0 : i32
    %c0_i32_1 = arith.constant 0 : i32
    return %c0_i32, %c0_i32_0 : i32, i32
  }
  func.func @transform_5(%arg0: i32, %arg1: i32) -> (i32, i32) {
    %c0_i32 = arith.constant 0 : i32
    %c0_i32_0 = arith.constant 0 : i32
    %c0_i32_1 = arith.constant 0 : i32
    return %c0_i32, %c0_i32_0 : i32, i32
  }
  func.func @transform_6(%arg0: i32, %arg1: i32) -> (i32, i32) {
    %c0_i32 = arith.constant 0 : i32
    %c0_i32_0 = arith.constant 0 : i32
    %c0_i32_1 = arith.constant 0 : i32
    return %c0_i32, %c0_i32_0 : i32, i32
  }
  func.func @transform_7(%arg0: i32, %arg1: i32) -> (i32, i32) {
    %c0_i32 = arith.constant 0 : i32
    %c0_i32_0 = arith.constant 0 : i32
    %c0_i32_1 = arith.constant 0 : i32
    return %c0_i32, %c0_i32_0 : i32, i32
  }
  func.func @transform_8(%arg0: i32, %arg1: i32) -> (i32, i32) {
    %c0_i32 = arith.constant 0 : i32
    %c0_i32_0 = arith.constant 0 : i32
    %c0_i32_1 = arith.constant 0 : i32
    return %c0_i32, %c0_i32_0 : i32, i32
  }
  func.func @transform_9(%arg0: i32, %arg1: i32) -> (i32, i32, i32) {
    %c0_i32 = arith.constant 0 : i32
    %c0_i32_0 = arith.constant 0 : i32
    %c0_i32_1 = arith.constant 0 : i32
    %c0_i32_2 = arith.constant 0 : i32
    return %c0_i32, %c0_i32_0, %c0_i32_1 : i32, i32, i32
  }
  func.func @transform_10(%arg0: i32, %arg1: i32) -> (i32, i32) {
    %c0_i32 = arith.constant 0 : i32
    %c0_i32_0 = arith.constant 0 : i32
    %c0_i32_1 = arith.constant 0 : i32
    return %c0_i32, %c0_i32_0 : i32, i32
  }
  func.func @transform_11(%arg0: i32, %arg1: i32) -> (i32, i32) {
    %c0_i32 = arith.constant 0 : i32
    %c0_i32_0 = arith.constant 0 : i32
    %c0_i32_1 = arith.constant 0 : i32
    return %c0_i32, %c0_i32_0 : i32, i32
  }
  func.func @transform_12(%arg0: i32, %arg1: i32) -> (i32, i32, i32) {
    %c0_i32 = arith.constant 0 : i32
    %c0_i32_0 = arith.constant 0 : i32
    %c0_i32_1 = arith.constant 0 : i32
    %c0_i32_2 = arith.constant 0 : i32
    return %c0_i32, %c0_i32_0, %c0_i32_1 : i32, i32, i32
  }
  func.func @transform_13(%arg0: i32, %arg1: i32) -> (i32, i32) {
    %c0_i32 = arith.constant 0 : i32
    %c0_i32_0 = arith.constant 0 : i32
    %c0_i32_1 = arith.constant 0 : i32
    return %c0_i32, %c0_i32_0 : i32, i32
  }
  func.func @transform_14(%arg0: i32, %arg1: i32) -> (i32, i32) {
    %c0_i32 = arith.constant 0 : i32
    %c0_i32_0 = arith.constant 0 : i32
    %c0_i32_1 = arith.constant 0 : i32
    return %c0_i32, %c0_i32_0 : i32, i32
  }
  func.func @transform_15(%arg0: i32, %arg1: i32) -> (i32, i32) {
    %c0_i32 = arith.constant 0 : i32
    %c0_i32_0 = arith.constant 0 : i32
    %c0_i32_1 = arith.constant 0 : i32
    return %c0_i32, %c0_i32_0 : i32, i32
  }
  func.func @transform_16(%arg0: i32, %arg1: i32) -> (i32, i32) {
    %c0_i32 = arith.constant 0 : i32
    %c0_i32_0 = arith.constant 0 : i32
    %c0_i32_1 = arith.constant 0 : i32
    return %c0_i32, %c0_i32_0 : i32, i32
  }
  func.func @transform_17(%arg0: i32, %arg1: i32) -> (i32, i32) {
    %c0_i32 = arith.constant 0 : i32
    %c0_i32_0 = arith.constant 0 : i32
    %c0_i32_1 = arith.constant 0 : i32
    return %c0_i32, %c0_i32_0 : i32, i32
  }
  func.func @transform_18(%arg0: i32, %arg1: i32) -> (i32, i32, i32) {
    %c0_i32 = arith.constant 0 : i32
    %c0_i32_0 = arith.constant 0 : i32
    return %arg0, %arg1, %c0_i32 : i32, i32, i32
  }
}

</mosaic_0001>

<llo_original>
// kernel: tpu_custom_call.1
$region0: #{tpu_custom_call.1}
  #allocation0 [shape = 'u32[]', space=smem, size = 0x4, offset = 0x4, fixed_abs, tag = 'smem constant byte address 0x4 - core index']
  #allocation1 [shape = 'u32[72,128]{1,0:T(1,128)}', space=vmem, size = 0x9000, scoped, tag = 'internal scratch']
  %s0 = inlined_call_operand.hbm [shape: f32[2,16,256], index: 0, kind: input, shape index: {}]
  %s1 = inlined_call_operand.vmem [shape: f32[2,8,256], index: 1, kind: input, shape index: {}]
  %s2 = inlined_call_operand.vmem [shape: f32[2,4,256], index: 2, kind: input, shape index: {}]
  %s3 = inlined_call_operand.vmem [shape: f32[2,2,256], index: 3, kind: input, shape index: {}]
  %s4 = inlined_call_operand.vmem [shape: f32[256,256], index: 4, kind: input, shape index: {}]
  %s5 = inlined_call_operand.vmem [shape: f32[256,256], index: 5, kind: input, shape index: {}]
  %s6 = inlined_call_operand.vmem [shape: f32[256,256], index: 6, kind: input, shape index: {}]
  %s7 = inlined_call_operand.hbm [shape: f32[3,256], index: 7, kind: input, shape index: {}]
  %s8 = inlined_call_operand.hbm [shape: f32[3,256], index: 8, kind: input, shape index: {}]
  %s9 = inlined_call_operand.hbm [shape: f32[4,256,256], index: 9, kind: input, shape index: {}]
  %s10 = inlined_call_operand.hbm [shape: f32[4,256], index: 10, kind: input, shape index: {}]
  %s11 = inlined_call_operand.hbm [shape: f32[4,256], index: 11, kind: input, shape index: {}]
  %s12 = inlined_call_operand.vmem [shape: f32[4,256,64], index: 12, kind: input, shape index: {}]
  %s13 = inlined_call_operand.hbm [shape: f32[1,64], index: 13, kind: input, shape index: {}]
  %s14 = inlined_call_operand.hbm [shape: f32[16,256], index: 14, kind: input, shape index: {}]
  %s15 = inlined_call_operand.vmem [shape: f32[16,8], index: 15, kind: input, shape index: {}]
  %s16 = inlined_call_operand.vmem [shape: f32[16,4], index: 16, kind: input, shape index: {}]
  %s17 = inlined_call_operand.vmem [shape: f32[16,2], index: 17, kind: input, shape index: {}]
  %s18 = inlined_call_operand.hbm [shape: f32[2,16,256], index: 18, kind: output, shape index: {}]
  %s19 = sld [smem:[#allocation0]]
  $region137: #{tpu_custom_call.1} parent=0
    _
  %s21 = ssub.s32 1, %s19
  %s22 = scalar_select 0, %s21, %s19
  $region1: #{tpu_custom_call.1} parent=0
    #allocation2 [shape = 'u8[32768]{0}', space=vmem, size = 0x8000, scoped, tag = 'input window, operand 0']
    #allocation3 [shape = 's32[2]{0}', space=sflag, size = 0x8, scoped, tag = 'scoped memory for tpu_custom_call.1']
    #allocation4 [shape = 's32[2]{0}', space=sflag, size = 0x8, scoped, tag = 'scoped memory for tpu_custom_call.1']
    #allocation5 [shape = 'u8[4096]{0}', space=vmem, size = 0x1000, scoped, tag = 'input window, operand 7, single buffered']
    #allocation6 [shape = 's32[1]{0}', space=sflag, size = 0x4, scoped, tag = 'scoped memory for tpu_custom_call.1']
    #allocation7 [shape = 'u8[4096]{0}', space=vmem, size = 0x1000, scoped, tag = 'input window, operand 8, single buffered']
    #allocation8 [shape = 'u8[1048576]{0}', space=vmem, size = 0x100000, scoped, tag = 'input window, operand 9, single buffered']
    #allocation9 [shape = 's32[1]{0}', space=sflag, size = 0x4, scoped, tag = 'scoped memory for tpu_custom_call.1']
    #allocation10 [shape = 'u8[4096]{0}', space=vmem, size = 0x1000, scoped, tag = 'input window, operand 10, single buffered']
    #allocation11 [shape = 'u8[4096]{0}', space=vmem, size = 0x1000, scoped, tag = 'input window, operand 11, single buffered']
    #allocation12 [shape = 's32[1]{0}', space=sflag, size = 0x4, scoped, tag = 'scoped memory for tpu_custom_call.1']
    #allocation13 [shape = 'u8[512]{0}', space=vmem, size = 0x400, scoped, tag = 'input window, operand 13, single buffered']
    #allocation14 [shape = 'u8[16384]{0}', space=vmem, size = 0x4000, scoped, tag = 'input window, operand 14, single buffered']
    #allocation15 [shape = 's32[1]{0}', space=sflag, size = 0x4, scoped, tag = 'scoped memory for tpu_custom_call.1']
    #allocation16 [shape = 'u8[32768]{0}', space=vmem, size = 0x8000, scoped, tag = 'output window, operand 0']
    %23 = vsyncpa [#allocation3], 0
    %s24 = scalar_lea.sflag [#allocation3], 1
    %25 = vsyncpa %s24, 0
    %26 = vsyncpa [#allocation6], 0
    %27 = vsyncpa [#allocation9], 0
    %28 = vsyncpa [#allocation12], 0
    %29 = vsyncpa [#allocation15], 0
    %30 = vsyncpa [#allocation4], 0
    %s31 = scalar_lea.sflag [#allocation4], 1
    %32 = vsyncpa %s31, 0
    loop: start=0, step=1, limit=4
    $region2: #{tpu_custom_call.1} parent=1 // loop_pre_header
      _
    $region3: #{tpu_custom_call.1} parent=1 // loop_header
      %s34 = sphi 0, %s38
      %p35 = scmp.ge.s32.totalorder %s34, 4
      %s41 = sphi 0, %s53
      %s42 = sphi 0, %s49
      %s43 = sphi 0, %s41
      %s44 = sphi 0, %s42
      %s45 = sphi 0, %s43
      %s46 = sphi 0, %s44
      %s58 = sphi 0, %s60
      %s61 = sphi 0, %s58
      %s62 = sphi 0, %s61
      %s78 = sphi 0, %s62
      %s86 = sphi 0, %s88
      %s89 = sphi 0, %s86
      %s90 = sphi 0, %s89
      %s106 = sphi 0, %s90
      %s114 = sphi 0, %s116
      %s117 = sphi 0, %s114
      %s118 = sphi 0, %s117
      %s134 = sphi 0, %s118
      %s142 = sphi 0, %s144
      %s145 = sphi 0, %s142
      %s146 = sphi 0, %s145
      %s162 = sphi 0, %s146
      %s166 = sphi 0, %s166
      %s168 = sphi 0, %s166
      %s169 = sphi 0, %s168
      %s183 = sphi 0, %s169
      %s187 = sphi 0, %s187
      %s189 = sphi 0, %s187
      %s190 = sphi 0, %s189
      %s204 = sphi 0, %s190
      %s208 = sphi 0, %s208
      %s210 = sphi 0, %s208
      %s211 = sphi 0, %s210
      %s225 = sphi 0, %s211
      %s229 = sphi 0, %s229
      %s231 = sphi 0, %s229
      %s232 = sphi 0, %s231
      %s246 = sphi 0, %s232
      %s250 = sphi 0, %s250
      %s252 = sphi 0, %s250
      %s253 = sphi 0, %s252
      %s267 = sphi 0, %s253
      %s271 = sphi 0, %s271
      %s273 = sphi 0, %s271
      %s274 = sphi 0, %s273
      %s288 = sphi 0, %s274
      %s292 = sphi 0, %s292
      %s294 = sphi 0, %s292
      %s295 = sphi 0, %s294
      %s309 = sphi 0, %s295
      %s313 = sphi 0, %s313
      %s315 = sphi 0, %s313
      %s316 = sphi 0, %s315
      %s330 = sphi 0, %s316
      %s334 = sphi 0, %s334
      %s336 = sphi 0, %s334
      %s337 = sphi 0, %s336
      %s351 = sphi 0, %s337
      %s355 = sphi 0, %s355
      %s357 = sphi 0, %s355
      %s358 = sphi 0, %s357
      %s372 = sphi 0, %s358
      %s376 = sphi 0, %s376
      %s378 = sphi 0, %s376
      %s379 = sphi 0, %s378
      %s393 = sphi 0, %s379
      %s397 = sphi 0, %s397
      %s399 = sphi 0, %s397
      %s400 = sphi 0, %s399
      %s414 = sphi 0, %s400
      %s418 = sphi 0, %s418
      %s420 = sphi 0, %s418
      %s421 = sphi 0, %s420
      %s435 = sphi 0, %s421
      %s439 = sphi 0, %s439
      %s441 = sphi 0, %s439
      %s442 = sphi 0, %s441
      %s456 = sphi 0, %s442
      %s464 = sphi 0, %s466
      %s467 = sphi 0, %s464
      %s468 = sphi 0, %s467
      %s484 = sphi 0, %s468
    $region4: #{tpu_custom_call.1} parent=1 // loop_header_branch
      %37 = sbr.rel (%p35) target = $region8
    $region5: #{tpu_custom_call.1} parent=1 // loop_body
      %s39 = ssub.s32 %s34, 1
      %s40 = ssub.s32 %s34, 2
      %s47 = sadd.s32 1, %s42
      %p48 = scmp.ge.s32.totalorder %s47, 1
      %s49 = scalar_select %p48, 0, %s47
      %s50 = sadd.s32 1, %s41
      %s51 = scalar_select %p48, %s50, %s41
      %p52 = scmp.ge.s32.totalorder %s51, 2
      %s53 = scalar_select %p52, 0, %s51
      %s54 = ssub.s32 %s41, %s53
      %s55 = ssub.s32 %s42, %s49
      %s56 = sor.u32 %s54, %s55
      %p57 = scmp.eq.s32.totalorder %s56, 0
      %s59 = sadd.s32 %s58, 1
      %s60 = scalar_select %p57, %s58, %s59
      %p63 = pneg %p57
      %p64 = scmp.eq.s32.totalorder %s34, 1
      %p65 = por %p63, %p64
      %p66 = scmp.ne.s32.totalorder %s58, %s61
      %p67 = scmp.eq.s32.totalorder %s34, 0
      %p68 = por %p66, %p67
      %p69 = scmp.ne.s32.totalorder %s58, %s61
      %p70 = scmp.eq.s32.totalorder %s39, 1
      %p71 = por %p69, %p70
      %p72 = scmp.ne.s32.totalorder %s61, %s62
      %p73 = scmp.eq.s32.totalorder %s39, 0
      %p74 = por %p72, %p73
      %p75 = scmp.ne.s32.totalorder %s61, %s62
      %p76 = scmp.eq.s32.totalorder %s40, 1
      %p77 = por %p75, %p76
      %p79 = scmp.ne.s32.totalorder %s62, %s78
      %p80 = scmp.eq.s32.totalorder %s40, 0
      %p81 = por %p79, %p80
      %s82 = ssub.s32 %s41, %s53
      %s83 = ssub.s32 %s42, %s49
      %s84 = sor.u32 %s82, %s83
      %p85 = scmp.eq.s32.totalorder %s84, 0
      %s87 = sadd.s32 %s86, 1
      %s88 = scalar_select %p85, %s86, %s87
      %p91 = pneg %p85
      %p92 = scmp.eq.s32.totalorder %s34, 1
      %p93 = por %p91, %p92
      %p94 = scmp.ne.s32.totalorder %s86, %s89
      %p95 = scmp.eq.s32.totalorder %s34, 0
      %p96 = por %p94, %p95
      %p97 = scmp.ne.s32.totalorder %s86, %s89
      %p98 = scmp.eq.s32.totalorder %s39, 1
      %p99 = por %p97, %p98
      %p100 = scmp.ne.s32.totalorder %s89, %s90
      %p101 = scmp.eq.s32.totalorder %s39, 0
      %p102 = por %p100, %p101
      %p103 = scmp.ne.s32.totalorder %s89, %s90
      %p104 = scmp.eq.s32.totalorder %s40, 1
      %p105 = por %p103, %p104
      %p107 = scmp.ne.s32.totalorder %s90, %s106
      %p108 = scmp.eq.s32.totalorder %s40, 0
      %p109 = por %p107, %p108
      %s110 = ssub.s32 %s41, %s53
      %s111 = ssub.s32 %s42, %s49
      %s112 = sor.u32 %s110, %s111
      %p113 = scmp.eq.s32.totalorder %s112, 0
      %s115 = sadd.s32 %s114, 1
      %s116 = scalar_select %p113, %s114, %s115
      %p119 = pneg %p113
      %p120 = scmp.eq.s32.totalorder %s34, 1
      %p121 = por %p119, %p120
      %p122 = scmp.ne.s32.totalorder %s114, %s117
      %p123 = scmp.eq.s32.totalorder %s34, 0
      %p124 = por %p122, %p123
      %p125 = scmp.ne.s32.totalorder %s114, %s117
      %p126 = scmp.eq.s32.totalorder %s39, 1
      %p127 = por %p125, %p126
      %p128 = scmp.ne.s32.totalorder %s117, %s118
      %p129 = scmp.eq.s32.totalorder %s39, 0
      %p130 = por %p128, %p129
      %p131 = scmp.ne.s32.totalorder %s117, %s118
      %p132 = scmp.eq.s32.totalorder %s40, 1
      %p133 = por %p131, %p132
      %p135 = scmp.ne.s32.totalorder %s118, %s134
      %p136 = scmp.eq.s32.totalorder %s40, 0
      %p137 = por %p135, %p136
      %s138 = ssub.s32 %s41, %s53
      %s139 = ssub.s32 %s42, %s49
      %s140 = sor.u32 %s138, %s139
      %p141 = scmp.eq.s32.totalorder %s140, 0
      %s143 = sadd.s32 %s142, 1
      %s144 = scalar_select %p141, %s142, %s143
      %p147 = pneg %p141
      %p148 = scmp.eq.s32.totalorder %s34, 1
      %p149 = por %p147, %p148
      %p150 = scmp.ne.s32.totalorder %s142, %s145
      %p151 = scmp.eq.s32.totalorder %s34, 0
      %p152 = por %p150, %p151
      %p153 = scmp.ne.s32.totalorder %s142, %s145
      %p154 = scmp.eq.s32.totalorder %s39, 1
      %p155 = por %p153, %p154
      %p156 = scmp.ne.s32.totalorder %s145, %s146
      %p157 = scmp.eq.s32.totalorder %s39, 0
      %p158 = por %p156, %p157
      %p159 = scmp.ne.s32.totalorder %s145, %s146
      %p160 = scmp.eq.s32.totalorder %s40, 1
      %p161 = por %p159, %p160
      %p163 = scmp.ne.s32.totalorder %s146, %s162
      %p164 = scmp.eq.s32.totalorder %s40, 0
      %p165 = por %p163, %p164
      %s167 = sadd.s32 %s166, 1
      %p170 = scmp.eq.s32.totalorder %s34, 1
      %p171 = scmp.ne.s32.totalorder %s166, %s168
      %p172 = scmp.eq.s32.totalorder %s34, 0
      %p173 = por %p171, %p172
      %p174 = scmp.ne.s32.totalorder %s166, %s168
      %p175 = scmp.eq.s32.totalorder %s39, 1
      %p176 = por %p174, %p175
      %p177 = scmp.ne.s32.totalorder %s168, %s169
      %p178 = scmp.eq.s32.totalorder %s39, 0
      %p179 = por %p177, %p178
      %p180 = scmp.ne.s32.totalorder %s168, %s169
      %p181 = scmp.eq.s32.totalorder %s40, 1
      %p182 = por %p180, %p181
      %p184 = scmp.ne.s32.totalorder %s169, %s183
      %p185 = scmp.eq.s32.totalorder %s40, 0
      %p186 = por %p184, %p185
      %s188 = sadd.s32 %s187, 1
      %p191 = scmp.eq.s32.totalorder %s34, 1
      %p192 = scmp.ne.s32.totalorder %s187, %s189
      %p193 = scmp.eq.s32.totalorder %s34, 0
      %p194 = por %p192, %p193
      %p195 = scmp.ne.s32.totalorder %s187, %s189
      %p196 = scmp.eq.s32.totalorder %s39, 1
      %p197 = por %p195, %p196
      %p198 = scmp.ne.s32.totalorder %s189, %s190
      %p199 = scmp.eq.s32.totalorder %s39, 0
      %p200 = por %p198, %p199
      %p201 = scmp.ne.s32.totalorder %s189, %s190
      %p202 = scmp.eq.s32.totalorder %s40, 1
      %p203 = por %p201, %p202
      %p205 = scmp.ne.s32.totalorder %s190, %s204
      %p206 = scmp.eq.s32.totalorder %s40, 0
      %p207 = por %p205, %p206
      %s209 = sadd.s32 %s208, 1
      %p212 = scmp.eq.s32.totalorder %s34, 1
      %p213 = scmp.ne.s32.totalorder %s208, %s210
      %p214 = scmp.eq.s32.totalorder %s34, 0
      %p215 = por %p213, %p214
      %p216 = scmp.ne.s32.totalorder %s208, %s210
      %p217 = scmp.eq.s32.totalorder %s39, 1
      %p218 = por %p216, %p217
      %p219 = scmp.ne.s32.totalorder %s210, %s211
      %p220 = scmp.eq.s32.totalorder %s39, 0
      %p221 = por %p219, %p220
      %p222 = scmp.ne.s32.totalorder %s210, %s211
      %p223 = scmp.eq.s32.totalorder %s40, 1
      %p224 = por %p222, %p223
      %p226 = scmp.ne.s32.totalorder %s211, %s225
      %p227 = scmp.eq.s32.totalorder %s40, 0
      %p228 = por %p226, %p227
      %s230 = sadd.s32 %s229, 1
      %p233 = scmp.eq.s32.totalorder %s34, 1
      %p234 = scmp.ne.s32.totalorder %s229, %s231
      %p235 = scmp.eq.s32.totalorder %s34, 0
      %p236 = por %p234, %p235
      %p237 = scmp.ne.s32.totalorder %s229, %s231
      %p238 = scmp.eq.s32.totalorder %s39, 1
      %p239 = por %p237, %p238
      %p240 = scmp.ne.s32.totalorder %s231, %s232
      %p241 = scmp.eq.s32.totalorder %s39, 0
      %p242 = por %p240, %p241
      %p243 = scmp.ne.s32.totalorder %s231, %s232
      %p244 = scmp.eq.s32.totalorder %s40, 1
      %p245 = por %p243, %p244
      %p247 = scmp.ne.s32.totalorder %s232, %s246
      %p248 = scmp.eq.s32.totalorder %s40, 0
      %p249 = por %p247, %p248
      %s251 = sadd.s32 %s250, 1
      %p254 = scmp.eq.s32.totalorder %s34, 1
      %p255 = scmp.ne.s32.totalorder %s250, %s252
      %p256 = scmp.eq.s32.totalorder %s34, 0
      %p257 = por %p255, %p256
      %p258 = scmp.ne.s32.totalorder %s250, %s252
      %p259 = scmp.eq.s32.totalorder %s39, 1
      %p260 = por %p258, %p259
      %p261 = scmp.ne.s32.totalorder %s252, %s253
      %p262 = scmp.eq.s32.totalorder %s39, 0
      %p263 = por %p261, %p262
      %p264 = scmp.ne.s32.totalorder %s252, %s253
      %p265 = scmp.eq.s32.totalorder %s40, 1
      %p266 = por %p264, %p265
      %p268 = scmp.ne.s32.totalorder %s253, %s267
      %p269 = scmp.eq.s32.totalorder %s40, 0
      %p270 = por %p268, %p269
      %s272 = sadd.s32 %s271, 1
      %p275 = scmp.eq.s32.totalorder %s34, 1
      %p276 = scmp.ne.s32.totalorder %s271, %s273
      %p277 = scmp.eq.s32.totalorder %s34, 0
      %p278 = por %p276, %p277
      %p279 = scmp.ne.s32.totalorder %s271, %s273
      %p280 = scmp.eq.s32.totalorder %s39, 1
      %p281 = por %p279, %p280
      %p282 = scmp.ne.s32.totalorder %s273, %s274
      %p283 = scmp.eq.s32.totalorder %s39, 0
      %p284 = por %p282, %p283
      %p285 = scmp.ne.s32.totalorder %s273, %s274
      %p286 = scmp.eq.s32.totalorder %s40, 1
      %p287 = por %p285, %p286
      %p289 = scmp.ne.s32.totalorder %s274, %s288
      %p290 = scmp.eq.s32.totalorder %s40, 0
      %p291 = por %p289, %p290
      %s293 = sadd.s32 %s292, 1
      %p296 = scmp.eq.s32.totalorder %s34, 1
      %p297 = scmp.ne.s32.totalorder %s292, %s294
      %p298 = scmp.eq.s32.totalorder %s34, 0
      %p299 = por %p297, %p298
      %p300 = scmp.ne.s32.totalorder %s292, %s294
      %p301 = scmp.eq.s32.totalorder %s39, 1
      %p302 = por %p300, %p301
      %p303 = scmp.ne.s32.totalorder %s294, %s295
      %p304 = scmp.eq.s32.totalorder %s39, 0
      %p305 = por %p303, %p304
      %p306 = scmp.ne.s32.totalorder %s294, %s295
      %p307 = scmp.eq.s32.totalorder %s40, 1
      %p308 = por %p306, %p307
      %p310 = scmp.ne.s32.totalorder %s295, %s309
      %p311 = scmp.eq.s32.totalorder %s40, 0
      %p312 = por %p310, %p311
      %s314 = sadd.s32 %s313, 1
      %p317 = scmp.eq.s32.totalorder %s34, 1
      %p318 = scmp.ne.s32.totalorder %s313, %s315
      %p319 = scmp.eq.s32.totalorder %s34, 0
      %p320 = por %p318, %p319
      %p321 = scmp.ne.s32.totalorder %s313, %s315
      %p322 = scmp.eq.s32.totalorder %s39, 1
      %p323 = por %p321, %p322
      %p324 = scmp.ne.s32.totalorder %s315, %s316
      %p325 = scmp.eq.s32.totalorder %s39, 0
      %p326 = por %p324, %p325
      %p327 = scmp.ne.s32.totalorder %s315, %s316
      %p328 = scmp.eq.s32.totalorder %s40, 1
      %p329 = por %p327, %p328
      %p331 = scmp.ne.s32.totalorder %s316, %s330
      %p332 = scmp.eq.s32.totalorder %s40, 0
      %p333 = por %p331, %p332
      %s335 = sadd.s32 %s334, 1
      %p338 = scmp.eq.s32.totalorder %s34, 1
      %p339 = scmp.ne.s32.totalorder %s334, %s336
      %p340 = scmp.eq.s32.totalorder %s34, 0
      %p341 = por %p339, %p340
      %p342 = scmp.ne.s32.totalorder %s334, %s336
      %p343 = scmp.eq.s32.totalorder %s39, 1
      %p344 = por %p342, %p343
      %p345 = scmp.ne.s32.totalorder %s336, %s337
      %p346 = scmp.eq.s32.totalorder %s39, 0
      %p347 = por %p345, %p346
      %p348 = scmp.ne.s32.totalorder %s336, %s337
      %p349 = scmp.eq.s32.totalorder %s40, 1
      %p350 = por %p348, %p349
      %p352 = scmp.ne.s32.totalorder %s337, %s351
      %p353 = scmp.eq.s32.totalorder %s40, 0
      %p354 = por %p352, %p353
      %s356 = sadd.s32 %s355, 1
      %p359 = scmp.eq.s32.totalorder %s34, 1
      %p360 = scmp.ne.s32.totalorder %s355, %s357
      %p361 = scmp.eq.s32.totalorder %s34, 0
      %p362 = por %p360, %p361
      %p363 = scmp.ne.s32.totalorder %s355, %s357
      %p364 = scmp.eq.s32.totalorder %s39, 1
      %p365 = por %p363, %p364
      %p366 = scmp.ne.s32.totalorder %s357, %s358
      %p367 = scmp.eq.s32.totalorder %s39, 0
      %p368 = por %p366, %p367
      %p369 = scmp.ne.s32.totalorder %s357, %s358
      %p370 = scmp.eq.s32.totalorder %s40, 1
      %p371 = por %p369, %p370
      %p373 = scmp.ne.s32.totalorder %s358, %s372
      %p374 = scmp.eq.s32.totalorder %s40, 0
      %p375 = por %p373, %p374
      %s377 = sadd.s32 %s376, 1
      %p380 = scmp.eq.s32.totalorder %s34, 1
      %p381 = scmp.ne.s32.totalorder %s376, %s378
      %p382 = scmp.eq.s32.totalorder %s34, 0
      %p383 = por %p381, %p382
      %p384 = scmp.ne.s32.totalorder %s376, %s378
      %p385 = scmp.eq.s32.totalorder %s39, 1
      %p386 = por %p384, %p385
      %p387 = scmp.ne.s32.totalorder %s378, %s379
      %p388 = scmp.eq.s32.totalorder %s39, 0
      %p389 = por %p387, %p388
      %p390 = scmp.ne.s32.totalorder %s378, %s379
      %p391 = scmp.eq.s32.totalorder %s40, 1
      %p392 = por %p390, %p391
      %p394 = scmp.ne.s32.totalorder %s379, %s393
      %p395 = scmp.eq.s32.totalorder %s40, 0
      %p396 = por %p394, %p395
      %s398 = sadd.s32 %s397, 1
      %p401 = scmp.eq.s32.totalorder %s34, 1
      %p402 = scmp.ne.s32.totalorder %s397, %s399
      %p403 = scmp.eq.s32.totalorder %s34, 0
      %p404 = por %p402, %p403
      %p405 = scmp.ne.s32.totalorder %s397, %s399
      %p406 = scmp.eq.s32.totalorder %s39, 1
      %p407 = por %p405, %p406
      %p408 = scmp.ne.s32.totalorder %s399, %s400
      %p409 = scmp.eq.s32.totalorder %s39, 0
      %p410 = por %p408, %p409
      %p411 = scmp.ne.s32.totalorder %s399, %s400
      %p412 = scmp.eq.s32.totalorder %s40, 1
      %p413 = por %p411, %p412
      %p415 = scmp.ne.s32.totalorder %s400, %s414
      %p416 = scmp.eq.s32.totalorder %s40, 0
      %p417 = por %p415, %p416
      %s419 = sadd.s32 %s418, 1
      %p422 = scmp.eq.s32.totalorder %s34, 1
      %p423 = scmp.ne.s32.totalorder %s418, %s420
      %p424 = scmp.eq.s32.totalorder %s34, 0
      %p425 = por %p423, %p424
      %p426 = scmp.ne.s32.totalorder %s418, %s420
      %p427 = scmp.eq.s32.totalorder %s39, 1
      %p428 = por %p426, %p427
      %p429 = scmp.ne.s32.totalorder %s420, %s421
      %p430 = scmp.eq.s32.totalorder %s39, 0
      %p431 = por %p429, %p430
      %p432 = scmp.ne.s32.totalorder %s420, %s421
      %p433 = scmp.eq.s32.totalorder %s40, 1
      %p434 = por %p432, %p433
      %p436 = scmp.ne.s32.totalorder %s421, %s435
      %p437 = scmp.eq.s32.totalorder %s40, 0
      %p438 = por %p436, %p437
      %s440 = sadd.s32 %s439, 1
      %p443 = scmp.eq.s32.totalorder %s34, 1
      %p444 = scmp.ne.s32.totalorder %s439, %s441
      %p445 = scmp.eq.s32.totalorder %s34, 0
      %p446 = por %p444, %p445
      %p447 = scmp.ne.s32.totalorder %s439, %s441
      %p448 = scmp.eq.s32.totalorder %s39, 1
      %p449 = por %p447, %p448
      %p450 = scmp.ne.s32.totalorder %s441, %s442
      %p451 = scmp.eq.s32.totalorder %s39, 0
      %p452 = por %p450, %p451
      %p453 = scmp.ne.s32.totalorder %s441, %s442
      %p454 = scmp.eq.s32.totalorder %s40, 1
      %p455 = por %p453, %p454
      %p457 = scmp.ne.s32.totalorder %s442, %s456
      %p458 = scmp.eq.s32.totalorder %s40, 0
      %p459 = por %p457, %p458
      %s460 = ssub.s32 %s41, %s53
      %s461 = ssub.s32 %s42, %s49
      %s462 = sor.u32 %s460, %s461
      %p463 = scmp.eq.s32.totalorder %s462, 0
      %s465 = sadd.s32 %s464, 1
      %s466 = scalar_select %p463, %s464, %s465
      %p469 = pneg %p463
      %p470 = scmp.eq.s32.totalorder %s34, 1
      %p471 = por %p469, %p470
      %p472 = scmp.ne.s32.totalorder %s464, %s467
      %p473 = scmp.eq.s32.totalorder %s34, 0
      %p474 = por %p472, %p473
      %p475 = scmp.ne.s32.totalorder %s464, %s467
      %p476 = scmp.eq.s32.totalorder %s39, 1
      %p477 = por %p475, %p476
      %p478 = scmp.ne.s32.totalorder %s467, %s468
      %p479 = scmp.eq.s32.totalorder %s39, 0
      %p480 = por %p478, %p479
      %p481 = scmp.ne.s32.totalorder %s467, %s468
      %p482 = scmp.eq.s32.totalorder %s40, 1
      %p483 = por %p481, %p482
      %p485 = scmp.ne.s32.totalorder %s468, %s484
      %p486 = scmp.eq.s32.totalorder %s40, 0
      %p487 = por %p485, %p486
      %p488 = scmp.le.s32.totalorder 1, %s34
      %p489 = scmp.lt.s32.totalorder %s34, 3
      %p490 = pnand %p488, %p489
      %p491 = pneg %p490
      // Predicated region
      $region9: #{tpu_custom_call.1} parent=5 // pred_check
        _
      $region10: #{tpu_custom_call.1} parent=5 // pred_check_branch
        %493 = sbr.rel (%p490) target = $region12
      $region11: #{tpu_custom_call.1} parent=5 // pred_region
        %s494 = ssub.s32 %s34, 1
        // Predicated region
        $region13: #{tpu_custom_call.1} parent=11 // pred_check
          %p495 = pneg %p179
        $region14: #{tpu_custom_call.1} parent=11 // pred_check_branch
          %497 = sbr.rel (%p495) target = $region16
        $region15: #{tpu_custom_call.1} parent=11 // pred_region
          _
        $region16: #{tpu_custom_call.1} parent=11 // pred_fallthru
          _
        // Predicated region
        $region17: #{tpu_custom_call.1} parent=11 // pred_check
          %p498 = pneg %p200
        $region18: #{tpu_custom_call.1} parent=11 // pred_check_branch
          %500 = sbr.rel (%p498) target = $region20
        $region19: #{tpu_custom_call.1} parent=11 // pred_region
          _
        $region20: #{tpu_custom_call.1} parent=11 // pred_fallthru
          _
        // Predicated region
        $region21: #{tpu_custom_call.1} parent=11 // pred_check
          %p501 = pneg %p221
        $region22: #{tpu_custom_call.1} parent=11 // pred_check_branch
          %503 = sbr.rel (%p501) target = $region24
        $region23: #{tpu_custom_call.1} parent=11 // pred_region
          _
        $region24: #{tpu_custom_call.1} parent=11 // pred_fallthru
          _
        // Predicated region
        $region25: #{tpu_custom_call.1} parent=11 // pred_check
          %p504 = pneg %p242
        $region26: #{tpu_custom_call.1} parent=11 // pred_check_branch
          %506 = sbr.rel (%p504) target = $region28
        $region27: #{tpu_custom_call.1} parent=11 // pred_region
          %508 = vsyncadd [#allocation6], 0
          %s510 = sshll.u32 %s7, 4
          %s511 = int_to_ptr.hbm [resolvable:$true] %s510
          %s512 = sshll.u32 [#allocation5], 4
          %s513 = int_to_ptr.vmem [resolvable:$true] %s512
          %515 = dma.hbm_to_vmem [thread:$0]  %s511, 128, %s513, [#allocation6]
        $region28: #{tpu_custom_call.1} parent=11 // pred_fallthru
          _
        // Predicated region
        $region29: #{tpu_custom_call.1} parent=11 // pred_check
          %p516 = pneg %p263
        $region30: #{tpu_custom_call.1} parent=11 // pred_check_branch
          %518 = sbr.rel (%p516) target = $region32
        $region31: #{tpu_custom_call.1} parent=11 // pred_region
          %520 = vsyncadd [#allocation6], 0
          %s522 = sshll.u32 %s8, 4
          %s523 = int_to_ptr.hbm [resolvable:$true] %s522
          %s524 = sshll.u32 [#allocation7], 4
          %s525 = int_to_ptr.vmem [resolvable:$true] %s524
          %527 = dma.hbm_to_vmem [thread:$0]  %s523, 128, %s525, [#allocation6]
        $region32: #{tpu_custom_call.1} parent=11 // pred_fallthru
          _
        // Predicated region
        $region33: #{tpu_custom_call.1} parent=11 // pred_check
          %p528 = pneg %p284
        $region34: #{tpu_custom_call.1} parent=11 // pred_check_branch
          %530 = sbr.rel (%p528) target = $region36
        $region35: #{tpu_custom_call.1} parent=11 // pred_region
          %532 = vsyncadd [#allocation9], 0
          %s533 = sshll.u32 %s9, 4
          %s534 = int_to_ptr.hbm [resolvable:$true] %s533
          %s535 = sshll.u32 [#allocation8], 4
          %s536 = int_to_ptr.vmem [resolvable:$true] %s535
          %541 = dma.hbm_to_vmem [thread:$0]  %s534, 32768, %s536, [#allocation9], 256, 256, 16
        $region36: #{tpu_custom_call.1} parent=11 // pred_fallthru
          _
        // Predicated region
        $region37: #{tpu_custom_call.1} parent=11 // pred_check
          %p542 = pneg %p305
        $region38: #{tpu_custom_call.1} parent=11 // pred_check_branch
          %544 = sbr.rel (%p542) target = $region40
        $region39: #{tpu_custom_call.1} parent=11 // pred_region
          %546 = vsyncadd [#allocation9], 0
          %s548 = sshll.u32 %s10, 4
          %s549 = int_to_ptr.hbm [resolvable:$true] %s548
          %s550 = sshll.u32 [#allocation10], 4
          %s551 = int_to_ptr.vmem [resolvable:$true] %s550
          %553 = dma.hbm_to_vmem [thread:$0]  %s549, 128, %s551, [#allocation9]
        $region40: #{tpu_custom_call.1} parent=11 // pred_fallthru
          _
        // Predicated region
        $region41: #{tpu_custom_call.1} parent=11 // pred_check
          %p554 = pneg %p326
        $region42: #{tpu_custom_call.1} parent=11 // pred_check_branch
          %556 = sbr.rel (%p554) target = $region44
        $region43: #{tpu_custom_call.1} parent=11 // pred_region
          %558 = vsyncadd [#allocation12], 0
          %s560 = sshll.u32 %s11, 4
          %s561 = int_to_ptr.hbm [resolvable:$true] %s560
          %s562 = sshll.u32 [#allocation11], 4
          %s563 = int_to_ptr.vmem [resolvable:$true] %s562
          %565 = dma.hbm_to_vmem [thread:$0]  %s561, 128, %s563, [#allocation12]
        $region44: #{tpu_custom_call.1} parent=11 // pred_fallthru
          _
        // Predicated region
        $region45: #{tpu_custom_call.1} parent=11 // pred_check
          %p566 = pneg %p347
        $region46: #{tpu_custom_call.1} parent=11 // pred_check_branch
          %568 = sbr.rel (%p566) target = $region48
        $region47: #{tpu_custom_call.1} parent=11 // pred_region
          _
        $region48: #{tpu_custom_call.1} parent=11 // pred_fallthru
          _
        // Predicated region
        $region49: #{tpu_custom_call.1} parent=11 // pred_check
          %p569 = pneg %p368
        $region50: #{tpu_custom_call.1} parent=11 // pred_check_branch
          %571 = sbr.rel (%p569) target = $region52
        $region51: #{tpu_custom_call.1} parent=11 // pred_region
          %573 = vsyncadd [#allocation12], 0
          %s575 = sshll.u32 %s13, 4
          %s576 = int_to_ptr.hbm [resolvable:$true] %s575
          %s577 = sshll.u32 [#allocation13], 4
          %s578 = int_to_ptr.vmem [resolvable:$true] %s577
          %580 = dma.hbm_to_vmem [thread:$0]  %s576, 16, %s578, [#allocation12]
        $region52: #{tpu_custom_call.1} parent=11 // pred_fallthru
          _
        // Predicated region
        $region53: #{tpu_custom_call.1} parent=11 // pred_check
          %p581 = pneg %p389
        $region54: #{tpu_custom_call.1} parent=11 // pred_check_branch
          %583 = sbr.rel (%p581) target = $region56
        $region55: #{tpu_custom_call.1} parent=11 // pred_region
          %585 = vsyncadd [#allocation15], 0
          %s586 = sshll.u32 %s14, 4
          %s587 = int_to_ptr.hbm [resolvable:$true] %s586
          %s588 = sshll.u32 [#allocation14], 4
          %s589 = int_to_ptr.vmem [resolvable:$true] %s588
          %594 = dma.hbm_to_vmem [thread:$0]  %s587, 512, %s589, [#allocation15], 256, 256, 16
        $region56: #{tpu_custom_call.1} parent=11 // pred_fallthru
          _
        // Predicated region
        $region57: #{tpu_custom_call.1} parent=11 // pred_check
          %p595 = pneg %p410
        $region58: #{tpu_custom_call.1} parent=11 // pred_check_branch
          %597 = sbr.rel (%p595) target = $region60
        $region59: #{tpu_custom_call.1} parent=11 // pred_region
          _
        $region60: #{tpu_custom_call.1} parent=11 // pred_fallthru
          _
        // Predicated region
        $region61: #{tpu_custom_call.1} parent=11 // pred_check
          %p598 = pneg %p431
        $region62: #{tpu_custom_call.1} parent=11 // pred_check_branch
          %600 = sbr.rel (%p598) target = $region64
        $region63: #{tpu_custom_call.1} parent=11 // pred_region
          _
        $region64: #{tpu_custom_call.1} parent=11 // pred_fallthru
          _
        // Predicated region
        $region65: #{tpu_custom_call.1} parent=11 // pred_check
          %p601 = pneg %p452
        $region66: #{tpu_custom_call.1} parent=11 // pred_check_branch
          %603 = sbr.rel (%p601) target = $region68
        $region67: #{tpu_custom_call.1} parent=11 // pred_region
          _
        $region68: #{tpu_custom_call.1} parent=11 // pred_fallthru
          _
      $region12: #{tpu_custom_call.1} parent=5 // pred_fallthru
        _
      %p604 = scmp.lt.s32.totalorder %s34, 2
      // Predicated region
      $region69: #{tpu_custom_call.1} parent=5 // pred_check
        %p605 = pneg %p604
      $region70: #{tpu_custom_call.1} parent=5 // pred_check_branch
        %607 = sbr.rel (%p605) target = $region72
      $region71: #{tpu_custom_call.1} parent=5 // pred_region
        // Predicated region
        $region73: #{tpu_custom_call.1} parent=71 // pred_check
          %p608 = pneg %p68
        $region74: #{tpu_custom_call.1} parent=71 // pred_check_branch
          %610 = sbr.rel (%p608) target = $region76
        $region75: #{tpu_custom_call.1} parent=71 // pred_region
          %s611 = sand.u32 %s58, 1
          %s612 = scalar_lea.sflag [#allocation3], %s611
          %s613 = sand.u32 %s58, 1
          %s614 = smul.addr %s613, 32
          %s615 = scalar_lea.vmem [#allocation2], %s614
          %s616 = smul.u32 2, %s42
          %618 = vsyncadd %s612, 0
          %s619 = smul.addr %s616, 2
          %s620 = smul.addr %s41, 4
          %s621 = sadd.s32 %s619, %s620
          %s622 = smul.addr %s621, 8
          %s623 = scalar_lea.hbm %s0, %s622
          %s624 = sshll.u32 %s623, 4
          %s625 = int_to_ptr.hbm [resolvable:$true] %s624
          %s626 = sshll.u32 %s615, 4
          %s627 = int_to_ptr.vmem [resolvable:$true] %s626
          %632 = dma.hbm_to_vmem [thread:$0]  %s625, 512, %s627, %s612, 256, 256, 16
        $region76: #{tpu_custom_call.1} parent=71 // pred_fallthru
          _
        // Predicated region
        $region77: #{tpu_custom_call.1} parent=71 // pred_check
          %p633 = pneg %p96
        $region78: #{tpu_custom_call.1} parent=71 // pred_check_branch
          %635 = sbr.rel (%p633) target = $region80
        $region79: #{tpu_custom_call.1} parent=71 // pred_region
          %p636 = scmp.lt.s32.totalorder %s41, 1
          %s637 = scalar_select %p636, %s41, 1
          %p638 = scmp.lt.s32.totalorder %s42, 0
          %s639 = scalar_select %p638, %s42, 0
          %s640 = smul.addr %s639, 2
          %s641 = smul.addr %s637, 2
          %s642 = sadd.s32 %s640, %s641
          %s643 = smul.addr %s642, 8
          %s644 = scalar_lea.vmem %s1, %s643
        $region80: #{tpu_custom_call.1} parent=71 // pred_fallthru
          _
        // Predicated region
        $region81: #{tpu_custom_call.1} parent=71 // pred_check
          %p645 = pneg %p124
        $region82: #{tpu_custom_call.1} parent=71 // pred_check_branch
          %647 = sbr.rel (%p645) target = $region84
        $region83: #{tpu_custom_call.1} parent=71 // pred_region
          %p648 = scmp.lt.s32.totalorder %s41, 1
          %s649 = scalar_select %p648, %s41, 1
          %p650 = scmp.lt.s32.totalorder %s42, 0
          %s651 = scalar_select %p650, %s42, 0
          %s652 = smul.addr %s651, 2
          %s653 = smul.addr %s649, 2
          %s654 = sadd.s32 %s652, %s653
          %s655 = smul.addr %s654, 4
          %s656 = scalar_lea.vmem %s2, %s655
        $region84: #{tpu_custom_call.1} parent=71 // pred_fallthru
          _
        // Predicated region
        $region85: #{tpu_custom_call.1} parent=71 // pred_check
          %p657 = pneg %p152
        $region86: #{tpu_custom_call.1} parent=71 // pred_check_branch
          %659 = sbr.rel (%p657) target = $region88
        $region87: #{tpu_custom_call.1} parent=71 // pred_region
          %p660 = scmp.lt.s32.totalorder %s41, 1
          %s661 = scalar_select %p660, %s41, 1
          %p662 = scmp.lt.s32.totalorder %s42, 0
          %s663 = scalar_select %p662, %s42, 0
          %s664 = smul.addr %s663, 2
          %s665 = smul.addr %s661, 2
          %s666 = sadd.s32 %s664, %s665
          %s667 = smul.addr %s666, 2
          %s668 = scalar_lea.vmem %s3, %s667
        $region88: #{tpu_custom_call.1} parent=71 // pred_fallthru
          _
      $region72: #{tpu_custom_call.1} parent=5 // pred_fallthru
        _
      %p669 = scmp.le.s32.totalorder 1, %s34
      %p670 = scmp.lt.s32.totalorder %s34, 3
      %p671 = pnand %p669, %p670
      %p672 = pneg %p671
      // Predicated region
      $region89: #{tpu_custom_call.1} parent=5 // pred_check
        _
      $region90: #{tpu_custom_call.1} parent=5 // pred_check_branch
        %674 = sbr.rel (%p671) target = $region92
      $region91: #{tpu_custom_call.1} parent=5 // pred_region
        %s675 = ssub.s32 %s34, 1
        %s676 = sand.u32 %s61, 1
        %s677 = scalar_lea.sflag [#allocation3], %s676
        %s678 = sand.u32 %s61, 1
        %s679 = smul.addr %s678, 32
        %s680 = scalar_lea.vmem [#allocation2], %s679
        // Predicated region
        $region93: #{tpu_custom_call.1} parent=91 // pred_check
          %p681 = pneg %p74
        $region94: #{tpu_custom_call.1} parent=91 // pred_check_branch
          %683 = sbr.rel (%p681) target = $region96
        $region95: #{tpu_custom_call.1} parent=91 // pred_region
          %685 = dma.done %s677, 512
        $region96: #{tpu_custom_call.1} parent=91 // pred_fallthru
          _
        // Predicated region
        $region97: #{tpu_custom_call.1} parent=91 // pred_check
          %p686 = pneg %p242
        $region98: #{tpu_custom_call.1} parent=91 // pred_check_branch
          %688 = sbr.rel (%p686) target = $region100
        $region99: #{tpu_custom_call.1} parent=91 // pred_region
          %690 = dma.done [#allocation6], 128
        $region100: #{tpu_custom_call.1} parent=91 // pred_fallthru
          _
        // Predicated region
        $region101: #{tpu_custom_call.1} parent=91 // pred_check
          %p691 = pneg %p263
        $region102: #{tpu_custom_call.1} parent=91 // pred_check_branch
          %693 = sbr.rel (%p691) target = $region104
        $region103: #{tpu_custom_call.1} parent=91 // pred_region
          %695 = dma.done [#allocation6], 128
        $region104: #{tpu_custom_call.1} parent=91 // pred_fallthru
          _
        // Predicated region
        $region105: #{tpu_custom_call.1} parent=91 // pred_check
          %p696 = pneg %p284
        $region106: #{tpu_custom_call.1} parent=91 // pred_check_branch
          %698 = sbr.rel (%p696) target = $region108
        $region107: #{tpu_custom_call.1} parent=91 // pred_region
          %700 = dma.done [#allocation9], 32768
        $region108: #{tpu_custom_call.1} parent=91 // pred_fallthru
          _
        // Predicated region
        $region109: #{tpu_custom_call.1} parent=91 // pred_check
          %p701 = pneg %p305
        $region110: #{tpu_custom_call.1} parent=91 // pred_check_branch
          %703 = sbr.rel (%p701) target = $region112
        $region111: #{tpu_custom_call.1} parent=91 // pred_region
          %705 = dma.done [#allocation9], 128
        $region112: #{tpu_custom_call.1} parent=91 // pred_fallthru
          _
        // Predicated region
        $region113: #{tpu_custom_call.1} parent=91 // pred_check
          %p706 = pneg %p326
        $region114: #{tpu_custom_call.1} parent=91 // pred_check_branch
          %708 = sbr.rel (%p706) target = $region116
        $region115: #{tpu_custom_call.1} parent=91 // pred_region
          %710 = dma.done [#allocation12], 128
        $region116: #{tpu_custom_call.1} parent=91 // pred_fallthru
          _
        // Predicated region
        $region117: #{tpu_custom_call.1} parent=91 // pred_check
          %p711 = pneg %p368
        $region118: #{tpu_custom_call.1} parent=91 // pred_check_branch
          %713 = sbr.rel (%p711) target = $region120
        $region119: #{tpu_custom_call.1} parent=91 // pred_region
          %715 = dma.done [#allocation12], 16
        $region120: #{tpu_custom_call.1} parent=91 // pred_fallthru
          _
        // Predicated region
        $region121: #{tpu_custom_call.1} parent=91 // pred_check
          %p716 = pneg %p389
        $region122: #{tpu_custom_call.1} parent=91 // pred_check_branch
          %718 = sbr.rel (%p716) target = $region124
        $region123: #{tpu_custom_call.1} parent=91 // pred_region
          %720 = dma.done [#allocation15], 512
        $region124: #{tpu_custom_call.1} parent=91 // pred_fallthru
          _
        %s721 = sand.u32 %s61, 1
        %s722 = scalar_lea.sflag [#allocation3], %s721
        %s723 = sand.u32 %s61, 1
        %s724 = smul.addr %s723, 32
        %s725 = scalar_lea.vmem [#allocation2], %s724
        %p726 = pneg %p74
        %p727 = pneg %p71
        %p728 = scmp.lt.s32.totalorder %s43, 1
        %s729 = scalar_select %p728, %s43, 1
        %p730 = scmp.lt.s32.totalorder %s44, 0
        %s731 = scalar_select %p730, %s44, 0
        %s732 = smul.addr %s731, 2
        %s733 = smul.addr %s729, 2
        %s734 = sadd.s32 %s732, %s733
        %s735 = smul.addr %s734, 8
        %s736 = scalar_lea.vmem %s1, %s735
        %p737 = pneg %p102
        %p738 = pneg %p99
        %p739 = scmp.lt.s32.totalorder %s43, 1
        %s740 = scalar_select %p739, %s43, 1
        %p741 = scmp.lt.s32.totalorder %s44, 0
        %s742 = scalar_select %p741, %s44, 0
        %s743 = smul.addr %s742, 2
        %s744 = smul.addr %s740, 2
        %s745 = sadd.s32 %s743, %s744
        %s746 = smul.addr %s745, 4
        %s747 = scalar_lea.vmem %s2, %s746
        %p748 = pneg %p130
        %p749 = pneg %p127
        %p750 = scmp.lt.s32.totalorder %s43, 1
        %s751 = scalar_select %p750, %s43, 1
        %p752 = scmp.lt.s32.totalorder %s44, 0
        %s753 = scalar_select %p752, %s44, 0
        %s754 = smul.addr %s753, 2
        %s755 = smul.addr %s751, 2
        %s756 = sadd.s32 %s754, %s755
        %s757 = smul.addr %s756, 2
        %s758 = scalar_lea.vmem %s3, %s757
        %p759 = pneg %p158
        %p760 = pneg %p155
        %p761 = pneg %p179
        %p762 = pneg %p176
        %p763 = pneg %p200
        %p764 = pneg %p197
        %p765 = pneg %p221
        %p766 = pneg %p218
        %p767 = pneg %p242
        %p768 = pneg %p239
        %p769 = pneg %p263
        %p770 = pneg %p260
        %p771 = pneg %p284
        %p772 = pneg %p281
        %p773 = pneg %p305
        %p774 = pneg %p302
        %p775 = pneg %p326
        %p776 = pneg %p323
        %p777 = pneg %p347
        %p778 = pneg %p344
        %p779 = pneg %p368
        %p780 = pneg %p365
        %p781 = pneg %p389
        %p782 = pneg %p386
        %p783 = pneg %p410
        %p784 = pneg %p407
        %p785 = pneg %p431
        %p786 = pneg %p428
        %p787 = pneg %p452
        %p788 = pneg %p449
        %p789 = pneg %p480
        %p790 = pneg %p477
        %s791 = sand.u32 %s467, 1
        %s792 = scalar_lea.sflag [#allocation4], %s791
        %s793 = sand.u32 %s467, 1
        %s794 = smul.addr %s793, 32
        %s795 = scalar_lea.vmem [#allocation16], %s794
        %s796 = smul.u32 2, %s44
        %p797 = scmp.lt.s32.totalorder %s43, 1
        %s798 = scalar_select %p797, %s43, 1
        %p799 = scmp.lt.s32.totalorder %s44, 0
        %s800 = scalar_select %p799, %s44, 0
        %s801 = smul.addr %s800, 2
        %s802 = smul.addr %s798, 2
        %s803 = sadd.s32 %s801, %s802
        %s804 = smul.addr %s803, 8
        %s805 = scalar_lea.vmem %s1, %s804
        %p806 = scmp.lt.s32.totalorder %s43, 1
        %s807 = scalar_select %p806, %s43, 1
        %p808 = scmp.lt.s32.totalorder %s44, 0
        %s809 = scalar_select %p808, %s44, 0
        %s810 = smul.addr %s809, 2
        %s811 = smul.addr %s807, 2
        %s812 = sadd.s32 %s810, %s811
        %s813 = smul.addr %s812, 4
        %s814 = scalar_lea.vmem %s2, %s813
        %p815 = scmp.lt.s32.totalorder %s43, 1
        %s816 = scalar_select %p815, %s43, 1
        %p817 = scmp.lt.s32.totalorder %s44, 0
        %s818 = scalar_select %p817, %s44, 0
        %s819 = smul.addr %s818, 2
        %s820 = smul.addr %s816, 2
        %s821 = sadd.s32 %s819, %s820
        %s822 = smul.addr %s821, 2
        %s823 = scalar_lea.vmem %s3, %s822
        %s824 = smul.u32 2, %s44
        %v825 = vld [vmem:[%s680] sm:$0xff]
        %v826 = vld [vmem:[%s680 + $0x8] sm:$0xff]
        %v827 = vld [vmem:[%s680 + $0x10] sm:$0xff]
        %v828 = vld [vmem:[%s680 + $0x18] sm:$0xff]
        %v829 = vld [vmem:[%s805] sm:$0xff]
        %v830 = vld [vmem:[%s805 + $0x8] sm:$0xff]
        %v831 = vld [vmem:[%s814] sm:$0xff]
        %v832 = vld [vmem:[%s823] sm:$0xf]
        %v833 = vld [vmem:[%s4] sm:$0xff]
        %v834 = vld [vmem:[%s4 + $0x8] sm:$0xff]
        %v835 = vld [vmem:[%s4 + $0x10] sm:$0xff]
        %v836 = vld [vmem:[%s4 + $0x18] sm:$0xff]
        %v837 = vld [vmem:[%s4 + $0x20] sm:$0xff]
        %v838 = vld [vmem:[%s4 + $0x28] sm:$0xff]
        %v839 = vld [vmem:[%s4 + $0x30] sm:$0xff]
        %v840 = vld [vmem:[%s4 + $0x38] sm:$0xff]
        %v841 = vld [vmem:[%s4 + $0x40] sm:$0xff]
        %v842 = vld [vmem:[%s4 + $0x48] sm:$0xff]
        %v843 = vld [vmem:[%s4 + $0x50] sm:$0xff]
        %v844 = vld [vmem:[%s4 + $0x58] sm:$0xff]
        %v845 = vld [vmem:[%s4 + $0x60] sm:$0xff]
        %v846 = vld [vmem:[%s4 + $0x68] sm:$0xff]
        %v847 = vld [vmem:[%s4 + $0x70] sm:$0xff]
        %v848 = vld [vmem:[%s4 + $0x78] sm:$0xff]
        %v849 = vld [vmem:[%s4 + $0x80] sm:$0xff]
        %v850 = vld [vmem:[%s4 + $0x88] sm:$0xff]
        %v851 = vld [vmem:[%s4 + $0x90] sm:$0xff]
        %v852 = vld [vmem:[%s4 + $0x98] sm:$0xff]
        %v853 = vld [vmem:[%s4 + $0xa0] sm:$0xff]
        %v854 = vld [vmem:[%s4 + $0xa8] sm:$0xff]
        %v855 = vld [vmem:[%s4 + $0xb0] sm:$0xff]
        %v856 = vld [vmem:[%s4 + $0xb8] sm:$0xff]
        %v857 = vld [vmem:[%s4 + $0xc0] sm:$0xff]
        %v858 = vld [vmem:[%s4 + $0xc8] sm:$0xff]
        %v859 = vld [vmem:[%s4 + $0xd0] sm:$0xff]
        %v860 = vld [vmem:[%s4 + $0xd8] sm:$0xff]
        %v861 = vld [vmem:[%s4 + $0xe0] sm:$0xff]
        %v862 = vld [vmem:[%s4 + $0xe8] sm:$0xff]
        %v863 = vld [vmem:[%s4 + $0xf0] sm:$0xff]
        %v864 = vld [vmem:[%s4 + $0xf8] sm:$0xff]
        %v865 = vld [vmem:[%s4 + $0x100] sm:$0xff]
        %v866 = vld [vmem:[%s4 + $0x108] sm:$0xff]
        %v867 = vld [vmem:[%s4 + $0x110] sm:$0xff]
        %v868 = vld [vmem:[%s4 + $0x118] sm:$0xff]
        %v869 = vld [vmem:[%s4 + $0x120] sm:$0xff]
        %v870 = vld [vmem:[%s4 + $0x128] sm:$0xff]
        %v871 = vld [vmem:[%s4 + $0x130] sm:$0xff]
        %v872 = vld [vmem:[%s4 + $0x138] sm:$0xff]
        %v873 = vld [vmem:[%s4 + $0x140] sm:$0xff]
        %v874 = vld [vmem:[%s4 + $0x148] sm:$0xff]
        %v875 = vld [vmem:[%s4 + $0x150] sm:$0xff]
        %v876 = vld [vmem:[%s4 + $0x158] sm:$0xff]
        %v877 = vld [vmem:[%s4 + $0x160] sm:$0xff]
        %v878 = vld [vmem:[%s4 + $0x168] sm:$0xff]
        %v879 = vld [vmem:[%s4 + $0x170] sm:$0xff]
        %v880 = vld [vmem:[%s4 + $0x178] sm:$0xff]
        %v881 = vld [vmem:[%s4 + $0x180] sm:$0xff]
        %v882 = vld [vmem:[%s4 + $0x188] sm:$0xff]
        %v883 = vld [vmem:[%s4 + $0x190] sm:$0xff]
        %v884 = vld [vmem:[%s4 + $0x198] sm:$0xff]
        %v885 = vld [vmem:[%s4 + $0x1a0] sm:$0xff]
        %v886 = vld [vmem:[%s4 + $0x1a8] sm:$0xff]
        %v887 = vld [vmem:[%s4 + $0x1b0] sm:$0xff]
        %v888 = vld [vmem:[%s4 + $0x1b8] sm:$0xff]
        %v889 = vld [vmem:[%s4 + $0x1c0] sm:$0xff]
        %v890 = vld [vmem:[%s4 + $0x1c8] sm:$0xff]
        %v891 = vld [vmem:[%s4 + $0x1d0] sm:$0xff]
        %v892 = vld [vmem:[%s4 + $0x1d8] sm:$0xff]
        %v893 = vld [vmem:[%s4 + $0x1e0] sm:$0xff]
        %v894 = vld [vmem:[%s4 + $0x1e8] sm:$0xff]
        %v895 = vld [vmem:[%s4 + $0x1f0] sm:$0xff]
        %v896 = vld [vmem:[%s4 + $0x1f8] sm:$0xff]
        %897 = vmatpush.msra.mxu0 %v863
        %898 = vmatpush.msra.mxu0 %v861
        %899 = vmatpush.msra.mxu0 %v859
        %900 = vmatpush.msra.mxu0 %v857
        %901 = vmatpush.msra.mxu0 %v855
        %902 = vmatpush.msra.mxu0 %v853
        %903 = vmatpush.msra.mxu0 %v851
        %904 = vmatpush.msra.mxu0 %v849
        %905 = vmatpush.msra.mxu0 %v847
        %906 = vmatpush.msra.mxu0 %v845
        %907 = vmatpush.msra.mxu0 %v843
        %908 = vmatpush.msra.mxu0 %v841
        %909 = vmatpush.msra.mxu0 %v839
        %910 = vmatpush.msra.mxu0 %v837
        %911 = vmatpush.msra.mxu0 %v835
        %912 = vmatpush.msra.mxu0 %v833
        %913 = vmatmul.f32.gmra.mxu0 %v829
        %v914 = vpop.f32.mrf.mxu0
        %v915 = vadd.f32 0.0, %v914
        %916 = vdwg.mxu0
        %917 = vmatpush.msra.mxu0 %v895
        %918 = vmatpush.msra.mxu0 %v893
        %919 = vmatpush.msra.mxu0 %v891
        %920 = vmatpush.msra.mxu0 %v889
        %921 = vmatpush.msra.mxu0 %v887
        %922 = vmatpush.msra.mxu0 %v885
        %923 = vmatpush.msra.mxu0 %v883
        %924 = vmatpush.msra.mxu0 %v881
        %925 = vmatpush.msra.mxu0 %v879
        %926 = vmatpush.msra.mxu0 %v877
        %927 = vmatpush.msra.mxu0 %v875
        %928 = vmatpush.msra.mxu0 %v873
        %929 = vmatpush.msra.mxu0 %v871
        %930 = vmatpush.msra.mxu0 %v869
        %931 = vmatpush.msra.mxu0 %v867
        %932 = vmatpush.msra.mxu0 %v865
        %933 = vmatmul.f32.gmra.mxu0 %v830
        %v934 = vpop.f32.mrf.mxu0
        %v935 = vadd.f32 %v915, %v934
        %936 = vdwg.mxu0
        %937 = vmatpush.msra.mxu0 %v864
        %938 = vmatpush.msra.mxu0 %v862
        %939 = vmatpush.msra.mxu0 %v860
        %940 = vmatpush.msra.mxu0 %v858
        %941 = vmatpush.msra.mxu0 %v856
        %942 = vmatpush.msra.mxu0 %v854
        %943 = vmatpush.msra.mxu0 %v852
        %944 = vmatpush.msra.mxu0 %v850
        %945 = vmatpush.msra.mxu0 %v848
        %946 = vmatpush.msra.mxu0 %v846
        %947 = vmatpush.msra.mxu0 %v844
        %948 = vmatpush.msra.mxu0 %v842
        %949 = vmatpush.msra.mxu0 %v840
        %950 = vmatpush.msra.mxu0 %v838
        %951 = vmatpush.msra.mxu0 %v836
        %952 = vmatpush.msra.mxu0 %v834
        %953 = vmatmul.f32.gmra.mxu0 %v829
        %v954 = vpop.f32.mrf.mxu0
        %v955 = vadd.f32 0.0, %v954
        %956 = vdwg.mxu0
        %957 = vmatpush.msra.mxu0 %v896
        %958 = vmatpush.msra.mxu0 %v894
        %959 = vmatpush.msra.mxu0 %v892
        %960 = vmatpush.msra.mxu0 %v890
        %961 = vmatpush.msra.mxu0 %v888
        %962 = vmatpush.msra.mxu0 %v886
        %963 = vmatpush.msra.mxu0 %v884
        %964 = vmatpush.msra.mxu0 %v882
        %965 = vmatpush.msra.mxu0 %v880
        %966 = vmatpush.msra.mxu0 %v878
        %967 = vmatpush.msra.mxu0 %v876
        %968 = vmatpush.msra.mxu0 %v874
        %969 = vmatpush.msra.mxu0 %v872
        %970 = vmatpush.msra.mxu0 %v870
        %971 = vmatpush.msra.mxu0 %v868
        %972 = vmatpush.msra.mxu0 %v866
        %973 = vmatmul.f32.gmra.mxu0 %v830
        %v974 = vpop.f32.mrf.mxu0
        %v975 = vadd.f32 %v955, %v974
        %976 = vdwg.mxu0
        %v977 = vld [vmem:[#allocation5] ss:$4 sm:$0x3]
        %v979 = vperm.slane %v977, 0
        %v980 = vperm.slane %v977, 1
        %v983 = vmul.f32 %v935, %v979
        %v984 = vmul.f32 %v975, %v980
        %v985 = vld [vmem:[#allocation7] ss:$4 sm:$0x3]
        %v987 = vperm.slane %v985, 0
        %v988 = vperm.slane %v985, 1
        %v991 = vadd.f32 %v983, %v987
        %v992 = vadd.f32 %v984, %v988
        %vm993 = vcmp.gt.f32.partialorder %v991, 0.0
        %vm994 = vcmp.gt.f32.partialorder %v992, 0.0
        %v995 = vmul.f32 %v991, 0.1
        %v996 = vmul.f32 %v992, 0.1
        %v997 = vsel %vm993, %v991, %v995
        %v998 = vsel %vm994, %v992, %v996
        %v999 = vld [vmem:[%s15] sm:$0xff]
        %v1000 = vld [vmem:[%s15 + $0x8] sm:$0xff]
        %vm1001 = vcmask 64512
        %v1003 = vsel %vm1001, %v999, 0
        %v1006 = vsel %vm1001, %v1000, 0
        %1008 = vmatpush.msra.mxu0 0.0
        %1009 = vmatpush.msra.mxu0 0.0
        %1010 = vmatpush.msra.mxu0 0.0
        %1011 = vmatpush.msra.mxu0 0.0
        %1012 = vmatpush.msra.mxu0 0.0
        %1013 = vmatpush.msra.mxu0 0.0
        %1014 = vmatpush.msra.mxu0 0.0
        %1015 = vmatpush.msra.mxu0 0.0
        %1016 = vmatpush.msra.mxu0 0.0
        %1017 = vmatpush.msra.mxu0 0.0
        %1018 = vmatpush.msra.mxu0 0.0
        %1019 = vmatpush.msra.mxu0 0.0
        %1020 = vmatpush.msra.mxu0 0.0
        %1021 = vmatpush.msra.mxu0 0.0
        %1022 = vmatpush.msra.mxu0 0.0
        %1023 = vmatpush.msra.mxu0 %v997
        %1024 = vmatmul.f32.gmra.mxu0 %v1003
        %v1025 = vpop.f32.mrf.mxu0
        %v1026 = vadd.f32 0.0, %v1025
        %1027 = vmatmul.f32.gmra.mxu0 %v1006
        %v1028 = vpop.f32.mrf.mxu0
        %v1029 = vadd.f32 0.0, %v1028
        %1030 = vdwg.mxu0
        %1031 = vmatpush.msra.mxu0 0.0
        %1032 = vmatpush.msra.mxu0 0.0
        %1033 = vmatpush.msra.mxu0 0.0
        %1034 = vmatpush.msra.mxu0 0.0
        %1035 = vmatpush.msra.mxu0 0.0
        %1036 = vmatpush.msra.mxu0 0.0
        %1037 = vmatpush.msra.mxu0 0.0
        %1038 = vmatpush.msra.mxu0 0.0
        %1039 = vmatpush.msra.mxu0 0.0
        %1040 = vmatpush.msra.mxu0 0.0
        %1041 = vmatpush.msra.mxu0 0.0
        %1042 = vmatpush.msra.mxu0 0.0
        %1043 = vmatpush.msra.mxu0 0.0
        %1044 = vmatpush.msra.mxu0 0.0
        %1045 = vmatpush.msra.mxu0 0.0
        %1046 = vmatpush.msra.mxu0 %v998
        %1047 = vmatmul.f32.gmra.mxu0 %v1003
        %v1048 = vpop.f32.mrf.mxu0
        %v1049 = vadd.f32 0.0, %v1048
        %1050 = vmatmul.f32.gmra.mxu0 %v1006
        %v1051 = vpop.f32.mrf.mxu0
        %v1052 = vadd.f32 0.0, %v1051
        %1053 = vdwg.mxu0
        %v1054 = vld [vmem:[%s5] sm:$0xff]
        %v1055 = vld [vmem:[%s5 + $0x8] sm:$0xff]
        %v1056 = vld [vmem:[%s5 + $0x10] sm:$0xff]
        %v1057 = vld [vmem:[%s5 + $0x18] sm:$0xff]
        %v1058 = vld [vmem:[%s5 + $0x20] sm:$0xff]
        %v1059 = vld [vmem:[%s5 + $0x28] sm:$0xff]
        %v1060 = vld [vmem:[%s5 + $0x30] sm:$0xff]
        %v1061 = vld [vmem:[%s5 + $0x38] sm:$0xff]
        %v1062 = vld [vmem:[%s5 + $0x40] sm:$0xff]
        %v1063 = vld [vmem:[%s5 + $0x48] sm:$0xff]
        %v1064 = vld [vmem:[%s5 + $0x50] sm:$0xff]
        %v1065 = vld [vmem:[%s5 + $0x58] sm:$0xff]
        %v1066 = vld [vmem:[%s5 + $0x60] sm:$0xff]
        %v1067 = vld [vmem:[%s5 + $0x68] sm:$0xff]
        %v1068 = vld [vmem:[%s5 + $0x70] sm:$0xff]
        %v1069 = vld [vmem:[%s5 + $0x78] sm:$0xff]
        %v1070 = vld [vmem:[%s5 + $0x80] sm:$0xff]
        %v1071 = vld [vmem:[%s5 + $0x88] sm:$0xff]
        %v1072 = vld [vmem:[%s5 + $0x90] sm:$0xff]
        %v1073 = vld [vmem:[%s5 + $0x98] sm:$0xff]
        %v1074 = vld [vmem:[%s5 + $0xa0] sm:$0xff]
        %v1075 = vld [vmem:[%s5 + $0xa8] sm:$0xff]
        %v1076 = vld [vmem:[%s5 + $0xb0] sm:$0xff]
        %v1077 = vld [vmem:[%s5 + $0xb8] sm:$0xff]
        %v1078 = vld [vmem:[%s5 + $0xc0] sm:$0xff]
        %v1079 = vld [vmem:[%s5 + $0xc8] sm:$0xff]
        %v1080 = vld [vmem:[%s5 + $0xd0] sm:$0xff]
        %v1081 = vld [vmem:[%s5 + $0xd8] sm:$0xff]
        %v1082 = vld [vmem:[%s5 + $0xe0] sm:$0xff]
        %v1083 = vld [vmem:[%s5 + $0xe8] sm:$0xff]
        %v1084 = vld [vmem:[%s5 + $0xf0] sm:$0xff]
        %v1085 = vld [vmem:[%s5 + $0xf8] sm:$0xff]
        %v1086 = vld [vmem:[%s5 + $0x100] sm:$0xff]
        %v1087 = vld [vmem:[%s5 + $0x108] sm:$0xff]
        %v1088 = vld [vmem:[%s5 + $0x110] sm:$0xff]
        %v1089 = vld [vmem:[%s5 + $0x118] sm:$0xff]
        %v1090 = vld [vmem:[%s5 + $0x120] sm:$0xff]
        %v1091 = vld [vmem:[%s5 + $0x128] sm:$0xff]
        %v1092 = vld [vmem:[%s5 + $0x130] sm:$0xff]
        %v1093 = vld [vmem:[%s5 + $0x138] sm:$0xff]
        %v1094 = vld [vmem:[%s5 + $0x140] sm:$0xff]
        %v1095 = vld [vmem:[%s5 + $0x148] sm:$0xff]
        %v1096 = vld [vmem:[%s5 + $0x150] sm:$0xff]
        %v1097 = vld [vmem:[%s5 + $0x158] sm:$0xff]
        %v1098 = vld [vmem:[%s5 + $0x160] sm:$0xff]
        %v1099 = vld [vmem:[%s5 + $0x168] sm:$0xff]
        %v1100 = vld [vmem:[%s5 + $0x170] sm:$0xff]
        %v1101 = vld [vmem:[%s5 + $0x178] sm:$0xff]
        %v1102 = vld [vmem:[%s5 + $0x180] sm:$0xff]
        %v1103 = vld [vmem:[%s5 + $0x188] sm:$0xff]
        %v1104 = vld [vmem:[%s5 + $0x190] sm:$0xff]
        %v1105 = vld [vmem:[%s5 + $0x198] sm:$0xff]
        %v1106 = vld [vmem:[%s5 + $0x1a0] sm:$0xff]
        %v1107 = vld [vmem:[%s5 + $0x1a8] sm:$0xff]
        %v1108 = vld [vmem:[%s5 + $0x1b0] sm:$0xff]
        %v1109 = vld [vmem:[%s5 + $0x1b8] sm:$0xff]
        %v1110 = vld [vmem:[%s5 + $0x1c0] sm:$0xff]
        %v1111 = vld [vmem:[%s5 + $0x1c8] sm:$0xff]
        %v1112 = vld [vmem:[%s5 + $0x1d0] sm:$0xff]
        %v1113 = vld [vmem:[%s5 + $0x1d8] sm:$0xff]
        %v1114 = vld [vmem:[%s5 + $0x1e0] sm:$0xff]
        %v1115 = vld [vmem:[%s5 + $0x1e8] sm:$0xff]
        %v1116 = vld [vmem:[%s5 + $0x1f0] sm:$0xff]
        %v1117 = vld [vmem:[%s5 + $0x1f8] sm:$0xff]
        %1119 = vst [vmem:[#allocation1] ss:$2 sm:$0xff] %v831
        %v1120 = vld.sshfl [vmem:[#allocation1] sm:$0xff pattern:$0x75316420]
        %v1121 = vld.sshfl [vmem:[#allocation1 + $0x8] sm:$0xff pattern:$0x75316420]
        %1124 = vmatpush.msra.mxu0 %v1084
        %1125 = vmatpush.msra.mxu0 %v1082
        %1126 = vmatpush.msra.mxu0 %v1080
        %1127 = vmatpush.msra.mxu0 %v1078
        %1128 = vmatpush.msra.mxu0 %v1076
        %1129 = vmatpush.msra.mxu0 %v1074
        %1130 = vmatpush.msra.mxu0 %v1072
        %1131 = vmatpush.msra.mxu0 %v1070
        %1132 = vmatpush.msra.mxu0 %v1068
        %1133 = vmatpush.msra.mxu0 %v1066
        %1134 = vmatpush.msra.mxu0 %v1064
        %1135 = vmatpush.msra.mxu0 %v1062
        %1136 = vmatpush.msra.mxu0 %v1060
        %1137 = vmatpush.msra.mxu0 %v1058
        %1138 = vmatpush.msra.mxu0 %v1056
        %1139 = vmatpush.msra.mxu0 %v1054
        %1140 = vmatmul.f32.gmra.mxu0 %v1120
        %v1141 = vpop.f32.mrf.mxu0
        %v1142 = vadd.f32 0.0, %v1141
        %1143 = vdwg.mxu0
        %1144 = vmatpush.msra.mxu0 %v1116
        %1145 = vmatpush.msra.mxu0 %v1114
        %1146 = vmatpush.msra.mxu0 %v1112
        %1147 = vmatpush.msra.mxu0 %v1110
        %1148 = vmatpush.msra.mxu0 %v1108
        %1149 = vmatpush.msra.mxu0 %v1106
        %1150 = vmatpush.msra.mxu0 %v1104
        %1151 = vmatpush.msra.mxu0 %v1102
        %1152 = vmatpush.msra.mxu0 %v1100
        %1153 = vmatpush.msra.mxu0 %v1098
        %1154 = vmatpush.msra.mxu0 %v1096
        %1155 = vmatpush.msra.mxu0 %v1094
        %1156 = vmatpush.msra.mxu0 %v1092
        %1157 = vmatpush.msra.mxu0 %v1090
        %1158 = vmatpush.msra.mxu0 %v1088
        %1159 = vmatpush.msra.mxu0 %v1086
        %1160 = vmatmul.f32.gmra.mxu0 %v1121
        %v1161 = vpop.f32.mrf.mxu0
        %v1162 = vadd.f32 %v1142, %v1161
        %1163 = vdwg.mxu0
        %1164 = vmatpush.msra.mxu0 %v1085
        %1165 = vmatpush.msra.mxu0 %v1083
        %1166 = vmatpush.msra.mxu0 %v1081
        %1167 = vmatpush.msra.mxu0 %v1079
        %1168 = vmatpush.msra.mxu0 %v1077
        %1169 = vmatpush.msra.mxu0 %v1075
        %1170 = vmatpush.msra.mxu0 %v1073
        %1171 = vmatpush.msra.mxu0 %v1071
        %1172 = vmatpush.msra.mxu0 %v1069
        %1173 = vmatpush.msra.mxu0 %v1067
        %1174 = vmatpush.msra.mxu0 %v1065
        %1175 = vmatpush.msra.mxu0 %v1063
        %1176 = vmatpush.msra.mxu0 %v1061
        %1177 = vmatpush.msra.mxu0 %v1059
        %1178 = vmatpush.msra.mxu0 %v1057
        %1179 = vmatpush.msra.mxu0 %v1055
        %1180 = vmatmul.f32.gmra.mxu0 %v1120
        %v1181 = vpop.f32.mrf.mxu0
        %v1182 = vadd.f32 0.0, %v1181
        %1183 = vdwg.mxu0
        %1184 = vmatpush.msra.mxu0 %v1117
        %1185 = vmatpush.msra.mxu0 %v1115
        %1186 = vmatpush.msra.mxu0 %v1113
        %1187 = vmatpush.msra.mxu0 %v1111
        %1188 = vmatpush.msra.mxu0 %v1109
        %1189 = vmatpush.msra.mxu0 %v1107
        %1190 = vmatpush.msra.mxu0 %v1105
        %1191 = vmatpush.msra.mxu0 %v1103
        %1192 = vmatpush.msra.mxu0 %v1101
        %1193 = vmatpush.msra.mxu0 %v1099
        %1194 = vmatpush.msra.mxu0 %v1097
        %1195 = vmatpush.msra.mxu0 %v1095
        %1196 = vmatpush.msra.mxu0 %v1093
        %1197 = vmatpush.msra.mxu0 %v1091
        %1198 = vmatpush.msra.mxu0 %v1089
        %1199 = vmatpush.msra.mxu0 %v1087
        %1200 = vmatmul.f32.gmra.mxu0 %v1121
        %v1201 = vpop.f32.mrf.mxu0
        %v1202 = vadd.f32 %v1182, %v1201
        %1203 = vdwg.mxu0
        %s1204 = scalar_lea.vmem [#allocation5], 1
        %v1205 = vld [vmem:[%s1204] ss:$4 sm:$0x3]
        %v1207 = vperm.slane %v1205, 0
        %v1208 = vperm.slane %v1205, 1
        %v1211 = vmul.f32 %v1162, %v1207
        %v1212 = vmul.f32 %v1202, %v1208
        %s1213 = scalar_lea.vmem [#allocation7], 1
        %v1214 = vld [vmem:[%s1213] ss:$4 sm:$0x3]
        %v1216 = vperm.slane %v1214, 0
        %v1217 = vperm.slane %v1214, 1
        %v1220 = vadd.f32 %v1211, %v1216
        %v1221 = vadd.f32 %v1212, %v1217
        %vm1222 = vcmp.gt.f32.partialorder %v1220, 0.0
        %vm1223 = vcmp.gt.f32.partialorder %v1221, 0.0
        %v1224 = vmul.f32 %v1220, 0.1
        %v1225 = vmul.f32 %v1221, 0.1
        %v1226 = vsel %vm1222, %v1220, %v1224
        %v1227 = vsel %vm1223, %v1221, %v1225
        %v1228 = vld [vmem:[%s16] sm:$0xff]
        %v1229 = vld [vmem:[%s16 + $0x8] sm:$0xff]
        %vm1230 = vcmask 31744
        %v1232 = vsel %vm1230, %v1228, 0
        %v1235 = vsel %vm1230, %v1229, 0
        %vm1237 = vcmask 1043456
        %v1239 = vsel %vm1237, %v1226, 0
        %v1242 = vsel %vm1237, %v1227, 0
        %1244 = vmatpush.msra.mxu0 0.0
        %1245 = vmatpush.msra.mxu0 0.0
        %1246 = vmatpush.msra.mxu0 0.0
        %1247 = vmatpush.msra.mxu0 0.0
        %1248 = vmatpush.msra.mxu0 0.0
        %1249 = vmatpush.msra.mxu0 0.0
        %1250 = vmatpush.msra.mxu0 0.0
        %1251 = vmatpush.msra.mxu0 0.0
        %1252 = vmatpush.msra.mxu0 0.0
        %1253 = vmatpush.msra.mxu0 0.0
        %1254 = vmatpush.msra.mxu0 0.0
        %1255 = vmatpush.msra.mxu0 0.0
        %1256 = vmatpush.msra.mxu0 0.0
        %1257 = vmatpush.msra.mxu0 0.0
        %1258 = vmatpush.msra.mxu0 0.0
        %1259 = vmatpush.msra.mxu0 %v1239
        %1260 = vmatmul.f32.gmra.mxu0 %v1232
        %v1261 = vpop.f32.mrf.mxu0
        %v1262 = vadd.f32 0.0, %v1261
        %1263 = vmatmul.f32.gmra.mxu0 %v1235
        %v1264 = vpop.f32.mrf.mxu0
        %v1265 = vadd.f32 0.0, %v1264
        %1266 = vdwg.mxu0
        %1267 = vmatpush.msra.mxu0 0.0
        %1268 = vmatpush.msra.mxu0 0.0
        %1269 = vmatpush.msra.mxu0 0.0
        %1270 = vmatpush.msra.mxu0 0.0
        %1271 = vmatpush.msra.mxu0 0.0
        %1272 = vmatpush.msra.mxu0 0.0
        %1273 = vmatpush.msra.mxu0 0.0
        %1274 = vmatpush.msra.mxu0 0.0
        %1275 = vmatpush.msra.mxu0 0.0
        %1276 = vmatpush.msra.mxu0 0.0
        %1277 = vmatpush.msra.mxu0 0.0
        %1278 = vmatpush.msra.mxu0 0.0
        %1279 = vmatpush.msra.mxu0 0.0
        %1280 = vmatpush.msra.mxu0 0.0
        %1281 = vmatpush.msra.mxu0 0.0
        %1282 = vmatpush.msra.mxu0 %v1242
        %1283 = vmatmul.f32.gmra.mxu0 %v1232
        %v1284 = vpop.f32.mrf.mxu0
        %v1285 = vadd.f32 0.0, %v1284
        %1286 = vmatmul.f32.gmra.mxu0 %v1235
        %v1287 = vpop.f32.mrf.mxu0
        %v1288 = vadd.f32 0.0, %v1287
        %1289 = vdwg.mxu0
        %v1290 = vld [vmem:[%s6] sm:$0xff]
        %v1291 = vld [vmem:[%s6 + $0x8] sm:$0xff]
        %v1292 = vld [vmem:[%s6 + $0x10] sm:$0xff]
        %v1293 = vld [vmem:[%s6 + $0x18] sm:$0xff]
        %v1294 = vld [vmem:[%s6 + $0x20] sm:$0xff]
        %v1295 = vld [vmem:[%s6 + $0x28] sm:$0xff]
        %v1296 = vld [vmem:[%s6 + $0x30] sm:$0xff]
        %v1297 = vld [vmem:[%s6 + $0x38] sm:$0xff]
        %v1298 = vld [vmem:[%s6 + $0x40] sm:$0xff]
        %v1299 = vld [vmem:[%s6 + $0x48] sm:$0xff]
        %v1300 = vld [vmem:[%s6 + $0x50] sm:$0xff]
        %v1301 = vld [vmem:[%s6 + $0x58] sm:$0xff]
        %v1302 = vld [vmem:[%s6 + $0x60] sm:$0xff]
        %v1303 = vld [vmem:[%s6 + $0x68] sm:$0xff]
        %v1304 = vld [vmem:[%s6 + $0x70] sm:$0xff]
        %v1305 = vld [vmem:[%s6 + $0x78] sm:$0xff]
        %v1306 = vld [vmem:[%s6 + $0x80] sm:$0xff]
        %v1307 = vld [vmem:[%s6 + $0x88] sm:$0xff]
        %v1308 = vld [vmem:[%s6 + $0x90] sm:$0xff]
        %v1309 = vld [vmem:[%s6 + $0x98] sm:$0xff]
        %v1310 = vld [vmem:[%s6 + $0xa0] sm:$0xff]
        %v1311 = vld [vmem:[%s6 + $0xa8] sm:$0xff]
        %v1312 = vld [vmem:[%s6 + $0xb0] sm:$0xff]
        %v1313 = vld [vmem:[%s6 + $0xb8] sm:$0xff]
        %v1314 = vld [vmem:[%s6 + $0xc0] sm:$0xff]
        %v1315 = vld [vmem:[%s6 + $0xc8] sm:$0xff]
        %v1316 = vld [vmem:[%s6 + $0xd0] sm:$0xff]
        %v1317 = vld [vmem:[%s6 + $0xd8] sm:$0xff]
        %v1318 = vld [vmem:[%s6 + $0xe0] sm:$0xff]
        %v1319 = vld [vmem:[%s6 + $0xe8] sm:$0xff]
        %v1320 = vld [vmem:[%s6 + $0xf0] sm:$0xff]
        %v1321 = vld [vmem:[%s6 + $0xf8] sm:$0xff]
        %v1322 = vld [vmem:[%s6 + $0x100] sm:$0xff]
        %v1323 = vld [vmem:[%s6 + $0x108] sm:$0xff]
        %v1324 = vld [vmem:[%s6 + $0x110] sm:$0xff]
        %v1325 = vld [vmem:[%s6 + $0x118] sm:$0xff]
        %v1326 = vld [vmem:[%s6 + $0x120] sm:$0xff]
        %v1327 = vld [vmem:[%s6 + $0x128] sm:$0xff]
        %v1328 = vld [vmem:[%s6 + $0x130] sm:$0xff]
        %v1329 = vld [vmem:[%s6 + $0x138] sm:$0xff]
        %v1330 = vld [vmem:[%s6 + $0x140] sm:$0xff]
        %v1331 = vld [vmem:[%s6 + $0x148] sm:$0xff]
        %v1332 = vld [vmem:[%s6 + $0x150] sm:$0xff]
        %v1333 = vld [vmem:[%s6 + $0x158] sm:$0xff]
        %v1334 = vld [vmem:[%s6 + $0x160] sm:$0xff]
        %v1335 = vld [vmem:[%s6 + $0x168] sm:$0xff]
        %v1336 = vld [vmem:[%s6 + $0x170] sm:$0xff]
        %v1337 = vld [vmem:[%s6 + $0x178] sm:$0xff]
        %v1338 = vld [vmem:[%s6 + $0x180] sm:$0xff]
        %v1339 = vld [vmem:[%s6 + $0x188] sm:$0xff]
        %v1340 = vld [vmem:[%s6 + $0x190] sm:$0xff]
        %v1341 = vld [vmem:[%s6 + $0x198] sm:$0xff]
        %v1342 = vld [vmem:[%s6 + $0x1a0] sm:$0xff]
        %v1343 = vld [vmem:[%s6 + $0x1a8] sm:$0xff]
        %v1344 = vld [vmem:[%s6 + $0x1b0] sm:$0xff]
        %v1345 = vld [vmem:[%s6 + $0x1b8] sm:$0xff]
        %v1346 = vld [vmem:[%s6 + $0x1c0] sm:$0xff]
        %v1347 = vld [vmem:[%s6 + $0x1c8] sm:$0xff]
        %v1348 = vld [vmem:[%s6 + $0x1d0] sm:$0xff]
        %v1349 = vld [vmem:[%s6 + $0x1d8] sm:$0xff]
        %v1350 = vld [vmem:[%s6 + $0x1e0] sm:$0xff]
        %v1351 = vld [vmem:[%s6 + $0x1e8] sm:$0xff]
        %v1352 = vld [vmem:[%s6 + $0x1f0] sm:$0xff]
        %v1353 = vld [vmem:[%s6 + $0x1f8] sm:$0xff]
        %1355 = vst [vmem:[#allocation1] ss:$4 sm:$0xff] %v832
        %v1356 = vld.sshfl [vmem:[#allocation1] sm:$0xff pattern:$0x73625140]
        %v1357 = vld.sshfl [vmem:[#allocation1 + $0x8] sm:$0xff pattern:$0x73625140]
        %1360 = vmatpush.msra.mxu0 %v1320
        %1361 = vmatpush.msra.mxu0 %v1318
        %1362 = vmatpush.msra.mxu0 %v1316
        %1363 = vmatpush.msra.mxu0 %v1314
        %1364 = vmatpush.msra.mxu0 %v1312
        %1365 = vmatpush.msra.mxu0 %v1310
        %1366 = vmatpush.msra.mxu0 %v1308
        %1367 = vmatpush.msra.mxu0 %v1306
        %1368 = vmatpush.msra.mxu0 %v1304
        %1369 = vmatpush.msra.mxu0 %v1302
        %1370 = vmatpush.msra.mxu0 %v1300
        %1371 = vmatpush.msra.mxu0 %v1298
        %1372 = vmatpush.msra.mxu0 %v1296
        %1373 = vmatpush.msra.mxu0 %v1294
        %1374 = vmatpush.msra.mxu0 %v1292
        %1375 = vmatpush.msra.mxu0 %v1290
        %1376 = vmatmul.f32.gmra.mxu0 %v1356
        %v1377 = vpop.f32.mrf.mxu0
        %v1378 = vadd.f32 0.0, %v1377
        %1379 = vdwg.mxu0
        %1380 = vmatpush.msra.mxu0 %v1352
        %1381 = vmatpush.msra.mxu0 %v1350
        %1382 = vmatpush.msra.mxu0 %v1348
        %1383 = vmatpush.msra.mxu0 %v1346
        %1384 = vmatpush.msra.mxu0 %v1344
        %1385 = vmatpush.msra.mxu0 %v1342
        %1386 = vmatpush.msra.mxu0 %v1340
        %1387 = vmatpush.msra.mxu0 %v1338
        %1388 = vmatpush.msra.mxu0 %v1336
        %1389 = vmatpush.msra.mxu0 %v1334
        %1390 = vmatpush.msra.mxu0 %v1332
        %1391 = vmatpush.msra.mxu0 %v1330
        %1392 = vmatpush.msra.mxu0 %v1328
        %1393 = vmatpush.msra.mxu0 %v1326
        %1394 = vmatpush.msra.mxu0 %v1324
        %1395 = vmatpush.msra.mxu0 %v1322
        %1396 = vmatmul.f32.gmra.mxu0 %v1357
        %v1397 = vpop.f32.mrf.mxu0
        %v1398 = vadd.f32 %v1378, %v1397
        %1399 = vdwg.mxu0
        %1400 = vmatpush.msra.mxu0 %v1321
        %1401 = vmatpush.msra.mxu0 %v1319
        %1402 = vmatpush.msra.mxu0 %v1317
        %1403 = vmatpush.msra.mxu0 %v1315
        %1404 = vmatpush.msra.mxu0 %v1313
        %1405 = vmatpush.msra.mxu0 %v1311
        %1406 = vmatpush.msra.mxu0 %v1309
        %1407 = vmatpush.msra.mxu0 %v1307
        %1408 = vmatpush.msra.mxu0 %v1305
        %1409 = vmatpush.msra.mxu0 %v1303
        %1410 = vmatpush.msra.mxu0 %v1301
        %1411 = vmatpush.msra.mxu0 %v1299
        %1412 = vmatpush.msra.mxu0 %v1297
        %1413 = vmatpush.msra.mxu0 %v1295
        %1414 = vmatpush.msra.mxu0 %v1293
        %1415 = vmatpush.msra.mxu0 %v1291
        %1416 = vmatmul.f32.gmra.mxu0 %v1356
        %v1417 = vpop.f32.mrf.mxu0
        %v1418 = vadd.f32 0.0, %v1417
        %1419 = vdwg.mxu0
        %1420 = vmatpush.msra.mxu0 %v1353
        %1421 = vmatpush.msra.mxu0 %v1351
        %1422 = vmatpush.msra.mxu0 %v1349
        %1423 = vmatpush.msra.mxu0 %v1347
        %1424 = vmatpush.msra.mxu0 %v1345
        %1425 = vmatpush.msra.mxu0 %v1343
        %1426 = vmatpush.msra.mxu0 %v1341
        %1427 = vmatpush.msra.mxu0 %v1339
        %1428 = vmatpush.msra.mxu0 %v1337
        %1429 = vmatpush.msra.mxu0 %v1335
        %1430 = vmatpush.msra.mxu0 %v1333
        %1431 = vmatpush.msra.mxu0 %v1331
        %1432 = vmatpush.msra.mxu0 %v1329
        %1433 = vmatpush.msra.mxu0 %v1327
        %1434 = vmatpush.msra.mxu0 %v1325
        %1435 = vmatpush.msra.mxu0 %v1323
        %1436 = vmatmul.f32.gmra.mxu0 %v1357
        %v1437 = vpop.f32.mrf.mxu0
        %v1438 = vadd.f32 %v1418, %v1437
        %1439 = vdwg.mxu0
        %s1440 = scalar_lea.vmem [#allocation5], 2
        %v1441 = vld [vmem:[%s1440] ss:$4 sm:$0x3]
        %v1443 = vperm.slane %v1441, 0
        %v1444 = vperm.slane %v1441, 1
        %v1447 = vmul.f32 %v1398, %v1443
        %v1448 = vmul.f32 %v1438, %v1444
        %s1449 = scalar_lea.vmem [#allocation7], 2
        %v1450 = vld [vmem:[%s1449] ss:$4 sm:$0x3]
        %v1452 = vperm.slane %v1450, 0
        %v1453 = vperm.slane %v1450, 1
        %v1456 = vadd.f32 %v1447, %v1452
        %v1457 = vadd.f32 %v1448, %v1453
        %vm1458 = vcmp.gt.f32.partialorder %v1456, 0.0
        %vm1459 = vcmp.gt.f32.partialorder %v1457, 0.0
        %v1460 = vmul.f32 %v1456, 0.1
        %v1461 = vmul.f32 %v1457, 0.1
        %v1462 = vsel %vm1458, %v1456, %v1460
        %v1463 = vsel %vm1459, %v1457, %v1461
        %v1464 = vld [vmem:[%s17] sm:$0xff]
        %v1465 = vld [vmem:[%s17 + $0x8] sm:$0xff]
        %vm1466 = vcmask 15360
        %v1468 = vsel %vm1466, %v1464, 0
        %v1471 = vsel %vm1466, %v1465, 0
        %vm1473 = vcmask 1041408
        %v1475 = vsel %vm1473, %v1462, 0
        %v1478 = vsel %vm1473, %v1463, 0
        %1480 = vmatpush.msra.mxu0 0.0
        %1481 = vmatpush.msra.mxu0 0.0
        %1482 = vmatpush.msra.mxu0 0.0
        %1483 = vmatpush.msra.mxu0 0.0
        %1484 = vmatpush.msra.mxu0 0.0
        %1485 = vmatpush.msra.mxu0 0.0
        %1486 = vmatpush.msra.mxu0 0.0
        %1487 = vmatpush.msra.mxu0 0.0
        %1488 = vmatpush.msra.mxu0 0.0
        %1489 = vmatpush.msra.mxu0 0.0
        %1490 = vmatpush.msra.mxu0 0.0
        %1491 = vmatpush.msra.mxu0 0.0
        %1492 = vmatpush.msra.mxu0 0.0
        %1493 = vmatpush.msra.mxu0 0.0
        %1494 = vmatpush.msra.mxu0 0.0
        %1495 = vmatpush.msra.mxu0 %v1475
        %1496 = vmatmul.f32.gmra.mxu0 %v1468
        %v1497 = vpop.f32.mrf.mxu0
        %v1498 = vadd.f32 0.0, %v1497
        %1499 = vmatmul.f32.gmra.mxu0 %v1471
        %v1500 = vpop.f32.mrf.mxu0
        %v1501 = vadd.f32 0.0, %v1500
        %1502 = vdwg.mxu0
        %1503 = vmatpush.msra.mxu0 0.0
        %1504 = vmatpush.msra.mxu0 0.0
        %1505 = vmatpush.msra.mxu0 0.0
        %1506 = vmatpush.msra.mxu0 0.0
        %1507 = vmatpush.msra.mxu0 0.0
        %1508 = vmatpush.msra.mxu0 0.0
        %1509 = vmatpush.msra.mxu0 0.0
        %1510 = vmatpush.msra.mxu0 0.0
        %1511 = vmatpush.msra.mxu0 0.0
        %1512 = vmatpush.msra.mxu0 0.0
        %1513 = vmatpush.msra.mxu0 0.0
        %1514 = vmatpush.msra.mxu0 0.0
        %1515 = vmatpush.msra.mxu0 0.0
        %1516 = vmatpush.msra.mxu0 0.0
        %1517 = vmatpush.msra.mxu0 0.0
        %1518 = vmatpush.msra.mxu0 %v1478
        %1519 = vmatmul.f32.gmra.mxu0 %v1468
        %v1520 = vpop.f32.mrf.mxu0
        %v1521 = vadd.f32 0.0, %v1520
        %1522 = vmatmul.f32.gmra.mxu0 %v1471
        %v1523 = vpop.f32.mrf.mxu0
        %v1524 = vadd.f32 0.0, %v1523
        %1525 = vdwg.mxu0
        %v1526 = vld [vmem:[#allocation13] sm:$0x1]
        %v1527 = vld [vmem:[#allocation8] sm:$0xff]
        %v1528 = vld [vmem:[#allocation8 + $0x8] sm:$0xff]
        %v1529 = vld [vmem:[#allocation8 + $0x10] sm:$0xff]
        %v1530 = vld [vmem:[#allocation8 + $0x18] sm:$0xff]
        %v1531 = vld [vmem:[#allocation8 + $0x20] sm:$0xff]
        %v1532 = vld [vmem:[#allocation8 + $0x28] sm:$0xff]
        %v1533 = vld [vmem:[#allocation8 + $0x30] sm:$0xff]
        %v1534 = vld [vmem:[#allocation8 + $0x38] sm:$0xff]
        %v1535 = vld [vmem:[#allocation8 + $0x40] sm:$0xff]
        %v1536 = vld [vmem:[#allocation8 + $0x48] sm:$0xff]
        %v1537 = vld [vmem:[#allocation8 + $0x50] sm:$0xff]
        %v1538 = vld [vmem:[#allocation8 + $0x58] sm:$0xff]
        %v1539 = vld [vmem:[#allocation8 + $0x60] sm:$0xff]
        %v1540 = vld [vmem:[#allocation8 + $0x68] sm:$0xff]
        %v1541 = vld [vmem:[#allocation8 + $0x70] sm:$0xff]
        %v1542 = vld [vmem:[#allocation8 + $0x78] sm:$0xff]
        %v1543 = vld [vmem:[#allocation8 + $0x80] sm:$0xff]
        %v1544 = vld [vmem:[#allocation8 + $0x88] sm:$0xff]
        %v1545 = vld [vmem:[#allocation8 + $0x90] sm:$0xff]
        %v1546 = vld [vmem:[#allocation8 + $0x98] sm:$0xff]
        %v1547 = vld [vmem:[#allocation8 + $0xa0] sm:$0xff]
        %v1548 = vld [vmem:[#allocation8 + $0xa8] sm:$0xff]
        %v1549 = vld [vmem:[#allocation8 + $0xb0] sm:$0xff]
        %v1550 = vld [vmem:[#allocation8 + $0xb8] sm:$0xff]
        %v1551 = vld [vmem:[#allocation8 + $0xc0] sm:$0xff]
        %v1552 = vld [vmem:[#allocation8 + $0xc8] sm:$0xff]
        %v1553 = vld [vmem:[#allocation8 + $0xd0] sm:$0xff]
        %v1554 = vld [vmem:[#allocation8 + $0xd8] sm:$0xff]
        %v1555 = vld [vmem:[#allocation8 + $0xe0] sm:$0xff]
        %v1556 = vld [vmem:[#allocation8 + $0xe8] sm:$0xff]
        %v1557 = vld [vmem:[#allocation8 + $0xf0] sm:$0xff]
        %v1558 = vld [vmem:[#allocation8 + $0xf8] sm:$0xff]
        %v1559 = vld [vmem:[#allocation8 + $0x100] sm:$0xff]
        %v1560 = vld [vmem:[#allocation8 + $0x108] sm:$0xff]
        %v1561 = vld [vmem:[#allocation8 + $0x110] sm:$0xff]
        %v1562 = vld [vmem:[#allocation8 + $0x118] sm:$0xff]
        %v1563 = vld [vmem:[#allocation8 + $0x120] sm:$0xff]
        %v1564 = vld [vmem:[#allocation8 + $0x128] sm:$0xff]
        %v1565 = vld [vmem:[#allocation8 + $0x130] sm:$0xff]
        %v1566 = vld [vmem:[#allocation8 + $0x138] sm:$0xff]
        %v1567 = vld [vmem:[#allocation8 + $0x140] sm:$0xff]
        %v1568 = vld [vmem:[#allocation8 + $0x148] sm:$0xff]
        %v1569 = vld [vmem:[#allocation8 + $0x150] sm:$0xff]
        %v1570 = vld [vmem:[#allocation8 + $0x158] sm:$0xff]
        %v1571 = vld [vmem:[#allocation8 + $0x160] sm:$0xff]
        %v1572 = vld [vmem:[#allocation8 + $0x168] sm:$0xff]
        %v1573 = vld [vmem:[#allocation8 + $0x170] sm:$0xff]
        %v1574 = vld [vmem:[#allocation8 + $0x178] sm:$0xff]
        %v1575 = vld [vmem:[#allocation8 + $0x180] sm:$0xff]
        %v1576 = vld [vmem:[#allocation8 + $0x188] sm:$0xff]
        %v1577 = vld [vmem:[#allocation8 + $0x190] sm:$0xff]
        %v1578 = vld [vmem:[#allocation8 + $0x198] sm:$0xff]
        %v1579 = vld [vmem:[#allocation8 + $0x1a0] sm:$0xff]
        %v1580 = vld [vmem:[#allocation8 + $0x1a8] sm:$0xff]
        %v1581 = vld [vmem:[#allocation8 + $0x1b0] sm:$0xff]
        %v1582 = vld [vmem:[#allocation8 + $0x1b8] sm:$0xff]
        %v1583 = vld [vmem:[#allocation8 + $0x1c0] sm:$0xff]
        %v1584 = vld [vmem:[#allocation8 + $0x1c8] sm:$0xff]
        %v1585 = vld [vmem:[#allocation8 + $0x1d0] sm:$0xff]
        %v1586 = vld [vmem:[#allocation8 + $0x1d8] sm:$0xff]
        %v1587 = vld [vmem:[#allocation8 + $0x1e0] sm:$0xff]
        %v1588 = vld [vmem:[#allocation8 + $0x1e8] sm:$0xff]
        %v1589 = vld [vmem:[#allocation8 + $0x1f0] sm:$0xff]
        %v1590 = vld [vmem:[#allocation8 + $0x1f8] sm:$0xff]
        %1591 = vmatpush.msra.mxu0 %v1557
        %1592 = vmatpush.msra.mxu0 %v1555
        %1593 = vmatpush.msra.mxu0 %v1553
        %1594 = vmatpush.msra.mxu0 %v1551
        %1595 = vmatpush.msra.mxu0 %v1549
        %1596 = vmatpush.msra.mxu0 %v1547
        %1597 = vmatpush.msra.mxu0 %v1545
        %1598 = vmatpush.msra.mxu0 %v1543
        %1599 = vmatpush.msra.mxu0 %v1541
        %1600 = vmatpush.msra.mxu0 %v1539
        %1601 = vmatpush.msra.mxu0 %v1537
        %1602 = vmatpush.msra.mxu0 %v1535
        %1603 = vmatpush.msra.mxu0 %v1533
        %1604 = vmatpush.msra.mxu0 %v1531
        %1605 = vmatpush.msra.mxu0 %v1529
        %1606 = vmatpush.msra.mxu0 %v1527
        %1607 = vmatmul.f32.gmra.mxu0 %v825
        %v1608 = vpop.f32.mrf.mxu0
        %v1609 = vadd.f32 0.0, %v1608
        %1610 = vmatmul.f32.gmra.mxu0 %v827
        %v1611 = vpop.f32.mrf.mxu0
        %v1612 = vadd.f32 0.0, %v1611
        %1613 = vdwg.mxu0
        %1614 = vmatpush.msra.mxu0 %v1589
        %1615 = vmatpush.msra.mxu0 %v1587
        %1616 = vmatpush.msra.mxu0 %v1585
        %1617 = vmatpush.msra.mxu0 %v1583
        %1618 = vmatpush.msra.mxu0 %v1581
        %1619 = vmatpush.msra.mxu0 %v1579
        %1620 = vmatpush.msra.mxu0 %v1577
        %1621 = vmatpush.msra.mxu0 %v1575
        %1622 = vmatpush.msra.mxu0 %v1573
        %1623 = vmatpush.msra.mxu0 %v1571
        %1624 = vmatpush.msra.mxu0 %v1569
        %1625 = vmatpush.msra.mxu0 %v1567
        %1626 = vmatpush.msra.mxu0 %v1565
        %1627 = vmatpush.msra.mxu0 %v1563
        %1628 = vmatpush.msra.mxu0 %v1561
        %1629 = vmatpush.msra.mxu0 %v1559
        %1630 = vmatmul.f32.gmra.mxu0 %v826
        %v1631 = vpop.f32.mrf.mxu0
        %v1632 = vadd.f32 %v1609, %v1631
        %1633 = vmatmul.f32.gmra.mxu0 %v828
        %v1634 = vpop.f32.mrf.mxu0
        %v1635 = vadd.f32 %v1612, %v1634
        %1636 = vdwg.mxu0
        %1637 = vmatpush.msra.mxu0 %v1558
        %1638 = vmatpush.msra.mxu0 %v1556
        %1639 = vmatpush.msra.mxu0 %v1554
        %1640 = vmatpush.msra.mxu0 %v1552
        %1641 = vmatpush.msra.mxu0 %v1550
        %1642 = vmatpush.msra.mxu0 %v1548
        %1643 = vmatpush.msra.mxu0 %v1546
        %1644 = vmatpush.msra.mxu0 %v1544
        %1645 = vmatpush.msra.mxu0 %v1542
        %1646 = vmatpush.msra.mxu0 %v1540
        %1647 = vmatpush.msra.mxu0 %v1538
        %1648 = vmatpush.msra.mxu0 %v1536
        %1649 = vmatpush.msra.mxu0 %v1534
        %1650 = vmatpush.msra.mxu0 %v1532
        %1651 = vmatpush.msra.mxu0 %v1530
        %1652 = vmatpush.msra.mxu0 %v1528
        %1653 = vmatmul.f32.gmra.mxu0 %v825
        %v1654 = vpop.f32.mrf.mxu0
        %v1655 = vadd.f32 0.0, %v1654
        %1656 = vmatmul.f32.gmra.mxu0 %v827
        %v1657 = vpop.f32.mrf.mxu0
        %v1658 = vadd.f32 0.0, %v1657
        %1659 = vdwg.mxu0
        %1660 = vmatpush.msra.mxu0 %v1590
        %1661 = vmatpush.msra.mxu0 %v1588
        %1662 = vmatpush.msra.mxu0 %v1586
        %1663 = vmatpush.msra.mxu0 %v1584
        %1664 = vmatpush.msra.mxu0 %v1582
        %1665 = vmatpush.msra.mxu0 %v1580
        %1666 = vmatpush.msra.mxu0 %v1578
        %1667 = vmatpush.msra.mxu0 %v1576
        %1668 = vmatpush.msra.mxu0 %v1574
        %1669 = vmatpush.msra.mxu0 %v1572
        %1670 = vmatpush.msra.mxu0 %v1570
        %1671 = vmatpush.msra.mxu0 %v1568
        %1672 = vmatpush.msra.mxu0 %v1566
        %1673 = vmatpush.msra.mxu0 %v1564
        %1674 = vmatpush.msra.mxu0 %v1562
        %1675 = vmatpush.msra.mxu0 %v1560
        %1676 = vmatmul.f32.gmra.mxu0 %v826
        %v1677 = vpop.f32.mrf.mxu0
        %v1678 = vadd.f32 %v1655, %v1677
        %1679 = vmatmul.f32.gmra.mxu0 %v828
        %v1680 = vpop.f32.mrf.mxu0
        %v1681 = vadd.f32 %v1658, %v1680
        %1682 = vdwg.mxu0
        %v1683 = vld [vmem:[#allocation10] ss:$4 sm:$0x3]
        %v1685 = vperm.slane %v1683, 0
        %v1686 = vperm.slane %v1683, 1
        %v1689 = vmul.f32 %v1632, %v1685
        %v1690 = vmul.f32 %v1678, %v1686
        %v1691 = vmul.f32 %v1635, %v1685
        %v1692 = vmul.f32 %v1681, %v1686
        %v1693 = vld [vmem:[#allocation11] ss:$4 sm:$0x3]
        %v1695 = vperm.slane %v1693, 0
        %v1696 = vperm.slane %v1693, 1
        %v1699 = vadd.f32 %v1689, %v1695
        %v1700 = vadd.f32 %v1690, %v1696
        %v1701 = vadd.f32 %v1691, %v1695
        %v1702 = vadd.f32 %v1692, %v1696
        %vm1703 = vcmp.gt.f32.partialorder %v1699, 0.0
        %vm1704 = vcmp.gt.f32.partialorder %v1700, 0.0
        %vm1705 = vcmp.gt.f32.partialorder %v1701, 0.0
        %vm1706 = vcmp.gt.f32.partialorder %v1702, 0.0
        %v1707 = vmul.f32 %v1699, 0.1
        %v1708 = vmul.f32 %v1700, 0.1
        %v1709 = vmul.f32 %v1701, 0.1
        %v1710 = vmul.f32 %v1702, 0.1
        %v1711 = vsel %vm1703, %v1699, %v1707
        %v1712 = vsel %vm1704, %v1700, %v1708
        %v1713 = vsel %vm1705, %v1701, %v1709
        %v1714 = vsel %vm1706, %v1702, %v1710
        %v1715 = vld [vmem:[%s12] sm:$0xff]
        %v1716 = vld [vmem:[%s12 + $0x8] sm:$0xff]
        %v1717 = vld [vmem:[%s12 + $0x10] sm:$0xff]
        %v1718 = vld [vmem:[%s12 + $0x18] sm:$0xff]
        %v1719 = vld [vmem:[%s12 + $0x20] sm:$0xff]
        %v1720 = vld [vmem:[%s12 + $0x28] sm:$0xff]
        %v1721 = vld [vmem:[%s12 + $0x30] sm:$0xff]
        %v1722 = vld [vmem:[%s12 + $0x38] sm:$0xff]
        %v1723 = vld [vmem:[%s12 + $0x40] sm:$0xff]
        %v1724 = vld [vmem:[%s12 + $0x48] sm:$0xff]
        %v1725 = vld [vmem:[%s12 + $0x50] sm:$0xff]
        %v1726 = vld [vmem:[%s12 + $0x58] sm:$0xff]
        %v1727 = vld [vmem:[%s12 + $0x60] sm:$0xff]
        %v1728 = vld [vmem:[%s12 + $0x68] sm:$0xff]
        %v1729 = vld [vmem:[%s12 + $0x70] sm:$0xff]
        %v1730 = vld [vmem:[%s12 + $0x78] sm:$0xff]
        %v1731 = vld [vmem:[%s12 + $0x80] sm:$0xff]
        %v1732 = vld [vmem:[%s12 + $0x88] sm:$0xff]
        %v1733 = vld [vmem:[%s12 + $0x90] sm:$0xff]
        %v1734 = vld [vmem:[%s12 + $0x98] sm:$0xff]
        %v1735 = vld [vmem:[%s12 + $0xa0] sm:$0xff]
        %v1736 = vld [vmem:[%s12 + $0xa8] sm:$0xff]
        %v1737 = vld [vmem:[%s12 + $0xb0] sm:$0xff]
        %v1738 = vld [vmem:[%s12 + $0xb8] sm:$0xff]
        %v1739 = vld [vmem:[%s12 + $0xc0] sm:$0xff]
        %v1740 = vld [vmem:[%s12 + $0xc8] sm:$0xff]
        %v1741 = vld [vmem:[%s12 + $0xd0] sm:$0xff]
        %v1742 = vld [vmem:[%s12 + $0xd8] sm:$0xff]
        %v1743 = vld [vmem:[%s12 + $0xe0] sm:$0xff]
        %v1744 = vld [vmem:[%s12 + $0xe8] sm:$0xff]
        %v1745 = vld [vmem:[%s12 + $0xf0] sm:$0xff]
        %v1746 = vld [vmem:[%s12 + $0xf8] sm:$0xff]
        %1747 = vmatpush.msra.mxu0 %v1730
        %1748 = vmatpush.msra.mxu0 %v1729
        %1749 = vmatpush.msra.mxu0 %v1728
        %1750 = vmatpush.msra.mxu0 %v1727
        %1751 = vmatpush.msra.mxu0 %v1726
        %1752 = vmatpush.msra.mxu0 %v1725
        %1753 = vmatpush.msra.mxu0 %v1724
        %1754 = vmatpush.msra.mxu0 %v1723
        %1755 = vmatpush.msra.mxu0 %v1722
        %1756 = vmatpush.msra.mxu0 %v1721
        %1757 = vmatpush.msra.mxu0 %v1720
        %1758 = vmatpush.msra.mxu0 %v1719
        %1759 = vmatpush.msra.mxu0 %v1718
        %1760 = vmatpush.msra.mxu0 %v1717
        %1761 = vmatpush.msra.mxu0 %v1716
        %1762 = vmatpush.msra.mxu0 %v1715
        %1763 = vmatmul.f32.gmra.mxu0 %v1711
        %v1764 = vpop.f32.mrf.mxu0
        %v1765 = vadd.f32 0.0, %v1764
        %1766 = vmatmul.f32.gmra.mxu0 %v1713
        %v1767 = vpop.f32.mrf.mxu0
        %v1768 = vadd.f32 0.0, %v1767
        %1769 = vdwg.mxu0
        %1770 = vmatpush.msra.mxu0 %v1746
        %1771 = vmatpush.msra.mxu0 %v1745
        %1772 = vmatpush.msra.mxu0 %v1744
        %1773 = vmatpush.msra.mxu0 %v1743
        %1774 = vmatpush.msra.mxu0 %v1742
        %1775 = vmatpush.msra.mxu0 %v1741
        %1776 = vmatpush.msra.mxu0 %v1740
        %1777 = vmatpush.msra.mxu0 %v1739
        %1778 = vmatpush.msra.mxu0 %v1738
        %1779 = vmatpush.msra.mxu0 %v1737
        %1780 = vmatpush.msra.mxu0 %v1736
        %1781 = vmatpush.msra.mxu0 %v1735
        %1782 = vmatpush.msra.mxu0 %v1734
        %1783 = vmatpush.msra.mxu0 %v1733
        %1784 = vmatpush.msra.mxu0 %v1732
        %1785 = vmatpush.msra.mxu0 %v1731
        %1786 = vmatmul.f32.gmra.mxu0 %v1712
        %v1787 = vpop.f32.mrf.mxu0
        %v1788 = vadd.f32 %v1765, %v1787
        %1789 = vmatmul.f32.gmra.mxu0 %v1714
        %v1790 = vpop.f32.mrf.mxu0
        %v1791 = vadd.f32 %v1768, %v1790
        %1792 = vdwg.mxu0
        %v1794 = vperm.slane %v1526, 0
        %v1796 = vadd.f32 %v1794, %v1788
        %v1797 = vadd.f32 %v1794, %v1791
        %s1798 = scalar_lea.vmem [#allocation8], 512
        %v1799 = vld [vmem:[%s1798] sm:$0xff]
        %v1800 = vld [vmem:[%s1798 + $0x8] sm:$0xff]
        %v1801 = vld [vmem:[%s1798 + $0x10] sm:$0xff]
        %v1802 = vld [vmem:[%s1798 + $0x18] sm:$0xff]
        %v1803 = vld [vmem:[%s1798 + $0x20] sm:$0xff]
        %v1804 = vld [vmem:[%s1798 + $0x28] sm:$0xff]
        %v1805 = vld [vmem:[%s1798 + $0x30] sm:$0xff]
        %v1806 = vld [vmem:[%s1798 + $0x38] sm:$0xff]
        %v1807 = vld [vmem:[%s1798 + $0x40] sm:$0xff]
        %v1808 = vld [vmem:[%s1798 + $0x48] sm:$0xff]
        %v1809 = vld [vmem:[%s1798 + $0x50] sm:$0xff]
        %v1810 = vld [vmem:[%s1798 + $0x58] sm:$0xff]
        %v1811 = vld [vmem:[%s1798 + $0x60] sm:$0xff]
        %v1812 = vld [vmem:[%s1798 + $0x68] sm:$0xff]
        %v1813 = vld [vmem:[%s1798 + $0x70] sm:$0xff]
        %v1814 = vld [vmem:[%s1798 + $0x78] sm:$0xff]
        %v1815 = vld [vmem:[%s1798 + $0x80] sm:$0xff]
        %v1816 = vld [vmem:[%s1798 + $0x88] sm:$0xff]
        %v1817 = vld [vmem:[%s1798 + $0x90] sm:$0xff]
        %v1818 = vld [vmem:[%s1798 + $0x98] sm:$0xff]
        %v1819 = vld [vmem:[%s1798 + $0xa0] sm:$0xff]
        %v1820 = vld [vmem:[%s1798 + $0xa8] sm:$0xff]
        %v1821 = vld [vmem:[%s1798 + $0xb0] sm:$0xff]
        %v1822 = vld [vmem:[%s1798 + $0xb8] sm:$0xff]
        %v1823 = vld [vmem:[%s1798 + $0xc0] sm:$0xff]
        %v1824 = vld [vmem:[%s1798 + $0xc8] sm:$0xff]
        %v1825 = vld [vmem:[%s1798 + $0xd0] sm:$0xff]
        %v1826 = vld [vmem:[%s1798 + $0xd8] sm:$0xff]
        %v1827 = vld [vmem:[%s1798 + $0xe0] sm:$0xff]
        %v1828 = vld [vmem:[%s1798 + $0xe8] sm:$0xff]
        %v1829 = vld [vmem:[%s1798 + $0xf0] sm:$0xff]
        %v1830 = vld [vmem:[%s1798 + $0xf8] sm:$0xff]
        %v1831 = vld [vmem:[%s1798 + $0x100] sm:$0xff]
        %v1832 = vld [vmem:[%s1798 + $0x108] sm:$0xff]
        %v1833 = vld [vmem:[%s1798 + $0x110] sm:$0xff]
        %v1834 = vld [vmem:[%s1798 + $0x118] sm:$0xff]
        %v1835 = vld [vmem:[%s1798 + $0x120] sm:$0xff]
        %v1836 = vld [vmem:[%s1798 + $0x128] sm:$0xff]
        %v1837 = vld [vmem:[%s1798 + $0x130] sm:$0xff]
        %v1838 = vld [vmem:[%s1798 + $0x138] sm:$0xff]
        %v1839 = vld [vmem:[%s1798 + $0x140] sm:$0xff]
        %v1840 = vld [vmem:[%s1798 + $0x148] sm:$0xff]
        %v1841 = vld [vmem:[%s1798 + $0x150] sm:$0xff]
        %v1842 = vld [vmem:[%s1798 + $0x158] sm:$0xff]
        %v1843 = vld [vmem:[%s1798 + $0x160] sm:$0xff]
        %v1844 = vld [vmem:[%s1798 + $0x168] sm:$0xff]
        %v1845 = vld [vmem:[%s1798 + $0x170] sm:$0xff]
        %v1846 = vld [vmem:[%s1798 + $0x178] sm:$0xff]
        %v1847 = vld [vmem:[%s1798 + $0x180] sm:$0xff]
        %v1848 = vld [vmem:[%s1798 + $0x188] sm:$0xff]
        %v1849 = vld [vmem:[%s1798 + $0x190] sm:$0xff]
        %v1850 = vld [vmem:[%s1798 + $0x198] sm:$0xff]
        %v1851 = vld [vmem:[%s1798 + $0x1a0] sm:$0xff]
        %v1852 = vld [vmem:[%s1798 + $0x1a8] sm:$0xff]
        %v1853 = vld [vmem:[%s1798 + $0x1b0] sm:$0xff]
        %v1854 = vld [vmem:[%s1798 + $0x1b8] sm:$0xff]
        %v1855 = vld [vmem:[%s1798 + $0x1c0] sm:$0xff]
        %v1856 = vld [vmem:[%s1798 + $0x1c8] sm:$0xff]
        %v1857 = vld [vmem:[%s1798 + $0x1d0] sm:$0xff]
        %v1858 = vld [vmem:[%s1798 + $0x1d8] sm:$0xff]
        %v1859 = vld [vmem:[%s1798 + $0x1e0] sm:$0xff]
        %v1860 = vld [vmem:[%s1798 + $0x1e8] sm:$0xff]
        %v1861 = vld [vmem:[%s1798 + $0x1f0] sm:$0xff]
        %v1862 = vld [vmem:[%s1798 + $0x1f8] sm:$0xff]
        %1863 = vmatpush.msra.mxu0 %v1829
        %1864 = vmatpush.msra.mxu0 %v1827
        %1865 = vmatpush.msra.mxu0 %v1825
        %1866 = vmatpush.msra.mxu0 %v1823
        %1867 = vmatpush.msra.mxu0 %v1821
        %1868 = vmatpush.msra.mxu0 %v1819
        %1869 = vmatpush.msra.mxu0 %v1817
        %1870 = vmatpush.msra.mxu0 %v1815
        %1871 = vmatpush.msra.mxu0 %v1813
        %1872 = vmatpush.msra.mxu0 %v1811
        %1873 = vmatpush.msra.mxu0 %v1809
        %1874 = vmatpush.msra.mxu0 %v1807
        %1875 = vmatpush.msra.mxu0 %v1805
        %1876 = vmatpush.msra.mxu0 %v1803
        %1877 = vmatpush.msra.mxu0 %v1801
        %1878 = vmatpush.msra.mxu0 %v1799
        %1879 = vmatmul.f32.gmra.mxu0 %v1026
        %v1880 = vpop.f32.mrf.mxu0
        %v1881 = vadd.f32 0.0, %v1880
        %1882 = vmatmul.f32.gmra.mxu0 %v1029
        %v1883 = vpop.f32.mrf.mxu0
        %v1884 = vadd.f32 0.0, %v1883
        %1885 = vdwg.mxu0
        %1886 = vmatpush.msra.mxu0 %v1861
        %1887 = vmatpush.msra.mxu0 %v1859
        %1888 = vmatpush.msra.mxu0 %v1857
        %1889 = vmatpush.msra.mxu0 %v1855
        %1890 = vmatpush.msra.mxu0 %v1853
        %1891 = vmatpush.msra.mxu0 %v1851
        %1892 = vmatpush.msra.mxu0 %v1849
        %1893 = vmatpush.msra.mxu0 %v1847
        %1894 = vmatpush.msra.mxu0 %v1845
        %1895 = vmatpush.msra.mxu0 %v1843
        %1896 = vmatpush.msra.mxu0 %v1841
        %1897 = vmatpush.msra.mxu0 %v1839
        %1898 = vmatpush.msra.mxu0 %v1837
        %1899 = vmatpush.msra.mxu0 %v1835
        %1900 = vmatpush.msra.mxu0 %v1833
        %1901 = vmatpush.msra.mxu0 %v1831
        %1902 = vmatmul.f32.gmra.mxu0 %v1049
        %v1903 = vpop.f32.mrf.mxu0
        %v1904 = vadd.f32 %v1881, %v1903
        %1905 = vmatmul.f32.gmra.mxu0 %v1052
        %v1906 = vpop.f32.mrf.mxu0
        %v1907 = vadd.f32 %v1884, %v1906
        %1908 = vdwg.mxu0
        %1909 = vmatpush.msra.mxu0 %v1830
        %1910 = vmatpush.msra.mxu0 %v1828
        %1911 = vmatpush.msra.mxu0 %v1826
        %1912 = vmatpush.msra.mxu0 %v1824
        %1913 = vmatpush.msra.mxu0 %v1822
        %1914 = vmatpush.msra.mxu0 %v1820
        %1915 = vmatpush.msra.mxu0 %v1818
        %1916 = vmatpush.msra.mxu0 %v1816
        %1917 = vmatpush.msra.mxu0 %v1814
        %1918 = vmatpush.msra.mxu0 %v1812
        %1919 = vmatpush.msra.mxu0 %v1810
        %1920 = vmatpush.msra.mxu0 %v1808
        %1921 = vmatpush.msra.mxu0 %v1806
        %1922 = vmatpush.msra.mxu0 %v1804
        %1923 = vmatpush.msra.mxu0 %v1802
        %1924 = vmatpush.msra.mxu0 %v1800
        %1925 = vmatmul.f32.gmra.mxu0 %v1026
        %v1926 = vpop.f32.mrf.mxu0
        %v1927 = vadd.f32 0.0, %v1926
        %1928 = vmatmul.f32.gmra.mxu0 %v1029
        %v1929 = vpop.f32.mrf.mxu0
        %v1930 = vadd.f32 0.0, %v1929
        %1931 = vdwg.mxu0
        %1932 = vmatpush.msra.mxu0 %v1862
        %1933 = vmatpush.msra.mxu0 %v1860
        %1934 = vmatpush.msra.mxu0 %v1858
        %1935 = vmatpush.msra.mxu0 %v1856
        %1936 = vmatpush.msra.mxu0 %v1854
        %1937 = vmatpush.msra.mxu0 %v1852
        %1938 = vmatpush.msra.mxu0 %v1850
        %1939 = vmatpush.msra.mxu0 %v1848
        %1940 = vmatpush.msra.mxu0 %v1846
        %1941 = vmatpush.msra.mxu0 %v1844
        %1942 = vmatpush.msra.mxu0 %v1842
        %1943 = vmatpush.msra.mxu0 %v1840
        %1944 = vmatpush.msra.mxu0 %v1838
        %1945 = vmatpush.msra.mxu0 %v1836
        %1946 = vmatpush.msra.mxu0 %v1834
        %1947 = vmatpush.msra.mxu0 %v1832
        %1948 = vmatmul.f32.gmra.mxu0 %v1049
        %v1949 = vpop.f32.mrf.mxu0
        %v1950 = vadd.f32 %v1927, %v1949
        %1951 = vmatmul.f32.gmra.mxu0 %v1052
        %v1952 = vpop.f32.mrf.mxu0
        %v1953 = vadd.f32 %v1930, %v1952
        %1954 = vdwg.mxu0
        %s1955 = scalar_lea.vmem [#allocation10], 1
        %v1956 = vld [vmem:[%s1955] ss:$4 sm:$0x3]
        %v1958 = vperm.slane %v1956, 0
        %v1959 = vperm.slane %v1956, 1
        %v1962 = vmul.f32 %v1904, %v1958
        %v1963 = vmul.f32 %v1950, %v1959
        %v1964 = vmul.f32 %v1907, %v1958
        %v1965 = vmul.f32 %v1953, %v1959
        %s1966 = scalar_lea.vmem [#allocation11], 1
        %v1967 = vld [vmem:[%s1966] ss:$4 sm:$0x3]
        %v1969 = vperm.slane %v1967, 0
        %v1970 = vperm.slane %v1967, 1
        %v1973 = vadd.f32 %v1962, %v1969
        %v1974 = vadd.f32 %v1963, %v1970
        %v1975 = vadd.f32 %v1964, %v1969
        %v1976 = vadd.f32 %v1965, %v1970
        %vm1977 = vcmp.gt.f32.partialorder %v1973, 0.0
        %vm1978 = vcmp.gt.f32.partialorder %v1974, 0.0
        %vm1979 = vcmp.gt.f32.partialorder %v1975, 0.0
        %vm1980 = vcmp.gt.f32.partialorder %v1976, 0.0
        %v1981 = vmul.f32 %v1973, 0.1
        %v1982 = vmul.f32 %v1974, 0.1
        %v1983 = vmul.f32 %v1975, 0.1
        %v1984 = vmul.f32 %v1976, 0.1
        %v1985 = vsel %vm1977, %v1973, %v1981
        %v1986 = vsel %vm1978, %v1974, %v1982
        %v1987 = vsel %vm1979, %v1975, %v1983
        %v1988 = vsel %vm1980, %v1976, %v1984
        %s1989 = scalar_lea.vmem %s12, 256
        %v1990 = vld [vmem:[%s1989] sm:$0xff]
        %v1991 = vld [vmem:[%s1989 + $0x8] sm:$0xff]
        %v1992 = vld [vmem:[%s1989 + $0x10] sm:$0xff]
        %v1993 = vld [vmem:[%s1989 + $0x18] sm:$0xff]
        %v1994 = vld [vmem:[%s1989 + $0x20] sm:$0xff]
        %v1995 = vld [vmem:[%s1989 + $0x28] sm:$0xff]
        %v1996 = vld [vmem:[%s1989 + $0x30] sm:$0xff]
        %v1997 = vld [vmem:[%s1989 + $0x38] sm:$0xff]
        %v1998 = vld [vmem:[%s1989 + $0x40] sm:$0xff]
        %v1999 = vld [vmem:[%s1989 + $0x48] sm:$0xff]
        %v2000 = vld [vmem:[%s1989 + $0x50] sm:$0xff]
        %v2001 = vld [vmem:[%s1989 + $0x58] sm:$0xff]
        %v2002 = vld [vmem:[%s1989 + $0x60] sm:$0xff]
        %v2003 = vld [vmem:[%s1989 + $0x68] sm:$0xff]
        %v2004 = vld [vmem:[%s1989 + $0x70] sm:$0xff]
        %v2005 = vld [vmem:[%s1989 + $0x78] sm:$0xff]
        %v2006 = vld [vmem:[%s1989 + $0x80] sm:$0xff]
        %v2007 = vld [vmem:[%s1989 + $0x88] sm:$0xff]
        %v2008 = vld [vmem:[%s1989 + $0x90] sm:$0xff]
        %v2009 = vld [vmem:[%s1989 + $0x98] sm:$0xff]
        %v2010 = vld [vmem:[%s1989 + $0xa0] sm:$0xff]
        %v2011 = vld [vmem:[%s1989 + $0xa8] sm:$0xff]
        %v2012 = vld [vmem:[%s1989 + $0xb0] sm:$0xff]
        %v2013 = vld [vmem:[%s1989 + $0xb8] sm:$0xff]
        %v2014 = vld [vmem:[%s1989 + $0xc0] sm:$0xff]
        %v2015 = vld [vmem:[%s1989 + $0xc8] sm:$0xff]
        %v2016 = vld [vmem:[%s1989 + $0xd0] sm:$0xff]
        %v2017 = vld [vmem:[%s1989 + $0xd8] sm:$0xff]
        %v2018 = vld [vmem:[%s1989 + $0xe0] sm:$0xff]
        %v2019 = vld [vmem:[%s1989 + $0xe8] sm:$0xff]
        %v2020 = vld [vmem:[%s1989 + $0xf0] sm:$0xff]
        %v2021 = vld [vmem:[%s1989 + $0xf8] sm:$0xff]
        %2022 = vmatpush.msra.mxu0 %v2005
        %2023 = vmatpush.msra.mxu0 %v2004
        %2024 = vmatpush.msra.mxu0 %v2003
        %2025 = vmatpush.msra.mxu0 %v2002
        %2026 = vmatpush.msra.mxu0 %v2001
        %2027 = vmatpush.msra.mxu0 %v2000
        %2028 = vmatpush.msra.mxu0 %v1999
        %2029 = vmatpush.msra.mxu0 %v1998
        %2030 = vmatpush.msra.mxu0 %v1997
        %2031 = vmatpush.msra.mxu0 %v1996
        %2032 = vmatpush.msra.mxu0 %v1995
        %2033 = vmatpush.msra.mxu0 %v1994
        %2034 = vmatpush.msra.mxu0 %v1993
        %2035 = vmatpush.msra.mxu0 %v1992
        %2036 = vmatpush.msra.mxu0 %v1991
        %2037 = vmatpush.msra.mxu0 %v1990
        %2038 = vmatmul.f32.gmra.mxu0 %v1985
        %v2039 = vpop.f32.mrf.mxu0
        %v2040 = vadd.f32 0.0, %v2039
        %2041 = vmatmul.f32.gmra.mxu0 %v1987
        %v2042 = vpop.f32.mrf.mxu0
        %v2043 = vadd.f32 0.0, %v2042
        %2044 = vdwg.mxu0
        %2045 = vmatpush.msra.mxu0 %v2021
        %2046 = vmatpush.msra.mxu0 %v2020
        %2047 = vmatpush.msra.mxu0 %v2019
        %2048 = vmatpush.msra.mxu0 %v2018
        %2049 = vmatpush.msra.mxu0 %v2017
        %2050 = vmatpush.msra.mxu0 %v2016
        %2051 = vmatpush.msra.mxu0 %v2015
        %2052 = vmatpush.msra.mxu0 %v2014
        %2053 = vmatpush.msra.mxu0 %v2013
        %2054 = vmatpush.msra.mxu0 %v2012
        %2055 = vmatpush.msra.mxu0 %v2011
        %2056 = vmatpush.msra.mxu0 %v2010
        %2057 = vmatpush.msra.mxu0 %v2009
        %2058 = vmatpush.msra.mxu0 %v2008
        %2059 = vmatpush.msra.mxu0 %v2007
        %2060 = vmatpush.msra.mxu0 %v2006
        %2061 = vmatmul.f32.gmra.mxu0 %v1986
        %v2062 = vpop.f32.mrf.mxu0
        %v2063 = vadd.f32 %v2040, %v2062
        %2064 = vmatmul.f32.gmra.mxu0 %v1988
        %v2065 = vpop.f32.mrf.mxu0
        %v2066 = vadd.f32 %v2043, %v2065
        %2067 = vdwg.mxu0
        %v2068 = vadd.f32 %v1796, %v2063
        %v2069 = vadd.f32 %v1797, %v2066
        %s2070 = scalar_lea.vmem [#allocation8], 1024
        %v2071 = vld [vmem:[%s2070] sm:$0xff]
        %v2072 = vld [vmem:[%s2070 + $0x8] sm:$0xff]
        %v2073 = vld [vmem:[%s2070 + $0x10] sm:$0xff]
        %v2074 = vld [vmem:[%s2070 + $0x18] sm:$0xff]
        %v2075 = vld [vmem:[%s2070 + $0x20] sm:$0xff]
        %v2076 = vld [vmem:[%s2070 + $0x28] sm:$0xff]
        %v2077 = vld [vmem:[%s2070 + $0x30] sm:$0xff]
        %v2078 = vld [vmem:[%s2070 + $0x38] sm:$0xff]
        %v2079 = vld [vmem:[%s2070 + $0x40] sm:$0xff]
        %v2080 = vld [vmem:[%s2070 + $0x48] sm:$0xff]
        %v2081 = vld [vmem:[%s2070 + $0x50] sm:$0xff]
        %v2082 = vld [vmem:[%s2070 + $0x58] sm:$0xff]
        %v2083 = vld [vmem:[%s2070 + $0x60] sm:$0xff]
        %v2084 = vld [vmem:[%s2070 + $0x68] sm:$0xff]
        %v2085 = vld [vmem:[%s2070 + $0x70] sm:$0xff]
        %v2086 = vld [vmem:[%s2070 + $0x78] sm:$0xff]
        %v2087 = vld [vmem:[%s2070 + $0x80] sm:$0xff]
        %v2088 = vld [vmem:[%s2070 + $0x88] sm:$0xff]
        %v2089 = vld [vmem:[%s2070 + $0x90] sm:$0xff]
        %v2090 = vld [vmem:[%s2070 + $0x98] sm:$0xff]
        %v2091 = vld [vmem:[%s2070 + $0xa0] sm:$0xff]
        %v2092 = vld [vmem:[%s2070 + $0xa8] sm:$0xff]
        %v2093 = vld [vmem:[%s2070 + $0xb0] sm:$0xff]
        %v2094 = vld [vmem:[%s2070 + $0xb8] sm:$0xff]
        %v2095 = vld [vmem:[%s2070 + $0xc0] sm:$0xff]
        %v2096 = vld [vmem:[%s2070 + $0xc8] sm:$0xff]
        %v2097 = vld [vmem:[%s2070 + $0xd0] sm:$0xff]
        %v2098 = vld [vmem:[%s2070 + $0xd8] sm:$0xff]
        %v2099 = vld [vmem:[%s2070 + $0xe0] sm:$0xff]
        %v2100 = vld [vmem:[%s2070 + $0xe8] sm:$0xff]
        %v2101 = vld [vmem:[%s2070 + $0xf0] sm:$0xff]
        %v2102 = vld [vmem:[%s2070 + $0xf8] sm:$0xff]
        %v2103 = vld [vmem:[%s2070 + $0x100] sm:$0xff]
        %v2104 = vld [vmem:[%s2070 + $0x108] sm:$0xff]
        %v2105 = vld [vmem:[%s2070 + $0x110] sm:$0xff]
        %v2106 = vld [vmem:[%s2070 + $0x118] sm:$0xff]
        %v2107 = vld [vmem:[%s2070 + $0x120] sm:$0xff]
        %v2108 = vld [vmem:[%s2070 + $0x128] sm:$0xff]
        %v2109 = vld [vmem:[%s2070 + $0x130] sm:$0xff]
        %v2110 = vld [vmem:[%s2070 + $0x138] sm:$0xff]
        %v2111 = vld [vmem:[%s2070 + $0x140] sm:$0xff]
        %v2112 = vld [vmem:[%s2070 + $0x148] sm:$0xff]
        %v2113 = vld [vmem:[%s2070 + $0x150] sm:$0xff]
        %v2114 = vld [vmem:[%s2070 + $0x158] sm:$0xff]
        %v2115 = vld [vmem:[%s2070 + $0x160] sm:$0xff]
        %v2116 = vld [vmem:[%s2070 + $0x168] sm:$0xff]
        %v2117 = vld [vmem:[%s2070 + $0x170] sm:$0xff]
        %v2118 = vld [vmem:[%s2070 + $0x178] sm:$0xff]
        %v2119 = vld [vmem:[%s2070 + $0x180] sm:$0xff]
        %v2120 = vld [vmem:[%s2070 + $0x188] sm:$0xff]
        %v2121 = vld [vmem:[%s2070 + $0x190] sm:$0xff]
        %v2122 = vld [vmem:[%s2070 + $0x198] sm:$0xff]
        %v2123 = vld [vmem:[%s2070 + $0x1a0] sm:$0xff]
        %v2124 = vld [vmem:[%s2070 + $0x1a8] sm:$0xff]
        %v2125 = vld [vmem:[%s2070 + $0x1b0] sm:$0xff]
        %v2126 = vld [vmem:[%s2070 + $0x1b8] sm:$0xff]
        %v2127 = vld [vmem:[%s2070 + $0x1c0] sm:$0xff]
        %v2128 = vld [vmem:[%s2070 + $0x1c8] sm:$0xff]
        %v2129 = vld [vmem:[%s2070 + $0x1d0] sm:$0xff]
        %v2130 = vld [vmem:[%s2070 + $0x1d8] sm:$0xff]
        %v2131 = vld [vmem:[%s2070 + $0x1e0] sm:$0xff]
        %v2132 = vld [vmem:[%s2070 + $0x1e8] sm:$0xff]
        %v2133 = vld [vmem:[%s2070 + $0x1f0] sm:$0xff]
        %v2134 = vld [vmem:[%s2070 + $0x1f8] sm:$0xff]
        %2135 = vmatpush.msra.mxu0 %v2101
        %2136 = vmatpush.msra.mxu0 %v2099
        %2137 = vmatpush.msra.mxu0 %v2097
        %2138 = vmatpush.msra.mxu0 %v2095
        %2139 = vmatpush.msra.mxu0 %v2093
        %2140 = vmatpush.msra.mxu0 %v2091
        %2141 = vmatpush.msra.mxu0 %v2089
        %2142 = vmatpush.msra.mxu0 %v2087
        %2143 = vmatpush.msra.mxu0 %v2085
        %2144 = vmatpush.msra.mxu0 %v2083
        %2145 = vmatpush.msra.mxu0 %v2081
        %2146 = vmatpush.msra.mxu0 %v2079
        %2147 = vmatpush.msra.mxu0 %v2077
        %2148 = vmatpush.msra.mxu0 %v2075
        %2149 = vmatpush.msra.mxu0 %v2073
        %2150 = vmatpush.msra.mxu0 %v2071
        %2151 = vmatmul.f32.gmra.mxu0 %v1262
        %v2152 = vpop.f32.mrf.mxu0
        %v2153 = vadd.f32 0.0, %v2152
        %2154 = vmatmul.f32.gmra.mxu0 %v1265
        %v2155 = vpop.f32.mrf.mxu0
        %v2156 = vadd.f32 0.0, %v2155
        %2157 = vdwg.mxu0
        %2158 = vmatpush.msra.mxu0 %v2133
        %2159 = vmatpush.msra.mxu0 %v2131
        %2160 = vmatpush.msra.mxu0 %v2129
        %2161 = vmatpush.msra.mxu0 %v2127
        %2162 = vmatpush.msra.mxu0 %v2125
        %2163 = vmatpush.msra.mxu0 %v2123
        %2164 = vmatpush.msra.mxu0 %v2121
        %2165 = vmatpush.msra.mxu0 %v2119
        %2166 = vmatpush.msra.mxu0 %v2117
        %2167 = vmatpush.msra.mxu0 %v2115
        %2168 = vmatpush.msra.mxu0 %v2113
        %2169 = vmatpush.msra.mxu0 %v2111
        %2170 = vmatpush.msra.mxu0 %v2109
        %2171 = vmatpush.msra.mxu0 %v2107
        %2172 = vmatpush.msra.mxu0 %v2105
        %2173 = vmatpush.msra.mxu0 %v2103
        %2174 = vmatmul.f32.gmra.mxu0 %v1285
        %v2175 = vpop.f32.mrf.mxu0
        %v2176 = vadd.f32 %v2153, %v2175
        %2177 = vmatmul.f32.gmra.mxu0 %v1288
        %v2178 = vpop.f32.mrf.mxu0
        %v2179 = vadd.f32 %v2156, %v2178
        %2180 = vdwg.mxu0
        %2181 = vmatpush.msra.mxu0 %v2102
        %2182 = vmatpush.msra.mxu0 %v2100
        %2183 = vmatpush.msra.mxu0 %v2098
        %2184 = vmatpush.msra.mxu0 %v2096
        %2185 = vmatpush.msra.mxu0 %v2094
        %2186 = vmatpush.msra.mxu0 %v2092
        %2187 = vmatpush.msra.mxu0 %v2090
        %2188 = vmatpush.msra.mxu0 %v2088
        %2189 = vmatpush.msra.mxu0 %v2086
        %2190 = vmatpush.msra.mxu0 %v2084
        %2191 = vmatpush.msra.mxu0 %v2082
        %2192 = vmatpush.msra.mxu0 %v2080
        %2193 = vmatpush.msra.mxu0 %v2078
        %2194 = vmatpush.msra.mxu0 %v2076
        %2195 = vmatpush.msra.mxu0 %v2074
        %2196 = vmatpush.msra.mxu0 %v2072
        %2197 = vmatmul.f32.gmra.mxu0 %v1262
        %v2198 = vpop.f32.mrf.mxu0
        %v2199 = vadd.f32 0.0, %v2198
        %2200 = vmatmul.f32.gmra.mxu0 %v1265
        %v2201 = vpop.f32.mrf.mxu0
        %v2202 = vadd.f32 0.0, %v2201
        %2203 = vdwg.mxu0
        %2204 = vmatpush.msra.mxu0 %v2134
        %2205 = vmatpush.msra.mxu0 %v2132
        %2206 = vmatpush.msra.mxu0 %v2130
        %2207 = vmatpush.msra.mxu0 %v2128
        %2208 = vmatpush.msra.mxu0 %v2126
        %2209 = vmatpush.msra.mxu0 %v2124
        %2210 = vmatpush.msra.mxu0 %v2122
        %2211 = vmatpush.msra.mxu0 %v2120
        %2212 = vmatpush.msra.mxu0 %v2118
        %2213 = vmatpush.msra.mxu0 %v2116
        %2214 = vmatpush.msra.mxu0 %v2114
        %2215 = vmatpush.msra.mxu0 %v2112
        %2216 = vmatpush.msra.mxu0 %v2110
        %2217 = vmatpush.msra.mxu0 %v2108
        %2218 = vmatpush.msra.mxu0 %v2106
        %2219 = vmatpush.msra.mxu0 %v2104
        %2220 = vmatmul.f32.gmra.mxu0 %v1285
        %v2221 = vpop.f32.mrf.mxu0
        %v2222 = vadd.f32 %v2199, %v2221
        %2223 = vmatmul.f32.gmra.mxu0 %v1288
        %v2224 = vpop.f32.mrf.mxu0
        %v2225 = vadd.f32 %v2202, %v2224
        %2226 = vdwg.mxu0
        %s2227 = scalar_lea.vmem [#allocation10], 2
        %v2228 = vld [vmem:[%s2227] ss:$4 sm:$0x3]
        %v2230 = vperm.slane %v2228, 0
        %v2231 = vperm.slane %v2228, 1
        %v2234 = vmul.f32 %v2176, %v2230
        %v2235 = vmul.f32 %v2222, %v2231
        %v2236 = vmul.f32 %v2179, %v2230
        %v2237 = vmul.f32 %v2225, %v2231
        %s2238 = scalar_lea.vmem [#allocation11], 2
        %v2239 = vld [vmem:[%s2238] ss:$4 sm:$0x3]
        %v2241 = vperm.slane %v2239, 0
        %v2242 = vperm.slane %v2239, 1
        %v2245 = vadd.f32 %v2234, %v2241
        %v2246 = vadd.f32 %v2235, %v2242
        %v2247 = vadd.f32 %v2236, %v2241
        %v2248 = vadd.f32 %v2237, %v2242
        %vm2249 = vcmp.gt.f32.partialorder %v2245, 0.0
        %vm2250 = vcmp.gt.f32.partialorder %v2246, 0.0
        %vm2251 = vcmp.gt.f32.partialorder %v2247, 0.0
        %vm2252 = vcmp.gt.f32.partialorder %v2248, 0.0
        %v2253 = vmul.f32 %v2245, 0.1
        %v2254 = vmul.f32 %v2246, 0.1
        %v2255 = vmul.f32 %v2247, 0.1
        %v2256 = vmul.f32 %v2248, 0.1
        %v2257 = vsel %vm2249, %v2245, %v2253
        %v2258 = vsel %vm2250, %v2246, %v2254
        %v2259 = vsel %vm2251, %v2247, %v2255
        %v2260 = vsel %vm2252, %v2248, %v2256
        %s2261 = scalar_lea.vmem %s12, 512
        %v2262 = vld [vmem:[%s2261] sm:$0xff]
        %v2263 = vld [vmem:[%s2261 + $0x8] sm:$0xff]
        %v2264 = vld [vmem:[%s2261 + $0x10] sm:$0xff]
        %v2265 = vld [vmem:[%s2261 + $0x18] sm:$0xff]
        %v2266 = vld [vmem:[%s2261 + $0x20] sm:$0xff]
        %v2267 = vld [vmem:[%s2261 + $0x28] sm:$0xff]
        %v2268 = vld [vmem:[%s2261 + $0x30] sm:$0xff]
        %v2269 = vld [vmem:[%s2261 + $0x38] sm:$0xff]
        %v2270 = vld [vmem:[%s2261 + $0x40] sm:$0xff]
        %v2271 = vld [vmem:[%s2261 + $0x48] sm:$0xff]
        %v2272 = vld [vmem:[%s2261 + $0x50] sm:$0xff]
        %v2273 = vld [vmem:[%s2261 + $0x58] sm:$0xff]
        %v2274 = vld [vmem:[%s2261 + $0x60] sm:$0xff]
        %v2275 = vld [vmem:[%s2261 + $0x68] sm:$0xff]
        %v2276 = vld [vmem:[%s2261 + $0x70] sm:$0xff]
        %v2277 = vld [vmem:[%s2261 + $0x78] sm:$0xff]
        %v2278 = vld [vmem:[%s2261 + $0x80] sm:$0xff]
        %v2279 = vld [vmem:[%s2261 + $0x88] sm:$0xff]
        %v2280 = vld [vmem:[%s2261 + $0x90] sm:$0xff]
        %v2281 = vld [vmem:[%s2261 + $0x98] sm:$0xff]
        %v2282 = vld [vmem:[%s2261 + $0xa0] sm:$0xff]
        %v2283 = vld [vmem:[%s2261 + $0xa8] sm:$0xff]
        %v2284 = vld [vmem:[%s2261 + $0xb0] sm:$0xff]
        %v2285 = vld [vmem:[%s2261 + $0xb8] sm:$0xff]
        %v2286 = vld [vmem:[%s2261 + $0xc0] sm:$0xff]
        %v2287 = vld [vmem:[%s2261 + $0xc8] sm:$0xff]
        %v2288 = vld [vmem:[%s2261 + $0xd0] sm:$0xff]
        %v2289 = vld [vmem:[%s2261 + $0xd8] sm:$0xff]
        %v2290 = vld [vmem:[%s2261 + $0xe0] sm:$0xff]
        %v2291 = vld [vmem:[%s2261 + $0xe8] sm:$0xff]
        %v2292 = vld [vmem:[%s2261 + $0xf0] sm:$0xff]
        %v2293 = vld [vmem:[%s2261 + $0xf8] sm:$0xff]
        %2294 = vmatpush.msra.mxu0 %v2277
        %2295 = vmatpush.msra.mxu0 %v2276
        %2296 = vmatpush.msra.mxu0 %v2275
        %2297 = vmatpush.msra.mxu0 %v2274
        %2298 = vmatpush.msra.mxu0 %v2273
        %2299 = vmatpush.msra.mxu0 %v2272
        %2300 = vmatpush.msra.mxu0 %v2271
        %2301 = vmatpush.msra.mxu0 %v2270
        %2302 = vmatpush.msra.mxu0 %v2269
        %2303 = vmatpush.msra.mxu0 %v2268
        %2304 = vmatpush.msra.mxu0 %v2267
        %2305 = vmatpush.msra.mxu0 %v2266
        %2306 = vmatpush.msra.mxu0 %v2265
        %2307 = vmatpush.msra.mxu0 %v2264
        %2308 = vmatpush.msra.mxu0 %v2263
        %2309 = vmatpush.msra.mxu0 %v2262
        %2310 = vmatmul.f32.gmra.mxu0 %v2257
        %v2311 = vpop.f32.mrf.mxu0
        %v2312 = vadd.f32 0.0, %v2311
        %2313 = vmatmul.f32.gmra.mxu0 %v2259
        %v2314 = vpop.f32.mrf.mxu0
        %v2315 = vadd.f32 0.0, %v2314
        %2316 = vdwg.mxu0
        %2317 = vmatpush.msra.mxu0 %v2293
        %2318 = vmatpush.msra.mxu0 %v2292
        %2319 = vmatpush.msra.mxu0 %v2291
        %2320 = vmatpush.msra.mxu0 %v2290
        %2321 = vmatpush.msra.mxu0 %v2289
        %2322 = vmatpush.msra.mxu0 %v2288
        %2323 = vmatpush.msra.mxu0 %v2287
        %2324 = vmatpush.msra.mxu0 %v2286
        %2325 = vmatpush.msra.mxu0 %v2285
        %2326 = vmatpush.msra.mxu0 %v2284
        %2327 = vmatpush.msra.mxu0 %v2283
        %2328 = vmatpush.msra.mxu0 %v2282
        %2329 = vmatpush.msra.mxu0 %v2281
        %2330 = vmatpush.msra.mxu0 %v2280
        %2331 = vmatpush.msra.mxu0 %v2279
        %2332 = vmatpush.msra.mxu0 %v2278
        %2333 = vmatmul.f32.gmra.mxu0 %v2258
        %v2334 = vpop.f32.mrf.mxu0
        %v2335 = vadd.f32 %v2312, %v2334
        %2336 = vmatmul.f32.gmra.mxu0 %v2260
        %v2337 = vpop.f32.mrf.mxu0
        %v2338 = vadd.f32 %v2315, %v2337
        %2339 = vdwg.mxu0
        %v2340 = vadd.f32 %v2068, %v2335
        %v2341 = vadd.f32 %v2069, %v2338
        %s2342 = scalar_lea.vmem [#allocation8], 1536
        %v2343 = vld [vmem:[%s2342] sm:$0xff]
        %v2344 = vld [vmem:[%s2342 + $0x8] sm:$0xff]
        %v2345 = vld [vmem:[%s2342 + $0x10] sm:$0xff]
        %v2346 = vld [vmem:[%s2342 + $0x18] sm:$0xff]
        %v2347 = vld [vmem:[%s2342 + $0x20] sm:$0xff]
        %v2348 = vld [vmem:[%s2342 + $0x28] sm:$0xff]
        %v2349 = vld [vmem:[%s2342 + $0x30] sm:$0xff]
        %v2350 = vld [vmem:[%s2342 + $0x38] sm:$0xff]
        %v2351 = vld [vmem:[%s2342 + $0x40] sm:$0xff]
        %v2352 = vld [vmem:[%s2342 + $0x48] sm:$0xff]
        %v2353 = vld [vmem:[%s2342 + $0x50] sm:$0xff]
        %v2354 = vld [vmem:[%s2342 + $0x58] sm:$0xff]
        %v2355 = vld [vmem:[%s2342 + $0x60] sm:$0xff]
        %v2356 = vld [vmem:[%s2342 + $0x68] sm:$0xff]
        %v2357 = vld [vmem:[%s2342 + $0x70] sm:$0xff]
        %v2358 = vld [vmem:[%s2342 + $0x78] sm:$0xff]
        %v2359 = vld [vmem:[%s2342 + $0x80] sm:$0xff]
        %v2360 = vld [vmem:[%s2342 + $0x88] sm:$0xff]
        %v2361 = vld [vmem:[%s2342 + $0x90] sm:$0xff]
        %v2362 = vld [vmem:[%s2342 + $0x98] sm:$0xff]
        %v2363 = vld [vmem:[%s2342 + $0xa0] sm:$0xff]
        %v2364 = vld [vmem:[%s2342 + $0xa8] sm:$0xff]
        %v2365 = vld [vmem:[%s2342 + $0xb0] sm:$0xff]
        %v2366 = vld [vmem:[%s2342 + $0xb8] sm:$0xff]
        %v2367 = vld [vmem:[%s2342 + $0xc0] sm:$0xff]
        %v2368 = vld [vmem:[%s2342 + $0xc8] sm:$0xff]
        %v2369 = vld [vmem:[%s2342 + $0xd0] sm:$0xff]
        %v2370 = vld [vmem:[%s2342 + $0xd8] sm:$0xff]
        %v2371 = vld [vmem:[%s2342 + $0xe0] sm:$0xff]
        %v2372 = vld [vmem:[%s2342 + $0xe8] sm:$0xff]
        %v2373 = vld [vmem:[%s2342 + $0xf0] sm:$0xff]
        %v2374 = vld [vmem:[%s2342 + $0xf8] sm:$0xff]
        %v2375 = vld [vmem:[%s2342 + $0x100] sm:$0xff]
        %v2376 = vld [vmem:[%s2342 + $0x108] sm:$0xff]
        %v2377 = vld [vmem:[%s2342 + $0x110] sm:$0xff]
        %v2378 = vld [vmem:[%s2342 + $0x118] sm:$0xff]
        %v2379 = vld [vmem:[%s2342 + $0x120] sm:$0xff]
        %v2380 = vld [vmem:[%s2342 + $0x128] sm:$0xff]
        %v2381 = vld [vmem:[%s2342 + $0x130] sm:$0xff]
        %v2382 = vld [vmem:[%s2342 + $0x138] sm:$0xff]
        %v2383 = vld [vmem:[%s2342 + $0x140] sm:$0xff]
        %v2384 = vld [vmem:[%s2342 + $0x148] sm:$0xff]
        %v2385 = vld [vmem:[%s2342 + $0x150] sm:$0xff]
        %v2386 = vld [vmem:[%s2342 + $0x158] sm:$0xff]
        %v2387 = vld [vmem:[%s2342 + $0x160] sm:$0xff]
        %v2388 = vld [vmem:[%s2342 + $0x168] sm:$0xff]
        %v2389 = vld [vmem:[%s2342 + $0x170] sm:$0xff]
        %v2390 = vld [vmem:[%s2342 + $0x178] sm:$0xff]
        %v2391 = vld [vmem:[%s2342 + $0x180] sm:$0xff]
        %v2392 = vld [vmem:[%s2342 + $0x188] sm:$0xff]
        %v2393 = vld [vmem:[%s2342 + $0x190] sm:$0xff]
        %v2394 = vld [vmem:[%s2342 + $0x198] sm:$0xff]
        %v2395 = vld [vmem:[%s2342 + $0x1a0] sm:$0xff]
        %v2396 = vld [vmem:[%s2342 + $0x1a8] sm:$0xff]
        %v2397 = vld [vmem:[%s2342 + $0x1b0] sm:$0xff]
        %v2398 = vld [vmem:[%s2342 + $0x1b8] sm:$0xff]
        %v2399 = vld [vmem:[%s2342 + $0x1c0] sm:$0xff]
        %v2400 = vld [vmem:[%s2342 + $0x1c8] sm:$0xff]
        %v2401 = vld [vmem:[%s2342 + $0x1d0] sm:$0xff]
        %v2402 = vld [vmem:[%s2342 + $0x1d8] sm:$0xff]
        %v2403 = vld [vmem:[%s2342 + $0x1e0] sm:$0xff]
        %v2404 = vld [vmem:[%s2342 + $0x1e8] sm:$0xff]
        %v2405 = vld [vmem:[%s2342 + $0x1f0] sm:$0xff]
        %v2406 = vld [vmem:[%s2342 + $0x1f8] sm:$0xff]
        %2407 = vmatpush.msra.mxu0 %v2373
        %2408 = vmatpush.msra.mxu0 %v2371
        %2409 = vmatpush.msra.mxu0 %v2369
        %2410 = vmatpush.msra.mxu0 %v2367
        %2411 = vmatpush.msra.mxu0 %v2365
        %2412 = vmatpush.msra.mxu0 %v2363
        %2413 = vmatpush.msra.mxu0 %v2361
        %2414 = vmatpush.msra.mxu0 %v2359
        %2415 = vmatpush.msra.mxu0 %v2357
        %2416 = vmatpush.msra.mxu0 %v2355
        %2417 = vmatpush.msra.mxu0 %v2353
        %2418 = vmatpush.msra.mxu0 %v2351
        %2419 = vmatpush.msra.mxu0 %v2349
        %2420 = vmatpush.msra.mxu0 %v2347
        %2421 = vmatpush.msra.mxu0 %v2345
        %2422 = vmatpush.msra.mxu0 %v2343
        %2423 = vmatmul.f32.gmra.mxu0 %v1498
        %v2424 = vpop.f32.mrf.mxu0
        %v2425 = vadd.f32 0.0, %v2424
        %2426 = vmatmul.f32.gmra.mxu0 %v1501
        %v2427 = vpop.f32.mrf.mxu0
        %v2428 = vadd.f32 0.0, %v2427
        %2429 = vdwg.mxu0
        %2430 = vmatpush.msra.mxu0 %v2405
        %2431 = vmatpush.msra.mxu0 %v2403
        %2432 = vmatpush.msra.mxu0 %v2401
        %2433 = vmatpush.msra.mxu0 %v2399
        %2434 = vmatpush.msra.mxu0 %v2397
        %2435 = vmatpush.msra.mxu0 %v2395
        %2436 = vmatpush.msra.mxu0 %v2393
        %2437 = vmatpush.msra.mxu0 %v2391
        %2438 = vmatpush.msra.mxu0 %v2389
        %2439 = vmatpush.msra.mxu0 %v2387
        %2440 = vmatpush.msra.mxu0 %v2385
        %2441 = vmatpush.msra.mxu0 %v2383
        %2442 = vmatpush.msra.mxu0 %v2381
        %2443 = vmatpush.msra.mxu0 %v2379
        %2444 = vmatpush.msra.mxu0 %v2377
        %2445 = vmatpush.msra.mxu0 %v2375
        %2446 = vmatmul.f32.gmra.mxu0 %v1521
        %v2447 = vpop.f32.mrf.mxu0
        %v2448 = vadd.f32 %v2425, %v2447
        %2449 = vmatmul.f32.gmra.mxu0 %v1524
        %v2450 = vpop.f32.mrf.mxu0
        %v2451 = vadd.f32 %v2428, %v2450
        %2452 = vdwg.mxu0
        %2453 = vmatpush.msra.mxu0 %v2374
        %2454 = vmatpush.msra.mxu0 %v2372
        %2455 = vmatpush.msra.mxu0 %v2370
        %2456 = vmatpush.msra.mxu0 %v2368
        %2457 = vmatpush.msra.mxu0 %v2366
        %2458 = vmatpush.msra.mxu0 %v2364
        %2459 = vmatpush.msra.mxu0 %v2362
        %2460 = vmatpush.msra.mxu0 %v2360
        %2461 = vmatpush.msra.mxu0 %v2358
        %2462 = vmatpush.msra.mxu0 %v2356
        %2463 = vmatpush.msra.mxu0 %v2354
        %2464 = vmatpush.msra.mxu0 %v2352
        %2465 = vmatpush.msra.mxu0 %v2350
        %2466 = vmatpush.msra.mxu0 %v2348
        %2467 = vmatpush.msra.mxu0 %v2346
        %2468 = vmatpush.msra.mxu0 %v2344
        %2469 = vmatmul.f32.gmra.mxu0 %v1498
        %v2470 = vpop.f32.mrf.mxu0
        %v2471 = vadd.f32 0.0, %v2470
        %2472 = vmatmul.f32.gmra.mxu0 %v1501
        %v2473 = vpop.f32.mrf.mxu0
        %v2474 = vadd.f32 0.0, %v2473
        %2475 = vdwg.mxu0
        %2476 = vmatpush.msra.mxu0 %v2406
        %2477 = vmatpush.msra.mxu0 %v2404
        %2478 = vmatpush.msra.mxu0 %v2402
        %2479 = vmatpush.msra.mxu0 %v2400
        %2480 = vmatpush.msra.mxu0 %v2398
        %2481 = vmatpush.msra.mxu0 %v2396
        %2482 = vmatpush.msra.mxu0 %v2394
        %2483 = vmatpush.msra.mxu0 %v2392
        %2484 = vmatpush.msra.mxu0 %v2390
        %2485 = vmatpush.msra.mxu0 %v2388
        %2486 = vmatpush.msra.mxu0 %v2386
        %2487 = vmatpush.msra.mxu0 %v2384
        %2488 = vmatpush.msra.mxu0 %v2382
        %2489 = vmatpush.msra.mxu0 %v2380
        %2490 = vmatpush.msra.mxu0 %v2378
        %2491 = vmatpush.msra.mxu0 %v2376
        %2492 = vmatmul.f32.gmra.mxu0 %v1521
        %v2493 = vpop.f32.mrf.mxu0
        %v2494 = vadd.f32 %v2471, %v2493
        %2495 = vmatmul.f32.gmra.mxu0 %v1524
        %v2496 = vpop.f32.mrf.mxu0
        %v2497 = vadd.f32 %v2474, %v2496
        %2498 = vdwg.mxu0
        %s2499 = scalar_lea.vmem [#allocation10], 3
        %v2500 = vld [vmem:[%s2499] ss:$4 sm:$0x3]
        %v2502 = vperm.slane %v2500, 0
        %v2503 = vperm.slane %v2500, 1
        %v2506 = vmul.f32 %v2448, %v2502
        %v2507 = vmul.f32 %v2494, %v2503
        %v2508 = vmul.f32 %v2451, %v2502
        %v2509 = vmul.f32 %v2497, %v2503
        %s2510 = scalar_lea.vmem [#allocation11], 3
        %v2511 = vld [vmem:[%s2510] ss:$4 sm:$0x3]
        %v2513 = vperm.slane %v2511, 0
        %v2514 = vperm.slane %v2511, 1
        %v2517 = vadd.f32 %v2506, %v2513
        %v2518 = vadd.f32 %v2507, %v2514
        %v2519 = vadd.f32 %v2508, %v2513
        %v2520 = vadd.f32 %v2509, %v2514
        %vm2521 = vcmp.gt.f32.partialorder %v2517, 0.0
        %vm2522 = vcmp.gt.f32.partialorder %v2518, 0.0
        %vm2523 = vcmp.gt.f32.partialorder %v2519, 0.0
        %vm2524 = vcmp.gt.f32.partialorder %v2520, 0.0
        %v2525 = vmul.f32 %v2517, 0.1
        %v2526 = vmul.f32 %v2518, 0.1
        %v2527 = vmul.f32 %v2519, 0.1
        %v2528 = vmul.f32 %v2520, 0.1
        %v2529 = vsel %vm2521, %v2517, %v2525
        %v2530 = vsel %vm2522, %v2518, %v2526
        %v2531 = vsel %vm2523, %v2519, %v2527
        %v2532 = vsel %vm2524, %v2520, %v2528
        %s2533 = scalar_lea.vmem %s12, 768
        %v2534 = vld [vmem:[%s2533] sm:$0xff]
        %v2535 = vld [vmem:[%s2533 + $0x8] sm:$0xff]
        %v2536 = vld [vmem:[%s2533 + $0x10] sm:$0xff]
        %v2537 = vld [vmem:[%s2533 + $0x18] sm:$0xff]
        %v2538 = vld [vmem:[%s2533 + $0x20] sm:$0xff]
        %v2539 = vld [vmem:[%s2533 + $0x28] sm:$0xff]
        %v2540 = vld [vmem:[%s2533 + $0x30] sm:$0xff]
        %v2541 = vld [vmem:[%s2533 + $0x38] sm:$0xff]
        %v2542 = vld [vmem:[%s2533 + $0x40] sm:$0xff]
        %v2543 = vld [vmem:[%s2533 + $0x48] sm:$0xff]
        %v2544 = vld [vmem:[%s2533 + $0x50] sm:$0xff]
        %v2545 = vld [vmem:[%s2533 + $0x58] sm:$0xff]
        %v2546 = vld [vmem:[%s2533 + $0x60] sm:$0xff]
        %v2547 = vld [vmem:[%s2533 + $0x68] sm:$0xff]
        %v2548 = vld [vmem:[%s2533 + $0x70] sm:$0xff]
        %v2549 = vld [vmem:[%s2533 + $0x78] sm:$0xff]
        %v2550 = vld [vmem:[%s2533 + $0x80] sm:$0xff]
        %v2551 = vld [vmem:[%s2533 + $0x88] sm:$0xff]
        %v2552 = vld [vmem:[%s2533 + $0x90] sm:$0xff]
        %v2553 = vld [vmem:[%s2533 + $0x98] sm:$0xff]
        %v2554 = vld [vmem:[%s2533 + $0xa0] sm:$0xff]
        %v2555 = vld [vmem:[%s2533 + $0xa8] sm:$0xff]
        %v2556 = vld [vmem:[%s2533 + $0xb0] sm:$0xff]
        %v2557 = vld [vmem:[%s2533 + $0xb8] sm:$0xff]
        %v2558 = vld [vmem:[%s2533 + $0xc0] sm:$0xff]
        %v2559 = vld [vmem:[%s2533 + $0xc8] sm:$0xff]
        %v2560 = vld [vmem:[%s2533 + $0xd0] sm:$0xff]
        %v2561 = vld [vmem:[%s2533 + $0xd8] sm:$0xff]
        %v2562 = vld [vmem:[%s2533 + $0xe0] sm:$0xff]
        %v2563 = vld [vmem:[%s2533 + $0xe8] sm:$0xff]
        %v2564 = vld [vmem:[%s2533 + $0xf0] sm:$0xff]
        %v2565 = vld [vmem:[%s2533 + $0xf8] sm:$0xff]
        %2566 = vmatpush.msra.mxu0 %v2549
        %2567 = vmatpush.msra.mxu0 %v2548
        %2568 = vmatpush.msra.mxu0 %v2547
        %2569 = vmatpush.msra.mxu0 %v2546
        %2570 = vmatpush.msra.mxu0 %v2545
        %2571 = vmatpush.msra.mxu0 %v2544
        %2572 = vmatpush.msra.mxu0 %v2543
        %2573 = vmatpush.msra.mxu0 %v2542
        %2574 = vmatpush.msra.mxu0 %v2541
        %2575 = vmatpush.msra.mxu0 %v2540
        %2576 = vmatpush.msra.mxu0 %v2539
        %2577 = vmatpush.msra.mxu0 %v2538
        %2578 = vmatpush.msra.mxu0 %v2537
        %2579 = vmatpush.msra.mxu0 %v2536
        %2580 = vmatpush.msra.mxu0 %v2535
        %2581 = vmatpush.msra.mxu0 %v2534
        %2582 = vmatmul.f32.gmra.mxu0 %v2529
        %v2583 = vpop.f32.mrf.mxu0
        %v2584 = vadd.f32 0.0, %v2583
        %2585 = vmatmul.f32.gmra.mxu0 %v2531
        %v2586 = vpop.f32.mrf.mxu0
        %v2587 = vadd.f32 0.0, %v2586
        %2588 = vdwg.mxu0
        %2589 = vmatpush.msra.mxu0 %v2565
        %2590 = vmatpush.msra.mxu0 %v2564
        %2591 = vmatpush.msra.mxu0 %v2563
        %2592 = vmatpush.msra.mxu0 %v2562
        %2593 = vmatpush.msra.mxu0 %v2561
        %2594 = vmatpush.msra.mxu0 %v2560
        %2595 = vmatpush.msra.mxu0 %v2559
        %2596 = vmatpush.msra.mxu0 %v2558
        %2597 = vmatpush.msra.mxu0 %v2557
        %2598 = vmatpush.msra.mxu0 %v2556
        %2599 = vmatpush.msra.mxu0 %v2555
        %2600 = vmatpush.msra.mxu0 %v2554
        %2601 = vmatpush.msra.mxu0 %v2553
        %2602 = vmatpush.msra.mxu0 %v2552
        %2603 = vmatpush.msra.mxu0 %v2551
        %2604 = vmatpush.msra.mxu0 %v2550
        %2605 = vmatmul.f32.gmra.mxu0 %v2530
        %v2606 = vpop.f32.mrf.mxu0
        %v2607 = vadd.f32 %v2584, %v2606
        %2608 = vmatmul.f32.gmra.mxu0 %v2532
        %v2609 = vpop.f32.mrf.mxu0
        %v2610 = vadd.f32 %v2587, %v2609
        %2611 = vdwg.mxu0
        %v2612 = vadd.f32 %v2340, %v2607
        %v2613 = vadd.f32 %v2341, %v2610
        %2616 = vrot.lane.b32.xlu0 %v2612, 112
        %v2617 = vpop.permute.xlu0 %2616
        %2618 = vrot.lane.b32.xlu0 %v2613, 112
        %v2619 = vpop.permute.xlu0 %2618
        %v2622 = vmax.f32 %v2612, %v2617
        %v2623 = vmax.f32 %v2613, %v2619
        %2626 = vrot.lane.b32.xlu0 %v2622, 96
        %v2627 = vpop.permute.xlu0 %2626
        %2628 = vrot.lane.b32.xlu0 %v2623, 96
        %v2629 = vpop.permute.xlu0 %2628
        %v2632 = vmax.f32 %v2622, %v2627
        %v2633 = vmax.f32 %v2623, %v2629
        %v2634 = vsub.f32 %v2612, %v2632
        %v2635 = vsub.f32 %v2613, %v2633
        %v2636 = vmul.f32 %v2634, 1.442695
        %v2637 = vpow.pop %v2636
        %v2638 = vmul.f32 %v2635, 1.442695
        %v2639 = vpow.pop %v2638
        %2642 = vrot.lane.b32.xlu0 %v2632, 16
        %v2643 = vpop.permute.xlu0 %2642
        %2644 = vrot.lane.b32.xlu0 %v2633, 16
        %v2645 = vpop.permute.xlu0 %2644
        %v2648 = vsub.f32 %v2612, %v2643
        %v2649 = vsub.f32 %v2613, %v2645
        %v2650 = vmul.f32 %v2648, 1.442695
        %v2651 = vpow.pop %v2650
        %v2652 = vmul.f32 %v2649, 1.442695
        %v2653 = vpow.pop %v2652
        %2654 = vrot.lane.b32.xlu0 %v2632, 32
        %v2655 = vpop.permute.xlu0 %2654
        %2656 = vrot.lane.b32.xlu0 %v2633, 32
        %v2657 = vpop.permute.xlu0 %2656
        %v2660 = vsub.f32 %v2612, %v2655
        %v2661 = vsub.f32 %v2613, %v2657
        %v2662 = vmul.f32 %v2660, 1.442695
        %v2663 = vpow.pop %v2662
        %v2664 = vmul.f32 %v2661, 1.442695
        %v2665 = vpow.pop %v2664
        %2666 = vrot.lane.b32.xlu0 %v2632, 48
        %v2667 = vpop.permute.xlu0 %2666
        %2668 = vrot.lane.b32.xlu0 %v2633, 48
        %v2669 = vpop.permute.xlu0 %2668
        %v2672 = vsub.f32 %v2612, %v2667
        %v2673 = vsub.f32 %v2613, %v2669
        %v2674 = vmul.f32 %v2672, 1.442695
        %v2675 = vpow.pop %v2674
        %v2676 = vmul.f32 %v2673, 1.442695
        %v2677 = vpow.pop %v2676
        %2680 = vrot.lane.b32.xlu0 %v2651, 112
        %v2681 = vpop.permute.xlu0 %2680
        %2682 = vrot.lane.b32.xlu0 %v2653, 112
        %v2683 = vpop.permute.xlu0 %2682
        %v2686 = vadd.f32 %v2637, %v2681
        %v2687 = vadd.f32 %v2639, %v2683
        %2690 = vrot.lane.b32.xlu0 %v2663, 96
        %v2691 = vpop.permute.xlu0 %2690
        %2692 = vrot.lane.b32.xlu0 %v2665, 96
        %v2693 = vpop.permute.xlu0 %2692
        %v2696 = vadd.f32 %v2686, %v2691
        %v2697 = vadd.f32 %v2687, %v2693
        %2700 = vrot.lane.b32.xlu0 %v2675, 80
        %v2701 = vpop.permute.xlu0 %2700
        %2702 = vrot.lane.b32.xlu0 %v2677, 80
        %v2703 = vpop.permute.xlu0 %2702
        %v2706 = vadd.f32 %v2696, %v2701
        %v2707 = vadd.f32 %v2697, %v2703
        %v2708 = vrcp.pop %v2706
        %v2709 = vmul.f32 %v2706, %v2708
        %v2710 = vsub.f32 1.0, %v2709
        %v2711 = vmul.f32 %v2708, %v2710
        %v2712 = vadd.f32 %v2708, %v2711
        %vm2713 = vweird.f32 %v2706
        %vm2714 = vweird.f32 %v2708
        %vm2715 = vmor %vm2713, %vm2714
        %v2716 = vsel %vm2715, %v2708, %v2712
        %v2717 = vand.u32 2147483647, %v2706
        %vm2718 = vcmp.eq.f32.partialorder %v2717, 8.507059e+37
        %v2719 = vand.u32 %v2706, 2147483648
        %v2720 = vor.u32 1.1754944e-38, %v2719
        %v2721 = vsel %vm2718, %v2720, %v2716
        %v2722 = vmul.f32 1.0, %v2721
        %v2723 = vrcp.pop %v2707
        %v2724 = vmul.f32 %v2707, %v2723
        %v2725 = vsub.f32 1.0, %v2724
        %v2726 = vmul.f32 %v2723, %v2725
        %v2727 = vadd.f32 %v2723, %v2726
        %vm2728 = vweird.f32 %v2707
        %vm2729 = vweird.f32 %v2723
        %vm2730 = vmor %vm2728, %vm2729
        %v2731 = vsel %vm2730, %v2723, %v2727
        %v2732 = vand.u32 2147483647, %v2707
        %vm2733 = vcmp.eq.f32.partialorder %v2732, 8.507059e+37
        %v2734 = vand.u32 %v2707, 2147483648
        %v2735 = vor.u32 1.1754944e-38, %v2734
        %v2736 = vsel %vm2733, %v2735, %v2731
        %v2737 = vmul.f32 1.0, %v2736
        %v2738 = vmul.f32 %v2637, %v2722
        %v2739 = vmul.f32 %v2639, %v2737
        %v2740 = vld [vmem:[#allocation14] sm:$0xff]
        %v2741 = vld [vmem:[#allocation14 + $0x8] sm:$0xff]
        %v2742 = vld [vmem:[#allocation14 + $0x10] sm:$0xff]
        %v2743 = vld [vmem:[#allocation14 + $0x18] sm:$0xff]
        %vm2744 = vcmask 130048
        %v2746 = vsel %vm2744, %v2738, 0
        %v2749 = vsel %vm2744, %v2739, 0
        %2751 = vmatpush.msra.mxu0 0.0
        %2752 = vmatpush.msra.mxu0 0.0
        %2753 = vmatpush.msra.mxu0 0.0
        %2754 = vmatpush.msra.mxu0 0.0
        %2755 = vmatpush.msra.mxu0 0.0
        %2756 = vmatpush.msra.mxu0 0.0
        %2757 = vmatpush.msra.mxu0 0.0
        %2758 = vmatpush.msra.mxu0 0.0
        %2759 = vmatpush.msra.mxu0 0.0
        %2760 = vmatpush.msra.mxu0 0.0
        %2761 = vmatpush.msra.mxu0 0.0
        %2762 = vmatpush.msra.mxu0 0.0
        %2763 = vmatpush.msra.mxu0 0.0
        %2764 = vmatpush.msra.mxu0 0.0
        %2765 = vmatpush.msra.mxu0 %v2742
        %2766 = vmatpush.msra.mxu0 %v2740
        %2767 = vmatmul.f32.gmra.mxu0 %v2746
        %v2768 = vpop.f32.mrf.mxu0
        %v2769 = vadd.f32 0.0, %v2768
        %2770 = vmatmul.f32.gmra.mxu0 %v2749
        %v2771 = vpop.f32.mrf.mxu0
        %v2772 = vadd.f32 0.0, %v2771
        %2773 = vdwg.mxu0
        %2774 = vmatpush.msra.mxu0 0.0
        %2775 = vmatpush.msra.mxu0 0.0
        %2776 = vmatpush.msra.mxu0 0.0
        %2777 = vmatpush.msra.mxu0 0.0
        %2778 = vmatpush.msra.mxu0 0.0
        %2779 = vmatpush.msra.mxu0 0.0
        %2780 = vmatpush.msra.mxu0 0.0
        %2781 = vmatpush.msra.mxu0 0.0
        %2782 = vmatpush.msra.mxu0 0.0
        %2783 = vmatpush.msra.mxu0 0.0
        %2784 = vmatpush.msra.mxu0 0.0
        %2785 = vmatpush.msra.mxu0 0.0
        %2786 = vmatpush.msra.mxu0 0.0
        %2787 = vmatpush.msra.mxu0 0.0
        %2788 = vmatpush.msra.mxu0 %v2743
        %2789 = vmatpush.msra.mxu0 %v2741
        %2790 = vmatmul.f32.gmra.mxu0 %v2746
        %v2791 = vpop.f32.mrf.mxu0
        %v2792 = vadd.f32 0.0, %v2791
        %2793 = vmatmul.f32.gmra.mxu0 %v2749
        %v2794 = vpop.f32.mrf.mxu0
        %v2795 = vadd.f32 0.0, %v2794
        %2796 = vdwg.mxu0
        %v2797 = vmul.f32 %v2769, %v825
        %v2798 = vmul.f32 %v2792, %v826
        %v2799 = vmul.f32 %v2772, %v827
        %v2800 = vmul.f32 %v2795, %v828
        %v2801 = vadd.f32 %v2797, 0.0
        %v2802 = vadd.f32 %v2798, 0.0
        %v2803 = vadd.f32 %v2799, 0.0
        %v2804 = vadd.f32 %v2800, 0.0
        %2807 = vrot.lane.b32.xlu0 %v2722, 16
        %v2808 = vpop.permute.xlu0 %2807
        %2809 = vrot.lane.b32.xlu0 %v2737, 16
        %v2810 = vpop.permute.xlu0 %2809
        %v2813 = vmul.f32 %v2651, %v2808
        %v2814 = vmul.f32 %v2653, %v2810
        %2817 = vrot.lane.b32.xlu0 %v2813, 112
        %v2818 = vpop.permute.xlu0 %2817
        %2819 = vrot.lane.b32.xlu0 %v2814, 112
        %v2820 = vpop.permute.xlu0 %2819
        %v2821 = vsel %vm2744, %v2818, 0
        %v2823 = vsel %vm2744, %v2820, 0
        %2825 = vmatpush.msra.mxu0 0.0
        %2826 = vmatpush.msra.mxu0 0.0
        %2827 = vmatpush.msra.mxu0 0.0
        %2828 = vmatpush.msra.mxu0 0.0
        %2829 = vmatpush.msra.mxu0 0.0
        %2830 = vmatpush.msra.mxu0 0.0
        %2831 = vmatpush.msra.mxu0 0.0
        %2832 = vmatpush.msra.mxu0 0.0
        %2833 = vmatpush.msra.mxu0 0.0
        %2834 = vmatpush.msra.mxu0 0.0
        %2835 = vmatpush.msra.mxu0 0.0
        %2836 = vmatpush.msra.mxu0 0.0
        %2837 = vmatpush.msra.mxu0 0.0
        %2838 = vmatpush.msra.mxu0 0.0
        %2839 = vmatpush.msra.mxu0 %v2742
        %2840 = vmatpush.msra.mxu0 %v2740
        %2841 = vmatmul.f32.gmra.mxu0 %v2821
        %v2842 = vpop.f32.mrf.mxu0
        %v2843 = vadd.f32 0.0, %v2842
        %2844 = vmatmul.f32.gmra.mxu0 %v2823
        %v2845 = vpop.f32.mrf.mxu0
        %v2846 = vadd.f32 0.0, %v2845
        %2847 = vdwg.mxu0
        %2848 = vmatpush.msra.mxu0 0.0
        %2849 = vmatpush.msra.mxu0 0.0
        %2850 = vmatpush.msra.mxu0 0.0
        %2851 = vmatpush.msra.mxu0 0.0
        %2852 = vmatpush.msra.mxu0 0.0
        %2853 = vmatpush.msra.mxu0 0.0
        %2854 = vmatpush.msra.mxu0 0.0
        %2855 = vmatpush.msra.mxu0 0.0
        %2856 = vmatpush.msra.mxu0 0.0
        %2857 = vmatpush.msra.mxu0 0.0
        %2858 = vmatpush.msra.mxu0 0.0
        %2859 = vmatpush.msra.mxu0 0.0
        %2860 = vmatpush.msra.mxu0 0.0
        %2861 = vmatpush.msra.mxu0 0.0
        %2862 = vmatpush.msra.mxu0 %v2743
        %2863 = vmatpush.msra.mxu0 %v2741
        %2864 = vmatmul.f32.gmra.mxu0 %v2821
        %v2865 = vpop.f32.mrf.mxu0
        %v2866 = vadd.f32 0.0, %v2865
        %2867 = vmatmul.f32.gmra.mxu0 %v2823
        %v2868 = vpop.f32.mrf.mxu0
        %v2869 = vadd.f32 0.0, %v2868
        %2870 = vdwg.mxu0
        %v2871 = vmul.f32 %v2843, %v1026
        %v2872 = vmul.f32 %v2866, %v1049
        %v2873 = vmul.f32 %v2846, %v1029
        %v2874 = vmul.f32 %v2869, %v1052
        %v2875 = vadd.f32 %v2801, %v2871
        %v2876 = vadd.f32 %v2802, %v2872
        %v2877 = vadd.f32 %v2803, %v2873
        %v2878 = vadd.f32 %v2804, %v2874
        %2879 = vrot.lane.b32.xlu0 %v2722, 32
        %v2880 = vpop.permute.xlu0 %2879
        %2881 = vrot.lane.b32.xlu0 %v2737, 32
        %v2882 = vpop.permute.xlu0 %2881
        %v2885 = vmul.f32 %v2663, %v2880
        %v2886 = vmul.f32 %v2665, %v2882
        %2889 = vrot.lane.b32.xlu0 %v2885, 96
        %v2890 = vpop.permute.xlu0 %2889
        %2891 = vrot.lane.b32.xlu0 %v2886, 96
        %v2892 = vpop.permute.xlu0 %2891
        %v2893 = vsel %vm2744, %v2890, 0
        %v2895 = vsel %vm2744, %v2892, 0
        %2897 = vmatpush.msra.mxu0 0.0
        %2898 = vmatpush.msra.mxu0 0.0
        %2899 = vmatpush.msra.mxu0 0.0
        %2900 = vmatpush.msra.mxu0 0.0
        %2901 = vmatpush.msra.mxu0 0.0
        %2902 = vmatpush.msra.mxu0 0.0
        %2903 = vmatpush.msra.mxu0 0.0
        %2904 = vmatpush.msra.mxu0 0.0
        %2905 = vmatpush.msra.mxu0 0.0
        %2906 = vmatpush.msra.mxu0 0.0
        %2907 = vmatpush.msra.mxu0 0.0
        %2908 = vmatpush.msra.mxu0 0.0
        %2909 = vmatpush.msra.mxu0 0.0
        %2910 = vmatpush.msra.mxu0 0.0
        %2911 = vmatpush.msra.mxu0 %v2742
        %2912 = vmatpush.msra.mxu0 %v2740
        %2913 = vmatmul.f32.gmra.mxu0 %v2893
        %v2914 = vpop.f32.mrf.mxu0
        %v2915 = vadd.f32 0.0, %v2914
        %2916 = vmatmul.f32.gmra.mxu0 %v2895
        %v2917 = vpop.f32.mrf.mxu0
        %v2918 = vadd.f32 0.0, %v2917
        %2919 = vdwg.mxu0
        %2920 = vmatpush.msra.mxu0 0.0
        %2921 = vmatpush.msra.mxu0 0.0
        %2922 = vmatpush.msra.mxu0 0.0
        %2923 = vmatpush.msra.mxu0 0.0
        %2924 = vmatpush.msra.mxu0 0.0
        %2925 = vmatpush.msra.mxu0 0.0
        %2926 = vmatpush.msra.mxu0 0.0
        %2927 = vmatpush.msra.mxu0 0.0
        %2928 = vmatpush.msra.mxu0 0.0
        %2929 = vmatpush.msra.mxu0 0.0
        %2930 = vmatpush.msra.mxu0 0.0
        %2931 = vmatpush.msra.mxu0 0.0
        %2932 = vmatpush.msra.mxu0 0.0
        %2933 = vmatpush.msra.mxu0 0.0
        %2934 = vmatpush.msra.mxu0 %v2743
        %2935 = vmatpush.msra.mxu0 %v2741
        %2936 = vmatmul.f32.gmra.mxu0 %v2893
        %v2937 = vpop.f32.mrf.mxu0
        %v2938 = vadd.f32 0.0, %v2937
        %2939 = vmatmul.f32.gmra.mxu0 %v2895
        %v2940 = vpop.f32.mrf.mxu0
        %v2941 = vadd.f32 0.0, %v2940
        %2942 = vdwg.mxu0
        %v2943 = vmul.f32 %v2915, %v1262
        %v2944 = vmul.f32 %v2938, %v1285
        %v2945 = vmul.f32 %v2918, %v1265
        %v2946 = vmul.f32 %v2941, %v1288
        %v2947 = vadd.f32 %v2875, %v2943
        %v2948 = vadd.f32 %v2876, %v2944
        %v2949 = vadd.f32 %v2877, %v2945
        %v2950 = vadd.f32 %v2878, %v2946
        %2951 = vrot.lane.b32.xlu0 %v2722, 48
        %v2952 = vpop.permute.xlu0 %2951
        %2953 = vrot.lane.b32.xlu0 %v2737, 48
        %v2954 = vpop.permute.xlu0 %2953
        %v2957 = vmul.f32 %v2675, %v2952
        %v2958 = vmul.f32 %v2677, %v2954
        %2961 = vrot.lane.b32.xlu0 %v2957, 80
        %v2962 = vpop.permute.xlu0 %2961
        %2963 = vrot.lane.b32.xlu0 %v2958, 80
        %v2964 = vpop.permute.xlu0 %2963
        %v2965 = vsel %vm2744, %v2962, 0
        %v2967 = vsel %vm2744, %v2964, 0
        %2969 = vmatpush.msra.mxu0 0.0
        %2970 = vmatpush.msra.mxu0 0.0
        %2971 = vmatpush.msra.mxu0 0.0
        %2972 = vmatpush.msra.mxu0 0.0
        %2973 = vmatpush.msra.mxu0 0.0
        %2974 = vmatpush.msra.mxu0 0.0
        %2975 = vmatpush.msra.mxu0 0.0
        %2976 = vmatpush.msra.mxu0 0.0
        %2977 = vmatpush.msra.mxu0 0.0
        %2978 = vmatpush.msra.mxu0 0.0
        %2979 = vmatpush.msra.mxu0 0.0
        %2980 = vmatpush.msra.mxu0 0.0
        %2981 = vmatpush.msra.mxu0 0.0
        %2982 = vmatpush.msra.mxu0 0.0
        %2983 = vmatpush.msra.mxu0 %v2742
        %2984 = vmatpush.msra.mxu0 %v2740
        %2985 = vmatmul.f32.gmra.mxu0 %v2965
        %v2986 = vpop.f32.mrf.mxu0
        %v2987 = vadd.f32 0.0, %v2986
        %2988 = vmatmul.f32.gmra.mxu0 %v2967
        %v2989 = vpop.f32.mrf.mxu0
        %v2990 = vadd.f32 0.0, %v2989
        %2991 = vdwg.mxu0
        %2992 = vmatpush.msra.mxu0 0.0
        %2993 = vmatpush.msra.mxu0 0.0
        %2994 = vmatpush.msra.mxu0 0.0
        %2995 = vmatpush.msra.mxu0 0.0
        %2996 = vmatpush.msra.mxu0 0.0
        %2997 = vmatpush.msra.mxu0 0.0
        %2998 = vmatpush.msra.mxu0 0.0
        %2999 = vmatpush.msra.mxu0 0.0
        %3000 = vmatpush.msra.mxu0 0.0
        %3001 = vmatpush.msra.mxu0 0.0
        %3002 = vmatpush.msra.mxu0 0.0
        %3003 = vmatpush.msra.mxu0 0.0
        %3004 = vmatpush.msra.mxu0 0.0
        %3005 = vmatpush.msra.mxu0 0.0
        %3006 = vmatpush.msra.mxu0 %v2743
        %3007 = vmatpush.msra.mxu0 %v2741
        %3008 = vmatmul.f32.gmra.mxu0 %v2965
        %v3009 = vpop.f32.mrf.mxu0
        %v3010 = vadd.f32 0.0, %v3009
        %3011 = vmatmul.f32.gmra.mxu0 %v2967
        %v3012 = vpop.f32.mrf.mxu0
        %v3013 = vadd.f32 0.0, %v3012
        %3014 = vdwg.mxu0
        %v3015 = vmul.f32 %v2987, %v1498
        %v3016 = vmul.f32 %v3010, %v1521
        %v3017 = vmul.f32 %v2990, %v1501
        %v3018 = vmul.f32 %v3013, %v1524
        %v3019 = vadd.f32 %v2947, %v3015
        %v3020 = vadd.f32 %v2948, %v3016
        %v3021 = vadd.f32 %v2949, %v3017
        %v3022 = vadd.f32 %v2950, %v3018
        %3023 = vst [vmem:[%s795] sm:$0xff] %v3019
        %3024 = vst [vmem:[%s795 + $0x8] sm:$0xff] %v3020
        %3025 = vst [vmem:[%s795 + $0x10] sm:$0xff] %v3021
        %3026 = vst [vmem:[%s795 + $0x18] sm:$0xff] %v3022
        %s3027 = sand.u32 %s467, 1
        %s3028 = scalar_lea.sflag [#allocation4], %s3027
        %s3029 = sand.u32 %s467, 1
        %s3030 = smul.addr %s3029, 32
        %s3031 = scalar_lea.vmem [#allocation16], %s3030
        // Predicated region
        $region125: #{tpu_custom_call.1} parent=91 // pred_check
          %p3032 = pneg %p477
        $region126: #{tpu_custom_call.1} parent=91 // pred_check_branch
          %3034 = sbr.rel (%p3032) target = $region128
        $region127: #{tpu_custom_call.1} parent=91 // pred_region
          %s3035 = smul.u32 2, %s44
          %3037 = vsyncadd %s3028, 0
          %s3038 = smul.addr %s3035, 2
          %s3039 = smul.addr %s43, 4
          %s3040 = sadd.s32 %s3038, %s3039
          %s3041 = smul.addr %s3040, 8
          %s3042 = scalar_lea.hbm %s18, %s3041
          %s3043 = sshll.u32 %s3031, 4
          %s3044 = int_to_ptr.vmem [resolvable:$true] %s3043
          %s3045 = sshll.u32 %s3042, 4
          %s3046 = int_to_ptr.hbm [resolvable:$true] %s3045
          %3051 = dma.vmem_to_hbm [thread:$0]  %s3044, 512, %s3046, %s3028, 256, 256, 16
        $region128: #{tpu_custom_call.1} parent=91 // pred_fallthru
          _
      $region92: #{tpu_custom_call.1} parent=5 // pred_fallthru
        _
      %p3052 = scmp.le.s32.totalorder 2, %s34
      // Predicated region
      $region129: #{tpu_custom_call.1} parent=5 // pred_check
        %p3053 = pneg %p3052
      $region130: #{tpu_custom_call.1} parent=5 // pred_check_branch
        %3055 = sbr.rel (%p3053) target = $region132
      $region131: #{tpu_custom_call.1} parent=5 // pred_region
        %s3056 = ssub.s32 %s34, 2
        // Predicated region
        $region133: #{tpu_custom_call.1} parent=131 // pred_check
          %p3057 = pneg %p483
        $region134: #{tpu_custom_call.1} parent=131 // pred_check_branch
          %3059 = sbr.rel (%p3057) target = $region136
        $region135: #{tpu_custom_call.1} parent=131 // pred_region
          %s3060 = sand.u32 %s468, 1
          %s3061 = scalar_lea.sflag [#allocation4], %s3060
          %s3062 = sand.u32 %s468, 1
          %s3063 = smul.addr %s3062, 32
          %s3064 = scalar_lea.vmem [#allocation16], %s3063
          %3066 = dma.done %s3061, 512
        $region136: #{tpu_custom_call.1} parent=131 // pred_fallthru
          _
      $region132: #{tpu_custom_call.1} parent=5 // pred_fallthru
        _
    $region6: #{tpu_custom_call.1} parent=1 // loop_footer
      %s38 = sadd.s32 1, %s34
    $region7: #{tpu_custom_call.1} parent=1 // loop_footer_branch
      %33 = sbr.rel target = $region3
    $region8: #{tpu_custom_call.1} parent=1 // loop_exit
      _
    %3067 = vsyncpa [#allocation3], 1
    %s3068 = scalar_lea.sflag [#allocation3], 1
    %3069 = vsyncpa %s3068, 1
    %3070 = vsyncpa [#allocation6], 1
    %3071 = vsyncpa [#allocation9], 1
    %3072 = vsyncpa [#allocation12], 1
    %3073 = vsyncpa [#allocation15], 1
    %3074 = vsyncpa [#allocation4], 1
    %s3075 = scalar_lea.sflag [#allocation4], 1
    %3076 = vsyncpa %s3075, 1

</llo_original>
